<compile_context>
chip_gen: v7x
topology: tpu7x:2x2x1
jax: 0.10.0
libtpu: 0.0.40
codegen_flags: <defaults>
</compile_context>

<pallas_src>
import jax
import jax.numpy as jnp
from jax.experimental import pallas as pl
from jax.experimental.pallas import tpu as pltpu

GATE_LANES = 128          # lanes reserved per gate (i|f|o|g) -> Gp = 512
HP = 128                  # padded hidden width (h, c, W_hh rows, W_fc rows)
FP = 128                  # padded fc width


def lstm_mlp_kernel(x_ref,      # (Bb, T, I)   batch block, original layout
                    w_ih_ref,   # (I,  Gp)     gate k at lanes [128k, 128k+H)
                    w_hh_ref,   # (Hp, Gp)     rows >= H are zero
                    b_ref,      # (1,  Gp)     b_ih + b_hh folded, zero-padded
                    w_fc_ref,   # (Hp, Fp)     rows >= H / cols >= F are zero
                    b_fc_ref,   # (1,  Fp)
                    w_out_ref,  # (1,  Fp)     output weight as a row, zero-padded
                    b_out_ref,  # (1,  1)
                    out_ref,    # (Bb, 1)
                    xw_ref):    # VMEM scratch (T, Bb, Gp)
    Bb, T, _ = x_ref.shape
    Hp, Gp = w_hh_ref.shape
    G = GATE_LANES

    w_ih = w_ih_ref[...]
    bias = b_ref[...]

    # --- Prepass: input projection for all timesteps, parked in VMEM scratch. ---
    # Off the serial critical path; keeps the recurrence below to one dot per step.
    for t in range(T):
        xw_ref[t] = jnp.dot(x_ref[:, t, :], w_ih,
                            preferred_element_type=jnp.float32) + bias

    # --- Recurrence (T is small & static -> fully unrolled, LLO sees the chain). ---
    w_hh = w_hh_ref[...]
    h = jnp.zeros((Bb, Hp), jnp.float32)
    c = jnp.zeros((Bb, G), jnp.float32)

    for t in range(T):
        gates = xw_ref[t] + jnp.dot(h, w_hh,
                                    preferred_element_type=jnp.float32)  # (Bb, Gp)

        sg = jax.nn.sigmoid(gates[:, :3 * G])    # i|f|o : 3 full vregs, one EUP push
        gg = jnp.tanh(gates[:, 3 * G:])          # g     : 1 full vreg

        i_g = sg[:, 0 * G:1 * G]                 # all slices vreg-column aligned
        f_g = sg[:, 1 * G:2 * G]
        o_g = sg[:, 2 * G:3 * G]

        c = f_g * c + i_g * gg                   # full-vreg VPU ops, no rotates
        h = o_g * jnp.tanh(c)                    # padded lanes stay exactly 0

    # --- fc -> LeakyReLU(0.01) -> output (VPU mult + lane reduce, no 1-lane MXU). ---
    y = jnp.dot(h, w_fc_ref[...], preferred_element_type=jnp.float32) + b_fc_ref[...]
    y = jnp.where(y > 0, y, jnp.float32(0.01) * y)
    out = jnp.sum(y * w_out_ref[...], axis=-1, keepdims=True) + b_out_ref[...]
    out_ref[...] = out.astype(out_ref.dtype)


def _pack_params(params):
    """Pack per-gate params into the padded, vreg-aligned layout the kernel expects."""
    H = params["w_hh"].shape[2]
    I = params["w_ih"].shape[1]
    F = params["w_fc"].shape[1]
    Gp = 4 * GATE_LANES
    order = (0, 1, 3, 2)   # PyTorch gate order [i, f, g, o] -> kernel order [i, f, o, g]

    w_ih = jnp.zeros((I, Gp), jnp.float32)
    w_hh = jnp.zeros((HP, Gp), jnp.float32)
    b = jnp.zeros((1, Gp), jnp.float32)
    for k, g in enumerate(order):
        lo = k * GATE_LANES
        w_ih = w_ih.at[:, lo:lo + H].set(params["w_ih"][g])
        w_hh = w_hh.at[:H, lo:lo + H].set(params["w_hh"][g])
        b = b.at[:, lo:lo + H].set(params["b"][g][None, :])

    w_fc = jnp.zeros((HP, FP), jnp.float32).at[:H, :F].set(params["w_fc"])
    b_fc = jnp.zeros((1, FP), jnp.float32).at[:, :F].set(params["b_fc"])
    w_out = jnp.zeros((1, FP), jnp.float32).at[:, :F].set(params["w_out"][:, 0][None, :])
    b_out = params["b_out"].astype(jnp.float32)                       # (1, 1)
    return w_ih, w_hh, b, w_fc, b_fc, w_out, b_out


def net_forward(x, params, *, batch_block=128):
    B, T, I = x.shape
    Gp = 4 * GATE_LANES

    w_ih, w_hh, b, w_fc, b_fc, w_out, b_out = _pack_params(params)

    # Wrapper only pads the batch (sublane multiple / full blocks); no relayout of x.
    Bb = min(batch_block, ((B + 7) // 8) * 8)
    Bp = ((B + Bb - 1) // Bb) * Bb
    x_pad = jnp.pad(x.astype(jnp.float32), ((0, Bp - B), (0, 0), (0, 0)))

    out = pl.pallas_call(
        lstm_mlp_kernel,
        out_shape=jax.ShapeDtypeStruct((Bp, 1), jnp.float32),
        grid_spec=pltpu.PrefetchScalarGridSpec(
            num_scalar_prefetch=0,
            grid=(Bp // Bb,),
            in_specs=[
                pl.BlockSpec((Bb, T, I), lambda i: (i, 0, 0)),   # x: tiled over batch
                pl.BlockSpec((I, Gp), lambda i: (0, 0)),         # weights: resident
                pl.BlockSpec((HP, Gp), lambda i: (0, 0)),
                pl.BlockSpec((1, Gp), lambda i: (0, 0)),
                pl.BlockSpec((HP, FP), lambda i: (0, 0)),
                pl.BlockSpec((1, FP), lambda i: (0, 0)),
                pl.BlockSpec((1, FP), lambda i: (0, 0)),
                pl.BlockSpec((1, 1), lambda i: (0, 0)),
            ],
            out_specs=pl.BlockSpec((Bb, 1), lambda i: (i, 0)),
            scratch_shapes=[pltpu.VMEM((T, Bb, Gp), jnp.float32)],
        ),
        compiler_params=pltpu.CompilerParams(
            dimension_semantics=("parallel",)),   # shards batch blocks across v7x TCs
    )(x_pad, w_ih, w_hh, b, w_fc, b_fc, w_out, b_out)

    return out[:B]


def init_params(key, input_size=8, hidden_size=40, fc_size=60):
    """Deterministic synthetic parameters with the shapes Net.__init__ implies."""
    ks = jax.random.split(key, 8)
    s = 0.1
    return {
        # Gate axis 0 follows PyTorch order: [i, f, g, o]; biases b_ih+b_hh folded.
        "w_ih": s * jax.random.normal(ks[0], (4, input_size, hidden_size), jnp.float32),
        "w_hh": s * jax.random.normal(ks[1], (4, hidden_size, hidden_size), jnp.float32),
        "b":    s * jax.random.normal(ks[2], (4, hidden_size), jnp.float32),
        "w_fc": s * jax.random.normal(ks[3], (hidden_size, fc_size), jnp.float32),
        "b_fc": s * jax.random.normal(ks[4], (1, fc_size), jnp.float32),
        "w_out": s * jax.random.normal(ks[5], (fc_size, 1), jnp.float32),
        "b_out": s * jax.random.normal(ks[6], (1, 1), jnp.float32),
    }


def reference_forward(x, p):
    """Pure-JAX reference mirroring torch semantics, for a correctness check."""
    B, T, _ = x.shape
    H = p["w_hh"].shape[2]
    h = jnp.zeros((B, H), jnp.float32)
    c = jnp.zeros((B, H), jnp.float32)
    for t in range(T):
        x_t = x[:, t, :]
        g = lambda k: x_t @ p["w_ih"][k] + h @ p["w_hh"][k] + p["b"][k][None, :]
        i_g, f_g = jax.nn.sigmoid(g(0)), jax.nn.sigmoid(g(1))
        g_g, o_g = jnp.tanh(g(2)), jax.nn.sigmoid(g(3))
        c = f_g * c + i_g * g_g
        h = o_g * jnp.tanh(c)
    y = h @ p["w_fc"] + p["b_fc"]
    y = jnp.where(y > 0, y, 0.01 * y)
    return y @ p["w_out"] + p["b_out"]


if __name__ == "__main__":
    key = jax.random.PRNGKey(0)
    k_x, k_p = jax.random.split(key)

    B, T, INPUT, HIDDEN = 2, 8, 8, 40   # batch=2, seq=8, input_size=8, hidden=40
    x = jax.random.normal(k_x, (B, T, INPUT), jnp.float32)
    params = init_params(k_p, INPUT, HIDDEN, 60)

    out = net_forward(x, params)
    out = jax.block_until_ready(out)

    ref = reference_forward(x, params)
    assert out.shape == (B, 1)
    assert jnp.allclose(out, ref, atol=1e-4, rtol=1e-4), (out, ref)

    print("KERNEL_OK")
</pallas_src>

<mosaic_0001>
module attributes {stable_mosaic.version = 11 : i64} {
  func.func @lstm_mlp_kernel(%arg0: i32, %arg1: memref<8x8x8xf32, #tpu.memory_space<vmem>>, %arg2: memref<8x512xf32, #tpu.memory_space<vmem>>, %arg3: memref<128x512xf32, #tpu.memory_space<vmem>>, %arg4: memref<1x512xf32, #tpu.memory_space<vmem>>, %arg5: memref<128x128xf32, #tpu.memory_space<vmem>>, %arg6: memref<1x128xf32, #tpu.memory_space<vmem>>, %arg7: memref<1x128xf32, #tpu.memory_space<vmem>>, %arg8: memref<1x1xf32, #tpu.memory_space<vmem>>, %arg9: memref<8x1xf32, #tpu.memory_space<vmem>>, %arg10: memref<8x8x512xf32, #tpu.memory_space<vmem>>) attributes {dimension_semantics = [#tpu.dimension_semantics<parallel>], iteration_bounds = array<i64: 1>, scalar_prefetch = 0 : i64, scratch_operands = 1 : i64, tpu.core_type = #tpu.core_type<tc>, window_params = [{transform_indices = @transform_0, window_bounds = array<i64: 8, 8, 8>}, {pipeline_mode = #tpu.pipeline_mode<synchronous>, transform_indices = @transform_1, window_bounds = array<i64: 8, 512>}, {pipeline_mode = #tpu.pipeline_mode<synchronous>, transform_indices = @transform_2, window_bounds = array<i64: 128, 512>}, {pipeline_mode = #tpu.pipeline_mode<synchronous>, transform_indices = @transform_3, window_bounds = array<i64: 1, 512>}, {pipeline_mode = #tpu.pipeline_mode<synchronous>, transform_indices = @transform_4, window_bounds = array<i64: 128, 128>}, {pipeline_mode = #tpu.pipeline_mode<synchronous>, transform_indices = @transform_5, window_bounds = array<i64: 1, 128>}, {pipeline_mode = #tpu.pipeline_mode<synchronous>, transform_indices = @transform_6, window_bounds = array<i64: 1, 128>}, {pipeline_mode = #tpu.pipeline_mode<synchronous>, transform_indices = @transform_7, window_bounds = array<i64: 1, 1>}, {transform_indices = @transform_8, window_bounds = array<i64: 8, 1>}]} {
    %c0 = arith.constant 0 : index
    %c0_0 = arith.constant 0 : index
    %0 = vector.load %arg2[%c0, %c0_0] : memref<8x512xf32, #tpu.memory_space<vmem>>, vector<8x512xf32>
    %c0_1 = arith.constant 0 : index
    %c0_2 = arith.constant 0 : index
    %1 = vector.load %arg4[%c0_1, %c0_2] : memref<1x512xf32, #tpu.memory_space<vmem>>, vector<1x512xf32>
    %c0_3 = arith.constant 0 : index
    %c0_4 = arith.constant 0 : index
    %c0_5 = arith.constant 0 : index
    %2 = vector.load %arg1[%c0_3, %c0_4, %c0_5] : memref<8x8x8xf32, #tpu.memory_space<vmem>>, vector<8x1x8xf32>
    %3 = vector.shape_cast %2 : vector<8x1x8xf32> to vector<8x8xf32>
    %cst = arith.constant dense<0.000000e+00> : vector<8x512xf32>
    %4 = tpu.matmul %3, %0, %cst {dimension_numbers = #tpu.dot_dimension_numbers<[1], [0], [0], [1], [0, 0, 1, 1], [], []>} : vector<8x8xf32>, vector<8x512xf32>, vector<8x512xf32> -> vector<8x512xf32>
    %5 = vector.broadcast %1 : vector<1x512xf32> to vector<8x512xf32>
    %6 = arith.addf %4, %5 : vector<8x512xf32>
    %c0_6 = arith.constant 0 : index
    %c0_7 = arith.constant 0 : index
    %c0_8 = arith.constant 0 : index
    %7 = vector.load %arg10[%c0_6, %c0_7, %c0_8] : memref<8x8x512xf32, #tpu.memory_space<vmem>>, vector<1x8x512xf32>
    %8 = vector.shape_cast %7 : vector<1x8x512xf32> to vector<8x512xf32>
    %9 = vector.shape_cast %6 : vector<8x512xf32> to vector<1x8x512xf32>
    tpu.vector_store %arg10[%c0_6, %c0_7, %c0_8], %9 {strides = array<i32>} : memref<8x8x512xf32, #tpu.memory_space<vmem>>, vector<1x8x512xf32>,
    %c0_9 = arith.constant 0 : index
    %c1 = arith.constant 1 : index
    %c0_10 = arith.constant 0 : index
    %10 = vector.load %arg1[%c0_9, %c1, %c0_10] : memref<8x8x8xf32, #tpu.memory_space<vmem>>, vector<8x1x8xf32>
    %11 = vector.shape_cast %10 : vector<8x1x8xf32> to vector<8x8xf32>
    %cst_11 = arith.constant dense<0.000000e+00> : vector<8x512xf32>
    %12 = tpu.matmul %11, %0, %cst_11 {dimension_numbers = #tpu.dot_dimension_numbers<[1], [0], [0], [1], [0, 0, 1, 1], [], []>} : vector<8x8xf32>, vector<8x512xf32>, vector<8x512xf32> -> vector<8x512xf32>
    %13 = vector.broadcast %1 : vector<1x512xf32> to vector<8x512xf32>
    %14 = arith.addf %12, %13 : vector<8x512xf32>
    %c1_12 = arith.constant 1 : index
    %c0_13 = arith.constant 0 : index
    %c0_14 = arith.constant 0 : index
    %15 = vector.load %arg10[%c1_12, %c0_13, %c0_14] : memref<8x8x512xf32, #tpu.memory_space<vmem>>, vector<1x8x512xf32>
    %16 = vector.shape_cast %15 : vector<1x8x512xf32> to vector<8x512xf32>
    %17 = vector.shape_cast %14 : vector<8x512xf32> to vector<1x8x512xf32>
    tpu.vector_store %arg10[%c1_12, %c0_13, %c0_14], %17 {strides = array<i32>} : memref<8x8x512xf32, #tpu.memory_space<vmem>>, vector<1x8x512xf32>,
    %c0_15 = arith.constant 0 : index
    %c2 = arith.constant 2 : index
    %c0_16 = arith.constant 0 : index
    %18 = vector.load %arg1[%c0_15, %c2, %c0_16] : memref<8x8x8xf32, #tpu.memory_space<vmem>>, vector<8x1x8xf32>
    %19 = vector.shape_cast %18 : vector<8x1x8xf32> to vector<8x8xf32>
    %cst_17 = arith.constant dense<0.000000e+00> : vector<8x512xf32>
    %20 = tpu.matmul %19, %0, %cst_17 {dimension_numbers = #tpu.dot_dimension_numbers<[1], [0], [0], [1], [0, 0, 1, 1], [], []>} : vector<8x8xf32>, vector<8x512xf32>, vector<8x512xf32> -> vector<8x512xf32>
    %21 = vector.broadcast %1 : vector<1x512xf32> to vector<8x512xf32>
    %22 = arith.addf %20, %21 : vector<8x512xf32>
    %c2_18 = arith.constant 2 : index
    %c0_19 = arith.constant 0 : index
    %c0_20 = arith.constant 0 : index
    %23 = vector.load %arg10[%c2_18, %c0_19, %c0_20] : memref<8x8x512xf32, #tpu.memory_space<vmem>>, vector<1x8x512xf32>
    %24 = vector.shape_cast %23 : vector<1x8x512xf32> to vector<8x512xf32>
    %25 = vector.shape_cast %22 : vector<8x512xf32> to vector<1x8x512xf32>
    tpu.vector_store %arg10[%c2_18, %c0_19, %c0_20], %25 {strides = array<i32>} : memref<8x8x512xf32, #tpu.memory_space<vmem>>, vector<1x8x512xf32>,
    %c0_21 = arith.constant 0 : index
    %c3 = arith.constant 3 : index
    %c0_22 = arith.constant 0 : index
    %26 = vector.load %arg1[%c0_21, %c3, %c0_22] : memref<8x8x8xf32, #tpu.memory_space<vmem>>, vector<8x1x8xf32>
    %27 = vector.shape_cast %26 : vector<8x1x8xf32> to vector<8x8xf32>
    %cst_23 = arith.constant dense<0.000000e+00> : vector<8x512xf32>
    %28 = tpu.matmul %27, %0, %cst_23 {dimension_numbers = #tpu.dot_dimension_numbers<[1], [0], [0], [1], [0, 0, 1, 1], [], []>} : vector<8x8xf32>, vector<8x512xf32>, vector<8x512xf32> -> vector<8x512xf32>
    %29 = vector.broadcast %1 : vector<1x512xf32> to vector<8x512xf32>
    %30 = arith.addf %28, %29 : vector<8x512xf32>
    %c3_24 = arith.constant 3 : index
    %c0_25 = arith.constant 0 : index
    %c0_26 = arith.constant 0 : index
    %31 = vector.load %arg10[%c3_24, %c0_25, %c0_26] : memref<8x8x512xf32, #tpu.memory_space<vmem>>, vector<1x8x512xf32>
    %32 = vector.shape_cast %31 : vector<1x8x512xf32> to vector<8x512xf32>
    %33 = vector.shape_cast %30 : vector<8x512xf32> to vector<1x8x512xf32>
    tpu.vector_store %arg10[%c3_24, %c0_25, %c0_26], %33 {strides = array<i32>} : memref<8x8x512xf32, #tpu.memory_space<vmem>>, vector<1x8x512xf32>,
    %c0_27 = arith.constant 0 : index
    %c4 = arith.constant 4 : index
    %c0_28 = arith.constant 0 : index
    %34 = vector.load %arg1[%c0_27, %c4, %c0_28] : memref<8x8x8xf32, #tpu.memory_space<vmem>>, vector<8x1x8xf32>
    %35 = vector.shape_cast %34 : vector<8x1x8xf32> to vector<8x8xf32>
    %cst_29 = arith.constant dense<0.000000e+00> : vector<8x512xf32>
    %36 = tpu.matmul %35, %0, %cst_29 {dimension_numbers = #tpu.dot_dimension_numbers<[1], [0], [0], [1], [0, 0, 1, 1], [], []>} : vector<8x8xf32>, vector<8x512xf32>, vector<8x512xf32> -> vector<8x512xf32>
    %37 = vector.broadcast %1 : vector<1x512xf32> to vector<8x512xf32>
    %38 = arith.addf %36, %37 : vector<8x512xf32>
    %c4_30 = arith.constant 4 : index
    %c0_31 = arith.constant 0 : index
    %c0_32 = arith.constant 0 : index
    %39 = vector.load %arg10[%c4_30, %c0_31, %c0_32] : memref<8x8x512xf32, #tpu.memory_space<vmem>>, vector<1x8x512xf32>
    %40 = vector.shape_cast %39 : vector<1x8x512xf32> to vector<8x512xf32>
    %41 = vector.shape_cast %38 : vector<8x512xf32> to vector<1x8x512xf32>
    tpu.vector_store %arg10[%c4_30, %c0_31, %c0_32], %41 {strides = array<i32>} : memref<8x8x512xf32, #tpu.memory_space<vmem>>, vector<1x8x512xf32>,
    %c0_33 = arith.constant 0 : index
    %c5 = arith.constant 5 : index
    %c0_34 = arith.constant 0 : index
    %42 = vector.load %arg1[%c0_33, %c5, %c0_34] : memref<8x8x8xf32, #tpu.memory_space<vmem>>, vector<8x1x8xf32>
    %43 = vector.shape_cast %42 : vector<8x1x8xf32> to vector<8x8xf32>
    %cst_35 = arith.constant dense<0.000000e+00> : vector<8x512xf32>
    %44 = tpu.matmul %43, %0, %cst_35 {dimension_numbers = #tpu.dot_dimension_numbers<[1], [0], [0], [1], [0, 0, 1, 1], [], []>} : vector<8x8xf32>, vector<8x512xf32>, vector<8x512xf32> -> vector<8x512xf32>
    %45 = vector.broadcast %1 : vector<1x512xf32> to vector<8x512xf32>
    %46 = arith.addf %44, %45 : vector<8x512xf32>
    %c5_36 = arith.constant 5 : index
    %c0_37 = arith.constant 0 : index
    %c0_38 = arith.constant 0 : index
    %47 = vector.load %arg10[%c5_36, %c0_37, %c0_38] : memref<8x8x512xf32, #tpu.memory_space<vmem>>, vector<1x8x512xf32>
    %48 = vector.shape_cast %47 : vector<1x8x512xf32> to vector<8x512xf32>
    %49 = vector.shape_cast %46 : vector<8x512xf32> to vector<1x8x512xf32>
    tpu.vector_store %arg10[%c5_36, %c0_37, %c0_38], %49 {strides = array<i32>} : memref<8x8x512xf32, #tpu.memory_space<vmem>>, vector<1x8x512xf32>,
    %c0_39 = arith.constant 0 : index
    %c6 = arith.constant 6 : index
    %c0_40 = arith.constant 0 : index
    %50 = vector.load %arg1[%c0_39, %c6, %c0_40] : memref<8x8x8xf32, #tpu.memory_space<vmem>>, vector<8x1x8xf32>
    %51 = vector.shape_cast %50 : vector<8x1x8xf32> to vector<8x8xf32>
    %cst_41 = arith.constant dense<0.000000e+00> : vector<8x512xf32>
    %52 = tpu.matmul %51, %0, %cst_41 {dimension_numbers = #tpu.dot_dimension_numbers<[1], [0], [0], [1], [0, 0, 1, 1], [], []>} : vector<8x8xf32>, vector<8x512xf32>, vector<8x512xf32> -> vector<8x512xf32>
    %53 = vector.broadcast %1 : vector<1x512xf32> to vector<8x512xf32>
    %54 = arith.addf %52, %53 : vector<8x512xf32>
    %c6_42 = arith.constant 6 : index
    %c0_43 = arith.constant 0 : index
    %c0_44 = arith.constant 0 : index
    %55 = vector.load %arg10[%c6_42, %c0_43, %c0_44] : memref<8x8x512xf32, #tpu.memory_space<vmem>>, vector<1x8x512xf32>
    %56 = vector.shape_cast %55 : vector<1x8x512xf32> to vector<8x512xf32>
    %57 = vector.shape_cast %54 : vector<8x512xf32> to vector<1x8x512xf32>
    tpu.vector_store %arg10[%c6_42, %c0_43, %c0_44], %57 {strides = array<i32>} : memref<8x8x512xf32, #tpu.memory_space<vmem>>, vector<1x8x512xf32>,
    %c0_45 = arith.constant 0 : index
    %c7 = arith.constant 7 : index
    %c0_46 = arith.constant 0 : index
    %58 = vector.load %arg1[%c0_45, %c7, %c0_46] : memref<8x8x8xf32, #tpu.memory_space<vmem>>, vector<8x1x8xf32>
    %59 = vector.shape_cast %58 : vector<8x1x8xf32> to vector<8x8xf32>
    %cst_47 = arith.constant dense<0.000000e+00> : vector<8x512xf32>
    %60 = tpu.matmul %59, %0, %cst_47 {dimension_numbers = #tpu.dot_dimension_numbers<[1], [0], [0], [1], [0, 0, 1, 1], [], []>} : vector<8x8xf32>, vector<8x512xf32>, vector<8x512xf32> -> vector<8x512xf32>
    %61 = vector.broadcast %1 : vector<1x512xf32> to vector<8x512xf32>
    %62 = arith.addf %60, %61 : vector<8x512xf32>
    %c7_48 = arith.constant 7 : index
    %c0_49 = arith.constant 0 : index
    %c0_50 = arith.constant 0 : index
    %63 = vector.load %arg10[%c7_48, %c0_49, %c0_50] : memref<8x8x512xf32, #tpu.memory_space<vmem>>, vector<1x8x512xf32>
    %64 = vector.shape_cast %63 : vector<1x8x512xf32> to vector<8x512xf32>
    %65 = vector.shape_cast %62 : vector<8x512xf32> to vector<1x8x512xf32>
    tpu.vector_store %arg10[%c7_48, %c0_49, %c0_50], %65 {strides = array<i32>} : memref<8x8x512xf32, #tpu.memory_space<vmem>>, vector<1x8x512xf32>,
    %c0_51 = arith.constant 0 : index
    %c0_52 = arith.constant 0 : index
    %66 = vector.load %arg3[%c0_51, %c0_52] : memref<128x512xf32, #tpu.memory_space<vmem>>, vector<128x512xf32>
    %cst_53 = arith.constant 0.000000e+00 : f32
    %67 = vector.broadcast %cst_53 : f32 to vector<8x128xf32>
    %cst_54 = arith.constant 0.000000e+00 : f32
    %68 = vector.broadcast %cst_54 : f32 to vector<8x128xf32>
    %c0_55 = arith.constant 0 : index
    %c0_56 = arith.constant 0 : index
    %c0_57 = arith.constant 0 : index
    %69 = vector.load %arg10[%c0_55, %c0_56, %c0_57] : memref<8x8x512xf32, #tpu.memory_space<vmem>>, vector<1x8x512xf32>
    %70 = vector.shape_cast %69 : vector<1x8x512xf32> to vector<8x512xf32>
    %cst_58 = arith.constant dense<0.000000e+00> : vector<8x512xf32>
    %71 = tpu.matmul %67, %66, %cst_58 {dimension_numbers = #tpu.dot_dimension_numbers<[1], [0], [0], [1], [0, 0, 1, 1], [], []>} : vector<8x128xf32>, vector<128x512xf32>, vector<8x512xf32> -> vector<8x512xf32>
    %72 = arith.addf %70, %71 : vector<8x512xf32>
    %73 = vector.extract_strided_slice %72 {offsets = [0, 0], sizes = [8, 384], strides = [1, 1]} : vector<8x512xf32> to vector<8x384xf32>
    %74 = arith.negf %73 : vector<8x384xf32>
    %75 = math.exp %74 : vector<8x384xf32>
    %cst_59 = arith.constant 1.000000e+00 : f32
    %76 = vector.broadcast %cst_59 : f32 to vector<8x384xf32>
    %77 = arith.addf %76, %75 : vector<8x384xf32>
    %78 = arith.divf %76, %77 : vector<8x384xf32>
    %79 = vector.extract_strided_slice %72 {offsets = [0, 384], sizes = [8, 128], strides = [1, 1]} : vector<8x512xf32> to vector<8x128xf32>
    %80 = math.tanh %79 : vector<8x128xf32>
    %81 = vector.extract_strided_slice %78 {offsets = [0, 0], sizes = [8, 128], strides = [1, 1]} : vector<8x384xf32> to vector<8x128xf32>
    %82 = vector.extract_strided_slice %78 {offsets = [0, 128], sizes = [8, 128], strides = [1, 1]} : vector<8x384xf32> to vector<8x128xf32>
    %83 = vector.extract_strided_slice %78 {offsets = [0, 256], sizes = [8, 128], strides = [1, 1]} : vector<8x384xf32> to vector<8x128xf32>
    %84 = arith.mulf %82, %68 : vector<8x128xf32>
    %85 = arith.mulf %81, %80 : vector<8x128xf32>
    %86 = arith.addf %84, %85 : vector<8x128xf32>
    %87 = math.tanh %86 : vector<8x128xf32>
    %88 = arith.mulf %83, %87 : vector<8x128xf32>
    %c1_60 = arith.constant 1 : index
    %c0_61 = arith.constant 0 : index
    %c0_62 = arith.constant 0 : index
    %89 = vector.load %arg10[%c1_60, %c0_61, %c0_62] : memref<8x8x512xf32, #tpu.memory_space<vmem>>, vector<1x8x512xf32>
    %90 = vector.shape_cast %89 : vector<1x8x512xf32> to vector<8x512xf32>
    %cst_63 = arith.constant dense<0.000000e+00> : vector<8x512xf32>
    %91 = tpu.matmul %88, %66, %cst_63 {dimension_numbers = #tpu.dot_dimension_numbers<[1], [0], [0], [1], [0, 0, 1, 1], [], []>} : vector<8x128xf32>, vector<128x512xf32>, vector<8x512xf32> -> vector<8x512xf32>
    %92 = arith.addf %90, %91 : vector<8x512xf32>
    %93 = vector.extract_strided_slice %92 {offsets = [0, 0], sizes = [8, 384], strides = [1, 1]} : vector<8x512xf32> to vector<8x384xf32>
    %94 = arith.negf %93 : vector<8x384xf32>
    %95 = math.exp %94 : vector<8x384xf32>
    %cst_64 = arith.constant 1.000000e+00 : f32
    %96 = vector.broadcast %cst_64 : f32 to vector<8x384xf32>
    %97 = arith.addf %96, %95 : vector<8x384xf32>
    %98 = arith.divf %96, %97 : vector<8x384xf32>
    %99 = vector.extract_strided_slice %92 {offsets = [0, 384], sizes = [8, 128], strides = [1, 1]} : vector<8x512xf32> to vector<8x128xf32>
    %100 = math.tanh %99 : vector<8x128xf32>
    %101 = vector.extract_strided_slice %98 {offsets = [0, 0], sizes = [8, 128], strides = [1, 1]} : vector<8x384xf32> to vector<8x128xf32>
    %102 = vector.extract_strided_slice %98 {offsets = [0, 128], sizes = [8, 128], strides = [1, 1]} : vector<8x384xf32> to vector<8x128xf32>
    %103 = vector.extract_strided_slice %98 {offsets = [0, 256], sizes = [8, 128], strides = [1, 1]} : vector<8x384xf32> to vector<8x128xf32>
    %104 = arith.mulf %102, %86 : vector<8x128xf32>
    %105 = arith.mulf %101, %100 : vector<8x128xf32>
    %106 = arith.addf %104, %105 : vector<8x128xf32>
    %107 = math.tanh %106 : vector<8x128xf32>
    %108 = arith.mulf %103, %107 : vector<8x128xf32>
    %c2_65 = arith.constant 2 : index
    %c0_66 = arith.constant 0 : index
    %c0_67 = arith.constant 0 : index
    %109 = vector.load %arg10[%c2_65, %c0_66, %c0_67] : memref<8x8x512xf32, #tpu.memory_space<vmem>>, vector<1x8x512xf32>
    %110 = vector.shape_cast %109 : vector<1x8x512xf32> to vector<8x512xf32>
    %cst_68 = arith.constant dense<0.000000e+00> : vector<8x512xf32>
    %111 = tpu.matmul %108, %66, %cst_68 {dimension_numbers = #tpu.dot_dimension_numbers<[1], [0], [0], [1], [0, 0, 1, 1], [], []>} : vector<8x128xf32>, vector<128x512xf32>, vector<8x512xf32> -> vector<8x512xf32>
    %112 = arith.addf %110, %111 : vector<8x512xf32>
    %113 = vector.extract_strided_slice %112 {offsets = [0, 0], sizes = [8, 384], strides = [1, 1]} : vector<8x512xf32> to vector<8x384xf32>
    %114 = arith.negf %113 : vector<8x384xf32>
    %115 = math.exp %114 : vector<8x384xf32>
    %cst_69 = arith.constant 1.000000e+00 : f32
    %116 = vector.broadcast %cst_69 : f32 to vector<8x384xf32>
    %117 = arith.addf %116, %115 : vector<8x384xf32>
    %118 = arith.divf %116, %117 : vector<8x384xf32>
    %119 = vector.extract_strided_slice %112 {offsets = [0, 384], sizes = [8, 128], strides = [1, 1]} : vector<8x512xf32> to vector<8x128xf32>
    %120 = math.tanh %119 : vector<8x128xf32>
    %121 = vector.extract_strided_slice %118 {offsets = [0, 0], sizes = [8, 128], strides = [1, 1]} : vector<8x384xf32> to vector<8x128xf32>
    %122 = vector.extract_strided_slice %118 {offsets = [0, 128], sizes = [8, 128], strides = [1, 1]} : vector<8x384xf32> to vector<8x128xf32>
    %123 = vector.extract_strided_slice %118 {offsets = [0, 256], sizes = [8, 128], strides = [1, 1]} : vector<8x384xf32> to vector<8x128xf32>
    %124 = arith.mulf %122, %106 : vector<8x128xf32>
    %125 = arith.mulf %121, %120 : vector<8x128xf32>
    %126 = arith.addf %124, %125 : vector<8x128xf32>
    %127 = math.tanh %126 : vector<8x128xf32>
    %128 = arith.mulf %123, %127 : vector<8x128xf32>
    %c3_70 = arith.constant 3 : index
    %c0_71 = arith.constant 0 : index
    %c0_72 = arith.constant 0 : index
    %129 = vector.load %arg10[%c3_70, %c0_71, %c0_72] : memref<8x8x512xf32, #tpu.memory_space<vmem>>, vector<1x8x512xf32>
    %130 = vector.shape_cast %129 : vector<1x8x512xf32> to vector<8x512xf32>
    %cst_73 = arith.constant dense<0.000000e+00> : vector<8x512xf32>
    %131 = tpu.matmul %128, %66, %cst_73 {dimension_numbers = #tpu.dot_dimension_numbers<[1], [0], [0], [1], [0, 0, 1, 1], [], []>} : vector<8x128xf32>, vector<128x512xf32>, vector<8x512xf32> -> vector<8x512xf32>
    %132 = arith.addf %130, %131 : vector<8x512xf32>
    %133 = vector.extract_strided_slice %132 {offsets = [0, 0], sizes = [8, 384], strides = [1, 1]} : vector<8x512xf32> to vector<8x384xf32>
    %134 = arith.negf %133 : vector<8x384xf32>
    %135 = math.exp %134 : vector<8x384xf32>
    %cst_74 = arith.constant 1.000000e+00 : f32
    %136 = vector.broadcast %cst_74 : f32 to vector<8x384xf32>
    %137 = arith.addf %136, %135 : vector<8x384xf32>
    %138 = arith.divf %136, %137 : vector<8x384xf32>
    %139 = vector.extract_strided_slice %132 {offsets = [0, 384], sizes = [8, 128], strides = [1, 1]} : vector<8x512xf32> to vector<8x128xf32>
    %140 = math.tanh %139 : vector<8x128xf32>
    %141 = vector.extract_strided_slice %138 {offsets = [0, 0], sizes = [8, 128], strides = [1, 1]} : vector<8x384xf32> to vector<8x128xf32>
    %142 = vector.extract_strided_slice %138 {offsets = [0, 128], sizes = [8, 128], strides = [1, 1]} : vector<8x384xf32> to vector<8x128xf32>
    %143 = vector.extract_strided_slice %138 {offsets = [0, 256], sizes = [8, 128], strides = [1, 1]} : vector<8x384xf32> to vector<8x128xf32>
    %144 = arith.mulf %142, %126 : vector<8x128xf32>
    %145 = arith.mulf %141, %140 : vector<8x128xf32>
    %146 = arith.addf %144, %145 : vector<8x128xf32>
    %147 = math.tanh %146 : vector<8x128xf32>
    %148 = arith.mulf %143, %147 : vector<8x128xf32>
    %c4_75 = arith.constant 4 : index
    %c0_76 = arith.constant 0 : index
    %c0_77 = arith.constant 0 : index
    %149 = vector.load %arg10[%c4_75, %c0_76, %c0_77] : memref<8x8x512xf32, #tpu.memory_space<vmem>>, vector<1x8x512xf32>
    %150 = vector.shape_cast %149 : vector<1x8x512xf32> to vector<8x512xf32>
    %cst_78 = arith.constant dense<0.000000e+00> : vector<8x512xf32>
    %151 = tpu.matmul %148, %66, %cst_78 {dimension_numbers = #tpu.dot_dimension_numbers<[1], [0], [0], [1], [0, 0, 1, 1], [], []>} : vector<8x128xf32>, vector<128x512xf32>, vector<8x512xf32> -> vector<8x512xf32>
    %152 = arith.addf %150, %151 : vector<8x512xf32>
    %153 = vector.extract_strided_slice %152 {offsets = [0, 0], sizes = [8, 384], strides = [1, 1]} : vector<8x512xf32> to vector<8x384xf32>
    %154 = arith.negf %153 : vector<8x384xf32>
    %155 = math.exp %154 : vector<8x384xf32>
    %cst_79 = arith.constant 1.000000e+00 : f32
    %156 = vector.broadcast %cst_79 : f32 to vector<8x384xf32>
    %157 = arith.addf %156, %155 : vector<8x384xf32>
    %158 = arith.divf %156, %157 : vector<8x384xf32>
    %159 = vector.extract_strided_slice %152 {offsets = [0, 384], sizes = [8, 128], strides = [1, 1]} : vector<8x512xf32> to vector<8x128xf32>
    %160 = math.tanh %159 : vector<8x128xf32>
    %161 = vector.extract_strided_slice %158 {offsets = [0, 0], sizes = [8, 128], strides = [1, 1]} : vector<8x384xf32> to vector<8x128xf32>
    %162 = vector.extract_strided_slice %158 {offsets = [0, 128], sizes = [8, 128], strides = [1, 1]} : vector<8x384xf32> to vector<8x128xf32>
    %163 = vector.extract_strided_slice %158 {offsets = [0, 256], sizes = [8, 128], strides = [1, 1]} : vector<8x384xf32> to vector<8x128xf32>
    %164 = arith.mulf %162, %146 : vector<8x128xf32>
    %165 = arith.mulf %161, %160 : vector<8x128xf32>
    %166 = arith.addf %164, %165 : vector<8x128xf32>
    %167 = math.tanh %166 : vector<8x128xf32>
    %168 = arith.mulf %163, %167 : vector<8x128xf32>
    %c5_80 = arith.constant 5 : index
    %c0_81 = arith.constant 0 : index
    %c0_82 = arith.constant 0 : index
    %169 = vector.load %arg10[%c5_80, %c0_81, %c0_82] : memref<8x8x512xf32, #tpu.memory_space<vmem>>, vector<1x8x512xf32>
    %170 = vector.shape_cast %169 : vector<1x8x512xf32> to vector<8x512xf32>
    %cst_83 = arith.constant dense<0.000000e+00> : vector<8x512xf32>
    %171 = tpu.matmul %168, %66, %cst_83 {dimension_numbers = #tpu.dot_dimension_numbers<[1], [0], [0], [1], [0, 0, 1, 1], [], []>} : vector<8x128xf32>, vector<128x512xf32>, vector<8x512xf32> -> vector<8x512xf32>
    %172 = arith.addf %170, %171 : vector<8x512xf32>
    %173 = vector.extract_strided_slice %172 {offsets = [0, 0], sizes = [8, 384], strides = [1, 1]} : vector<8x512xf32> to vector<8x384xf32>
    %174 = arith.negf %173 : vector<8x384xf32>
    %175 = math.exp %174 : vector<8x384xf32>
    %cst_84 = arith.constant 1.000000e+00 : f32
    %176 = vector.broadcast %cst_84 : f32 to vector<8x384xf32>
    %177 = arith.addf %176, %175 : vector<8x384xf32>
    %178 = arith.divf %176, %177 : vector<8x384xf32>
    %179 = vector.extract_strided_slice %172 {offsets = [0, 384], sizes = [8, 128], strides = [1, 1]} : vector<8x512xf32> to vector<8x128xf32>
    %180 = math.tanh %179 : vector<8x128xf32>
    %181 = vector.extract_strided_slice %178 {offsets = [0, 0], sizes = [8, 128], strides = [1, 1]} : vector<8x384xf32> to vector<8x128xf32>
    %182 = vector.extract_strided_slice %178 {offsets = [0, 128], sizes = [8, 128], strides = [1, 1]} : vector<8x384xf32> to vector<8x128xf32>
    %183 = vector.extract_strided_slice %178 {offsets = [0, 256], sizes = [8, 128], strides = [1, 1]} : vector<8x384xf32> to vector<8x128xf32>
    %184 = arith.mulf %182, %166 : vector<8x128xf32>
    %185 = arith.mulf %181, %180 : vector<8x128xf32>
    %186 = arith.addf %184, %185 : vector<8x128xf32>
    %187 = math.tanh %186 : vector<8x128xf32>
    %188 = arith.mulf %183, %187 : vector<8x128xf32>
    %c6_85 = arith.constant 6 : index
    %c0_86 = arith.constant 0 : index
    %c0_87 = arith.constant 0 : index
    %189 = vector.load %arg10[%c6_85, %c0_86, %c0_87] : memref<8x8x512xf32, #tpu.memory_space<vmem>>, vector<1x8x512xf32>
    %190 = vector.shape_cast %189 : vector<1x8x512xf32> to vector<8x512xf32>
    %cst_88 = arith.constant dense<0.000000e+00> : vector<8x512xf32>
    %191 = tpu.matmul %188, %66, %cst_88 {dimension_numbers = #tpu.dot_dimension_numbers<[1], [0], [0], [1], [0, 0, 1, 1], [], []>} : vector<8x128xf32>, vector<128x512xf32>, vector<8x512xf32> -> vector<8x512xf32>
    %192 = arith.addf %190, %191 : vector<8x512xf32>
    %193 = vector.extract_strided_slice %192 {offsets = [0, 0], sizes = [8, 384], strides = [1, 1]} : vector<8x512xf32> to vector<8x384xf32>
    %194 = arith.negf %193 : vector<8x384xf32>
    %195 = math.exp %194 : vector<8x384xf32>
    %cst_89 = arith.constant 1.000000e+00 : f32
    %196 = vector.broadcast %cst_89 : f32 to vector<8x384xf32>
    %197 = arith.addf %196, %195 : vector<8x384xf32>
    %198 = arith.divf %196, %197 : vector<8x384xf32>
    %199 = vector.extract_strided_slice %192 {offsets = [0, 384], sizes = [8, 128], strides = [1, 1]} : vector<8x512xf32> to vector<8x128xf32>
    %200 = math.tanh %199 : vector<8x128xf32>
    %201 = vector.extract_strided_slice %198 {offsets = [0, 0], sizes = [8, 128], strides = [1, 1]} : vector<8x384xf32> to vector<8x128xf32>
    %202 = vector.extract_strided_slice %198 {offsets = [0, 128], sizes = [8, 128], strides = [1, 1]} : vector<8x384xf32> to vector<8x128xf32>
    %203 = vector.extract_strided_slice %198 {offsets = [0, 256], sizes = [8, 128], strides = [1, 1]} : vector<8x384xf32> to vector<8x128xf32>
    %204 = arith.mulf %202, %186 : vector<8x128xf32>
    %205 = arith.mulf %201, %200 : vector<8x128xf32>
    %206 = arith.addf %204, %205 : vector<8x128xf32>
    %207 = math.tanh %206 : vector<8x128xf32>
    %208 = arith.mulf %203, %207 : vector<8x128xf32>
    %c7_90 = arith.constant 7 : index
    %c0_91 = arith.constant 0 : index
    %c0_92 = arith.constant 0 : index
    %209 = vector.load %arg10[%c7_90, %c0_91, %c0_92] : memref<8x8x512xf32, #tpu.memory_space<vmem>>, vector<1x8x512xf32>
    %210 = vector.shape_cast %209 : vector<1x8x512xf32> to vector<8x512xf32>
    %cst_93 = arith.constant dense<0.000000e+00> : vector<8x512xf32>
    %211 = tpu.matmul %208, %66, %cst_93 {dimension_numbers = #tpu.dot_dimension_numbers<[1], [0], [0], [1], [0, 0, 1, 1], [], []>} : vector<8x128xf32>, vector<128x512xf32>, vector<8x512xf32> -> vector<8x512xf32>
    %212 = arith.addf %210, %211 : vector<8x512xf32>
    %213 = vector.extract_strided_slice %212 {offsets = [0, 0], sizes = [8, 384], strides = [1, 1]} : vector<8x512xf32> to vector<8x384xf32>
    %214 = arith.negf %213 : vector<8x384xf32>
    %215 = math.exp %214 : vector<8x384xf32>
    %cst_94 = arith.constant 1.000000e+00 : f32
    %216 = vector.broadcast %cst_94 : f32 to vector<8x384xf32>
    %217 = arith.addf %216, %215 : vector<8x384xf32>
    %218 = arith.divf %216, %217 : vector<8x384xf32>
    %219 = vector.extract_strided_slice %212 {offsets = [0, 384], sizes = [8, 128], strides = [1, 1]} : vector<8x512xf32> to vector<8x128xf32>
    %220 = math.tanh %219 : vector<8x128xf32>
    %221 = vector.extract_strided_slice %218 {offsets = [0, 0], sizes = [8, 128], strides = [1, 1]} : vector<8x384xf32> to vector<8x128xf32>
    %222 = vector.extract_strided_slice %218 {offsets = [0, 128], sizes = [8, 128], strides = [1, 1]} : vector<8x384xf32> to vector<8x128xf32>
    %223 = vector.extract_strided_slice %218 {offsets = [0, 256], sizes = [8, 128], strides = [1, 1]} : vector<8x384xf32> to vector<8x128xf32>
    %224 = arith.mulf %222, %206 : vector<8x128xf32>
    %225 = arith.mulf %221, %220 : vector<8x128xf32>
    %226 = arith.addf %224, %225 : vector<8x128xf32>
    %227 = math.tanh %226 : vector<8x128xf32>
    %228 = arith.mulf %223, %227 : vector<8x128xf32>
    %c0_95 = arith.constant 0 : index
    %c0_96 = arith.constant 0 : index
    %229 = vector.load %arg5[%c0_95, %c0_96] : memref<128x128xf32, #tpu.memory_space<vmem>>, vector<128x128xf32>
    %cst_97 = arith.constant dense<0.000000e+00> : vector<8x128xf32>
    %230 = tpu.matmul %228, %229, %cst_97 {dimension_numbers = #tpu.dot_dimension_numbers<[1], [0], [0], [1], [0, 0, 1, 1], [], []>} : vector<8x128xf32>, vector<128x128xf32>, vector<8x128xf32> -> vector<8x128xf32>
    %c0_98 = arith.constant 0 : index
    %c0_99 = arith.constant 0 : index
    %231 = vector.load %arg6[%c0_98, %c0_99] : memref<1x128xf32, #tpu.memory_space<vmem>>, vector<1x128xf32>
    %232 = vector.broadcast %231 : vector<1x128xf32> to vector<8x128xf32>
    %233 = arith.addf %230, %232 : vector<8x128xf32>
    %cst_100 = arith.constant 0.000000e+00 : f32
    %234 = vector.broadcast %cst_100 : f32 to vector<8x128xf32>
    %235 = arith.cmpf ogt, %233, %234 : vector<8x128xf32>
    %cst_101 = arith.constant 0.00999999977 : f32
    %236 = vector.broadcast %cst_101 : f32 to vector<8x128xf32>
    %237 = arith.mulf %236, %233 : vector<8x128xf32>
    %238 = arith.select %235, %233, %237 : vector<8x128xi1>, vector<8x128xf32>
    %c0_102 = arith.constant 0 : index
    %c0_103 = arith.constant 0 : index
    %239 = vector.load %arg7[%c0_102, %c0_103] : memref<1x128xf32, #tpu.memory_space<vmem>>, vector<1x128xf32>
    %240 = vector.broadcast %239 : vector<1x128xf32> to vector<8x128xf32>
    %241 = arith.mulf %238, %240 : vector<8x128xf32>
    %cst_104 = arith.constant dense<0.000000e+00> : vector<8xf32>
    %242 = vector.multi_reduction <add>, %241, %cst_104 [1] : vector<8x128xf32> to vector<8xf32>
    %243 = vector.shape_cast %242 : vector<8xf32> to vector<8x1xf32>
    %c0_105 = arith.constant 0 : index
    %c0_106 = arith.constant 0 : index
    %244 = vector.load %arg8[%c0_105, %c0_106] : memref<1x1xf32, #tpu.memory_space<vmem>>, vector<1x1xf32>
    %245 = vector.broadcast %244 : vector<1x1xf32> to vector<8x1xf32>
    %246 = arith.addf %243, %245 : vector<8x1xf32>
    %c0_107 = arith.constant 0 : index
    %c0_108 = arith.constant 0 : index
    %247 = vector.load %arg9[%c0_107, %c0_108] : memref<8x1xf32, #tpu.memory_space<vmem>>, vector<8x1xf32>
    tpu.vector_store %arg9[%c0_107, %c0_108], %246 {strides = array<i32>} : memref<8x1xf32, #tpu.memory_space<vmem>>, vector<8x1xf32>,
    return
  }
  func.func @transform_0(%arg0: i32) -> (i32, i32, i32) {
    %c0_i32 = arith.constant 0 : i32
    %c0_i32_0 = arith.constant 0 : i32
    %c0_i32_1 = arith.constant 0 : i32
    return %arg0, %c0_i32, %c0_i32_0 : i32, i32, i32
  }
  func.func @transform_1(%arg0: i32) -> (i32, i32) {
    %c0_i32 = arith.constant 0 : i32
    %c0_i32_0 = arith.constant 0 : i32
    %c0_i32_1 = arith.constant 0 : i32
    return %c0_i32, %c0_i32_0 : i32, i32
  }
  func.func @transform_2(%arg0: i32) -> (i32, i32) {
    %c0_i32 = arith.constant 0 : i32
    %c0_i32_0 = arith.constant 0 : i32
    %c0_i32_1 = arith.constant 0 : i32
    return %c0_i32, %c0_i32_0 : i32, i32
  }
  func.func @transform_3(%arg0: i32) -> (i32, i32) {
    %c0_i32 = arith.constant 0 : i32
    %c0_i32_0 = arith.constant 0 : i32
    %c0_i32_1 = arith.constant 0 : i32
    return %c0_i32, %c0_i32_0 : i32, i32
  }
  func.func @transform_4(%arg0: i32) -> (i32, i32) {
    %c0_i32 = arith.constant 0 : i32
    %c0_i32_0 = arith.constant 0 : i32
    %c0_i32_1 = arith.constant 0 : i32
    return %c0_i32, %c0_i32_0 : i32, i32
  }
  func.func @transform_5(%arg0: i32) -> (i32, i32) {
    %c0_i32 = arith.constant 0 : i32
    %c0_i32_0 = arith.constant 0 : i32
    %c0_i32_1 = arith.constant 0 : i32
    return %c0_i32, %c0_i32_0 : i32, i32
  }
  func.func @transform_6(%arg0: i32) -> (i32, i32) {
    %c0_i32 = arith.constant 0 : i32
    %c0_i32_0 = arith.constant 0 : i32
    %c0_i32_1 = arith.constant 0 : i32
    return %c0_i32, %c0_i32_0 : i32, i32
  }
  func.func @transform_7(%arg0: i32) -> (i32, i32) {
    %c0_i32 = arith.constant 0 : i32
    %c0_i32_0 = arith.constant 0 : i32
    %c0_i32_1 = arith.constant 0 : i32
    return %c0_i32, %c0_i32_0 : i32, i32
  }
  func.func @transform_8(%arg0: i32) -> (i32, i32) {
    %c0_i32 = arith.constant 0 : i32
    %c0_i32_0 = arith.constant 0 : i32
    return %arg0, %c0_i32 : i32, i32
  }
}

</mosaic_0001>

<llo_original>
// kernel: tpu_custom_call.1
$region0: #{tpu_custom_call.1}
  #allocation0 [shape = 'u32[]', space=smem, size = 0x4, offset = 0x4, fixed_abs, tag = 'smem constant byte address 0x4 - core index']
  #allocation1 [shape = 'u32[144,128]{1,0:T(1,128)}', space=vmem, size = 0x12000, scoped, tag = 'internal scratch']
  #allocation2 [shape = 'f32[8,8,512]{2,1,0:T(8,128)}', space=vmem, size = 0x20000, scoped, tag = 'scratch operand']
  #allocation3 [shape = 'f32[1,1]{1,0:T(1,128)S(1)}', space=vmem, size = 0x200, scoped, tag = 'scoped memory for tpu_custom_call.1']
  %s0 = inlined_call_operand.hbm [shape: f32[8,8,8], index: 0, kind: input, shape index: {}]
  %s1 = inlined_call_operand.hbm [shape: f32[8,512], index: 1, kind: input, shape index: {}]
  %s2 = inlined_call_operand.hbm [shape: f32[128,512], index: 2, kind: input, shape index: {}]
  %s3 = inlined_call_operand.vmem [shape: f32[1,512], index: 3, kind: input, shape index: {}]
  %s4 = inlined_call_operand.hbm [shape: f32[128,128], index: 4, kind: input, shape index: {}]
  %s5 = inlined_call_operand.vmem [shape: f32[1,128], index: 5, kind: input, shape index: {}]
  %s6 = inlined_call_operand.vmem [shape: f32[1,128], index: 6, kind: input, shape index: {}]
  %s7 = inlined_call_operand.<no memory space> [shape: f32[1,1], index: 7, kind: input, shape index: {}]
  %s8 = inlined_call_operand.vmem [shape: f32[8,1], index: 8, kind: output, shape index: {}]
  %s9 = sld [smem:[#allocation0]]
  $region58: #{tpu_custom_call.1} parent=0
    _
  %s11 = ssub.s32 1, %s9
  %s12 = scalar_select 0, %s11, %s9
  %v13 = vstv %s7
  %14 = vst [vmem:[#allocation3] sm:$0x1] %v13
  $region1: #{tpu_custom_call.1} parent=0
    #allocation4 [shape = 'u8[32768]{0}', space=vmem, size = 0x8000, scoped, tag = 'input window, operand 0, single buffered']
    #allocation5 [shape = 's32[1]{0}', space=sflag, size = 0x4, scoped, tag = 'scoped memory for tpu_custom_call.1']
    #allocation6 [shape = 'u8[16384]{0}', space=vmem, size = 0x4000, scoped, tag = 'input window, operand 1, single buffered']
    #allocation7 [shape = 's32[1]{0}', space=sflag, size = 0x4, scoped, tag = 'scoped memory for tpu_custom_call.1']
    #allocation8 [shape = 'u8[262144]{0}', space=vmem, size = 0x40000, scoped, tag = 'input window, operand 2, single buffered']
    #allocation9 [shape = 'u8[65536]{0}', space=vmem, size = 0x10000, scoped, tag = 'input window, operand 4, single buffered']
    #allocation10 [shape = 's32[1]{0}', space=sflag, size = 0x4, scoped, tag = 'scoped memory for tpu_custom_call.1']
    %15 = vsyncpa [#allocation5], 0
    %16 = vsyncpa [#allocation7], 0
    %17 = vsyncpa [#allocation10], 0
    // Predicated region
    $region2: #{tpu_custom_call.1} parent=1 // pred_check
      _
    $region3: #{tpu_custom_call.1} parent=1 // pred_check_branch
      %19 = sbr.rel (0) target = $region5
    $region4: #{tpu_custom_call.1} parent=1 // pred_region
      %s21 = ssub.s32 1024, 1024
      %22 = vsyncadd [#allocation5], %s21
      %s23 = sshll.u32 [#allocation4], 4
      %s24 = int_to_ptr.vmem [resolvable:$true] %s23
      %29 = dma.hbm_to_vmem [thread:$0]  %s0, 1024, %s24, [#allocation5], 128, 128, 8
    $region5: #{tpu_custom_call.1} parent=1 // pred_fallthru
      _
    // Predicated region
    $region6: #{tpu_custom_call.1} parent=1 // pred_check
      _
    $region7: #{tpu_custom_call.1} parent=1 // pred_check_branch
      %31 = sbr.rel (0) target = $region9
    $region8: #{tpu_custom_call.1} parent=1 // pred_region
      %s33 = ssub.s32 512, 512
      %34 = vsyncadd [#allocation7], %s33
      %s36 = sshll.u32 [#allocation6], 4
      %s37 = int_to_ptr.vmem [resolvable:$true] %s36
      %39 = dma.hbm_to_vmem [thread:$0]  %s1, 512, %s37, [#allocation7]
    $region9: #{tpu_custom_call.1} parent=1 // pred_fallthru
      _
    // Predicated region
    $region10: #{tpu_custom_call.1} parent=1 // pred_check
      _
    $region11: #{tpu_custom_call.1} parent=1 // pred_check_branch
      %41 = sbr.rel (0) target = $region13
    $region12: #{tpu_custom_call.1} parent=1 // pred_region
      %s43 = ssub.s32 8192, 8192
      %44 = vsyncadd [#allocation7], %s43
      %s45 = sshll.u32 [#allocation8], 4
      %s46 = int_to_ptr.vmem [resolvable:$true] %s45
      %51 = dma.hbm_to_vmem [thread:$0]  %s2, 8192, %s46, [#allocation7], 512, 512, 32
    $region13: #{tpu_custom_call.1} parent=1 // pred_fallthru
      _
    // Predicated region
    $region14: #{tpu_custom_call.1} parent=1 // pred_check
      _
    $region15: #{tpu_custom_call.1} parent=1 // pred_check_branch
      %53 = sbr.rel (0) target = $region17
    $region16: #{tpu_custom_call.1} parent=1 // pred_region
      _
    $region17: #{tpu_custom_call.1} parent=1 // pred_fallthru
      _
    // Predicated region
    $region18: #{tpu_custom_call.1} parent=1 // pred_check
      _
    $region19: #{tpu_custom_call.1} parent=1 // pred_check_branch
      %55 = sbr.rel (0) target = $region21
    $region20: #{tpu_custom_call.1} parent=1 // pred_region
      %s57 = ssub.s32 2048, 2048
      %58 = vsyncadd [#allocation10], %s57
      %s59 = sshll.u32 [#allocation9], 4
      %s60 = int_to_ptr.vmem [resolvable:$true] %s59
      %65 = dma.hbm_to_vmem [thread:$0]  %s4, 2048, %s60, [#allocation10], 128, 128, 8
    $region21: #{tpu_custom_call.1} parent=1 // pred_fallthru
      _
    // Predicated region
    $region22: #{tpu_custom_call.1} parent=1 // pred_check
      _
    $region23: #{tpu_custom_call.1} parent=1 // pred_check_branch
      %67 = sbr.rel (0) target = $region25
    $region24: #{tpu_custom_call.1} parent=1 // pred_region
      _
    $region25: #{tpu_custom_call.1} parent=1 // pred_fallthru
      _
    // Predicated region
    $region26: #{tpu_custom_call.1} parent=1 // pred_check
      _
    $region27: #{tpu_custom_call.1} parent=1 // pred_check_branch
      %69 = sbr.rel (0) target = $region29
    $region28: #{tpu_custom_call.1} parent=1 // pred_region
      _
    $region29: #{tpu_custom_call.1} parent=1 // pred_fallthru
      _
    // Predicated region
    $region30: #{tpu_custom_call.1} parent=1 // pred_check
      _
    $region31: #{tpu_custom_call.1} parent=1 // pred_check_branch
      %71 = sbr.rel (0) target = $region33
    $region32: #{tpu_custom_call.1} parent=1 // pred_region
      _
    $region33: #{tpu_custom_call.1} parent=1 // pred_fallthru
      _
    // Predicated region
    $region34: #{tpu_custom_call.1} parent=1 // pred_check
      _
    $region35: #{tpu_custom_call.1} parent=1 // pred_check_branch
      %73 = sbr.rel (0) target = $region37
    $region36: #{tpu_custom_call.1} parent=1 // pred_region
      %74 = dma.done [#allocation5], 1024
    $region37: #{tpu_custom_call.1} parent=1 // pred_fallthru
      _
    // Predicated region
    $region38: #{tpu_custom_call.1} parent=1 // pred_check
      _
    $region39: #{tpu_custom_call.1} parent=1 // pred_check_branch
      %76 = sbr.rel (0) target = $region41
    $region40: #{tpu_custom_call.1} parent=1 // pred_region
      %77 = dma.done [#allocation7], 512
    $region41: #{tpu_custom_call.1} parent=1 // pred_fallthru
      _
    // Predicated region
    $region42: #{tpu_custom_call.1} parent=1 // pred_check
      _
    $region43: #{tpu_custom_call.1} parent=1 // pred_check_branch
      %79 = sbr.rel (0) target = $region45
    $region44: #{tpu_custom_call.1} parent=1 // pred_region
      %80 = dma.done [#allocation7], 8192
    $region45: #{tpu_custom_call.1} parent=1 // pred_fallthru
      _
    // Predicated region
    $region46: #{tpu_custom_call.1} parent=1 // pred_check
      _
    $region47: #{tpu_custom_call.1} parent=1 // pred_check_branch
      %82 = sbr.rel (0) target = $region49
    $region48: #{tpu_custom_call.1} parent=1 // pred_region
      %83 = dma.done [#allocation10], 2048
    $region49: #{tpu_custom_call.1} parent=1 // pred_fallthru
      _
    %v84 = vld [vmem:[#allocation6] sm:$0xff]
    %v85 = vld [vmem:[#allocation6 + $0x8] sm:$0xff]
    %v86 = vld [vmem:[#allocation6 + $0x10] sm:$0xff]
    %v87 = vld [vmem:[#allocation6 + $0x18] sm:$0xff]
    %v88 = vld [vmem:[%s3] sm:$0xf]
    %v89 = vld [vmem:[#allocation4] sm:$0x1]
    %v90 = vld [vmem:[#allocation4 + $0x8] sm:$0x1]
    %v91 = vld [vmem:[#allocation4 + $0x10] sm:$0x1]
    %v92 = vld [vmem:[#allocation4 + $0x18] sm:$0x1]
    %v93 = vld [vmem:[#allocation4 + $0x20] sm:$0x1]
    %v94 = vld [vmem:[#allocation4 + $0x28] sm:$0x1]
    %v95 = vld [vmem:[#allocation4 + $0x30] sm:$0x1]
    %v96 = vld [vmem:[#allocation4 + $0x38] sm:$0x1]
    %v98 = vlaneseq
    %v99 = vshrl.u32 %v98, 7
    %v100 = vsub.s32 0, %v99
    %v101 = vrot.slane %v88, %v100
    %v102 = vlaneseq
    %v103 = vshrl.u32 %v102, 7
    %v104 = vsub.s32 1, %v103
    %v105 = vrot.slane %v88, %v104
    %v106 = vlaneseq
    %v107 = vshrl.u32 %v106, 7
    %v108 = vsub.s32 2, %v107
    %v109 = vrot.slane %v88, %v108
    %v110 = vlaneseq
    %v111 = vshrl.u32 %v110, 7
    %v112 = vsub.s32 3, %v111
    %v113 = vrot.slane %v88, %v112
    %v126 = vrot.slane %v90, 7
    %vm127 = vcmask 1041409
    %v128 = vsel %vm127, %v126, %v89
    %v129 = vrot.slane %v91, 6
    %vm130 = vcmask 1042434
    %v131 = vsel %vm130, %v129, %v128
    %v132 = vrot.slane %v92, 5
    %vm133 = vcmask 1043459
    %v134 = vsel %vm133, %v132, %v131
    %v135 = vrot.slane %v93, 4
    %vm136 = vcmask 1044484
    %v137 = vsel %vm136, %v135, %v134
    %v138 = vrot.slane %v94, 3
    %vm139 = vcmask 1045509
    %v140 = vsel %vm139, %v138, %v137
    %v141 = vrot.slane %v95, 2
    %vm142 = vcmask 1046534
    %v143 = vsel %vm142, %v141, %v140
    %v144 = vrot.slane %v96, 1
    %vm145 = vcmask 1047559
    %v146 = vsel %vm145, %v144, %v143
    %vm147 = vcmask 64512
    %v148 = vsel %vm147, %v146, 0
    %150 = vmatprep.subr.mxu0 %v85
    %151 = vmatpush1.msra.mxu0 %v84
    %152 = vmatprep.subr.mxu0 0.0
    %153 = vmatpush1.msra.mxu0 0.0
    %154 = vmatprep.subr.mxu0 0.0
    %155 = vmatpush1.msra.mxu0 0.0
    %156 = vmatprep.subr.mxu0 0.0
    %157 = vmatpush1.msra.mxu0 0.0
    %158 = vmatprep.subr.mxu0 0.0
    %159 = vmatpush1.msra.mxu0 0.0
    %160 = vmatprep.subr.mxu0 0.0
    %161 = vmatpush1.msra.mxu0 0.0
    %162 = vmatprep.subr.mxu0 0.0
    %163 = vmatpush1.msra.mxu0 0.0
    %164 = vmatprep.subr.mxu0 0.0
    %165 = vmatpush1.msra.mxu0 0.0
    %166 = vmatprep.subr.mxu0 0.0
    %167 = vmatpush1.msra.mxu0 0.0
    %168 = vmatprep.subr.mxu0 0.0
    %169 = vmatpush1.msra.mxu0 0.0
    %170 = vmatprep.subr.mxu0 0.0
    %171 = vmatpush1.msra.mxu0 0.0
    %172 = vmatprep.subr.mxu0 0.0
    %173 = vmatpush1.msra.mxu0 0.0
    %174 = vmatprep.subr.mxu0 0.0
    %175 = vmatpush1.msra.mxu0 0.0
    %176 = vmatprep.subr.mxu0 0.0
    %177 = vmatpush1.msra.mxu0 0.0
    %178 = vmatprep.subr.mxu0 0.0
    %179 = vmatpush1.msra.mxu0 0.0
    %180 = vmatprep.subr.mxu0 0.0
    %181 = vmatpush1.msra.mxu0 0.0
    %182 = vmatprep.subr.mxu0 0.0
    %183 = vmatpush1.msra.mxu0 0.0
    %184 = vmatprep.subr.mxu0 0.0
    %185 = vmatpush1.msra.mxu0 0.0
    %186 = vmatprep.subr.mxu0 0.0
    %187 = vmatpush1.msra.mxu0 0.0
    %188 = vmatprep.subr.mxu0 0.0
    %189 = vmatpush1.msra.mxu0 0.0
    %190 = vmatprep.subr.mxu0 0.0
    %191 = vmatpush1.msra.mxu0 0.0
    %192 = vmatprep.subr.mxu0 0.0
    %193 = vmatpush1.msra.mxu0 0.0
    %194 = vmatprep.subr.mxu0 0.0
    %195 = vmatpush1.msra.mxu0 0.0
    %196 = vmatprep.subr.mxu0 0.0
    %197 = vmatpush1.msra.mxu0 0.0
    %198 = vmatprep.subr.mxu0 0.0
    %199 = vmatpush1.msra.mxu0 0.0
    %200 = vmatprep.subr.mxu0 0.0
    %201 = vmatpush1.msra.mxu0 0.0
    %202 = vmatprep.subr.mxu0 0.0
    %203 = vmatpush1.msra.mxu0 0.0
    %204 = vmatprep.subr.mxu0 0.0
    %205 = vmatpush1.msra.mxu0 0.0
    %206 = vmatprep.subr.mxu0 0.0
    %207 = vmatpush1.msra.mxu0 0.0
    %208 = vmatprep.subr.mxu0 0.0
    %209 = vmatpush1.msra.mxu0 0.0
    %210 = vmatprep.subr.mxu0 0.0
    %211 = vmatpush1.msra.mxu0 0.0
    %212 = vmatprep.subr.mxu0 0.0
    %213 = vmatpush1.msra.mxu0 0.0
    %214 = vmatprep.mubr.f32.mxu0 0.0
    %215 = vmatmul.mubr.f32.gmra.mrb[0].mxu0 %v148
    %v216 = vpop.f32.mrb[0].mxu0
    %v217 = vadd.f32 %v101, %v216
    %v218 = vpop.f32.mrb[0].mxu0
    %v219 = vadd.f32 %v105, %v218
    %220 = vdwg.mxu0
    %221 = vmatprep.subr.mxu0 %v87
    %222 = vmatpush1.msra.mxu0 %v86
    %223 = vmatprep.subr.mxu0 0.0
    %224 = vmatpush1.msra.mxu0 0.0
    %225 = vmatprep.subr.mxu0 0.0
    %226 = vmatpush1.msra.mxu0 0.0
    %227 = vmatprep.subr.mxu0 0.0
    %228 = vmatpush1.msra.mxu0 0.0
    %229 = vmatprep.subr.mxu0 0.0
    %230 = vmatpush1.msra.mxu0 0.0
    %231 = vmatprep.subr.mxu0 0.0
    %232 = vmatpush1.msra.mxu0 0.0
    %233 = vmatprep.subr.mxu0 0.0
    %234 = vmatpush1.msra.mxu0 0.0
    %235 = vmatprep.subr.mxu0 0.0
    %236 = vmatpush1.msra.mxu0 0.0
    %237 = vmatprep.subr.mxu0 0.0
    %238 = vmatpush1.msra.mxu0 0.0
    %239 = vmatprep.subr.mxu0 0.0
    %240 = vmatpush1.msra.mxu0 0.0
    %241 = vmatprep.subr.mxu0 0.0
    %242 = vmatpush1.msra.mxu0 0.0
    %243 = vmatprep.subr.mxu0 0.0
    %244 = vmatpush1.msra.mxu0 0.0
    %245 = vmatprep.subr.mxu0 0.0
    %246 = vmatpush1.msra.mxu0 0.0
    %247 = vmatprep.subr.mxu0 0.0
    %248 = vmatpush1.msra.mxu0 0.0
    %249 = vmatprep.subr.mxu0 0.0
    %250 = vmatpush1.msra.mxu0 0.0
    %251 = vmatprep.subr.mxu0 0.0
    %252 = vmatpush1.msra.mxu0 0.0
    %253 = vmatprep.subr.mxu0 0.0
    %254 = vmatpush1.msra.mxu0 0.0
    %255 = vmatprep.subr.mxu0 0.0
    %256 = vmatpush1.msra.mxu0 0.0
    %257 = vmatprep.subr.mxu0 0.0
    %258 = vmatpush1.msra.mxu0 0.0
    %259 = vmatprep.subr.mxu0 0.0
    %260 = vmatpush1.msra.mxu0 0.0
    %261 = vmatprep.subr.mxu0 0.0
    %262 = vmatpush1.msra.mxu0 0.0
    %263 = vmatprep.subr.mxu0 0.0
    %264 = vmatpush1.msra.mxu0 0.0
    %265 = vmatprep.subr.mxu0 0.0
    %266 = vmatpush1.msra.mxu0 0.0
    %267 = vmatprep.subr.mxu0 0.0
    %268 = vmatpush1.msra.mxu0 0.0
    %269 = vmatprep.subr.mxu0 0.0
    %270 = vmatpush1.msra.mxu0 0.0
    %271 = vmatprep.subr.mxu0 0.0
    %272 = vmatpush1.msra.mxu0 0.0
    %273 = vmatprep.subr.mxu0 0.0
    %274 = vmatpush1.msra.mxu0 0.0
    %275 = vmatprep.subr.mxu0 0.0
    %276 = vmatpush1.msra.mxu0 0.0
    %277 = vmatprep.subr.mxu0 0.0
    %278 = vmatpush1.msra.mxu0 0.0
    %279 = vmatprep.subr.mxu0 0.0
    %280 = vmatpush1.msra.mxu0 0.0
    %281 = vmatprep.subr.mxu0 0.0
    %282 = vmatpush1.msra.mxu0 0.0
    %283 = vmatprep.subr.mxu0 0.0
    %284 = vmatpush1.msra.mxu0 0.0
    %285 = vmatprep.mubr.f32.mxu0 0.0
    %286 = vmatmul.mubr.f32.gmra.mrb[0].mxu0 %v148
    %v287 = vpop.f32.mrb[0].mxu0
    %v288 = vadd.f32 %v109, %v287
    %v289 = vpop.f32.mrb[0].mxu0
    %v290 = vadd.f32 %v113, %v289
    %291 = vdwg.mxu0
    %292 = vst [vmem:[#allocation2] sm:$0xff] %v217
    %293 = vst [vmem:[#allocation2 + $0x8] sm:$0xff] %v219
    %294 = vst [vmem:[#allocation2 + $0x10] sm:$0xff] %v288
    %295 = vst [vmem:[#allocation2 + $0x18] sm:$0xff] %v290
    %v296 = vld [vmem:[#allocation4 + $0x1] sm:$0x1]
    %v297 = vld [vmem:[#allocation4 + $0x9] sm:$0x1]
    %v298 = vld [vmem:[#allocation4 + $0x11] sm:$0x1]
    %v299 = vld [vmem:[#allocation4 + $0x19] sm:$0x1]
    %v300 = vld [vmem:[#allocation4 + $0x21] sm:$0x1]
    %v301 = vld [vmem:[#allocation4 + $0x29] sm:$0x1]
    %v302 = vld [vmem:[#allocation4 + $0x31] sm:$0x1]
    %v303 = vld [vmem:[#allocation4 + $0x39] sm:$0x1]
    %v312 = vrot.slane %v297, 7
    %v313 = vsel %vm127, %v312, %v296
    %v314 = vrot.slane %v298, 6
    %v315 = vsel %vm130, %v314, %v313
    %v316 = vrot.slane %v299, 5
    %v317 = vsel %vm133, %v316, %v315
    %v318 = vrot.slane %v300, 4
    %v319 = vsel %vm136, %v318, %v317
    %v320 = vrot.slane %v301, 3
    %v321 = vsel %vm139, %v320, %v319
    %v322 = vrot.slane %v302, 2
    %v323 = vsel %vm142, %v322, %v321
    %v324 = vrot.slane %v303, 1
    %v325 = vsel %vm145, %v324, %v323
    %v326 = vsel %vm147, %v325, 0
    %328 = vmatprep.subr.mxu0 %v85
    %329 = vmatpush1.msra.mxu0 %v84
    %330 = vmatprep.subr.mxu0 0.0
    %331 = vmatpush1.msra.mxu0 0.0
    %332 = vmatprep.subr.mxu0 0.0
    %333 = vmatpush1.msra.mxu0 0.0
    %334 = vmatprep.subr.mxu0 0.0
    %335 = vmatpush1.msra.mxu0 0.0
    %336 = vmatprep.subr.mxu0 0.0
    %337 = vmatpush1.msra.mxu0 0.0
    %338 = vmatprep.subr.mxu0 0.0
    %339 = vmatpush1.msra.mxu0 0.0
    %340 = vmatprep.subr.mxu0 0.0
    %341 = vmatpush1.msra.mxu0 0.0
    %342 = vmatprep.subr.mxu0 0.0
    %343 = vmatpush1.msra.mxu0 0.0
    %344 = vmatprep.subr.mxu0 0.0
    %345 = vmatpush1.msra.mxu0 0.0
    %346 = vmatprep.subr.mxu0 0.0
    %347 = vmatpush1.msra.mxu0 0.0
    %348 = vmatprep.subr.mxu0 0.0
    %349 = vmatpush1.msra.mxu0 0.0
    %350 = vmatprep.subr.mxu0 0.0
    %351 = vmatpush1.msra.mxu0 0.0
    %352 = vmatprep.subr.mxu0 0.0
    %353 = vmatpush1.msra.mxu0 0.0
    %354 = vmatprep.subr.mxu0 0.0
    %355 = vmatpush1.msra.mxu0 0.0
    %356 = vmatprep.subr.mxu0 0.0
    %357 = vmatpush1.msra.mxu0 0.0
    %358 = vmatprep.subr.mxu0 0.0
    %359 = vmatpush1.msra.mxu0 0.0
    %360 = vmatprep.subr.mxu0 0.0
    %361 = vmatpush1.msra.mxu0 0.0
    %362 = vmatprep.subr.mxu0 0.0
    %363 = vmatpush1.msra.mxu0 0.0
    %364 = vmatprep.subr.mxu0 0.0
    %365 = vmatpush1.msra.mxu0 0.0
    %366 = vmatprep.subr.mxu0 0.0
    %367 = vmatpush1.msra.mxu0 0.0
    %368 = vmatprep.subr.mxu0 0.0
    %369 = vmatpush1.msra.mxu0 0.0
    %370 = vmatprep.subr.mxu0 0.0
    %371 = vmatpush1.msra.mxu0 0.0
    %372 = vmatprep.subr.mxu0 0.0
    %373 = vmatpush1.msra.mxu0 0.0
    %374 = vmatprep.subr.mxu0 0.0
    %375 = vmatpush1.msra.mxu0 0.0
    %376 = vmatprep.subr.mxu0 0.0
    %377 = vmatpush1.msra.mxu0 0.0
    %378 = vmatprep.subr.mxu0 0.0
    %379 = vmatpush1.msra.mxu0 0.0
    %380 = vmatprep.subr.mxu0 0.0
    %381 = vmatpush1.msra.mxu0 0.0
    %382 = vmatprep.subr.mxu0 0.0
    %383 = vmatpush1.msra.mxu0 0.0
    %384 = vmatprep.subr.mxu0 0.0
    %385 = vmatpush1.msra.mxu0 0.0
    %386 = vmatprep.subr.mxu0 0.0
    %387 = vmatpush1.msra.mxu0 0.0
    %388 = vmatprep.subr.mxu0 0.0
    %389 = vmatpush1.msra.mxu0 0.0
    %390 = vmatprep.subr.mxu0 0.0
    %391 = vmatpush1.msra.mxu0 0.0
    %392 = vmatprep.mubr.f32.mxu0 0.0
    %393 = vmatmul.mubr.f32.gmra.mrb[0].mxu0 %v326
    %v394 = vpop.f32.mrb[0].mxu0
    %v395 = vadd.f32 %v101, %v394
    %v396 = vpop.f32.mrb[0].mxu0
    %v397 = vadd.f32 %v105, %v396
    %398 = vdwg.mxu0
    %399 = vmatprep.subr.mxu0 %v87
    %400 = vmatpush1.msra.mxu0 %v86
    %401 = vmatprep.subr.mxu0 0.0
    %402 = vmatpush1.msra.mxu0 0.0
    %403 = vmatprep.subr.mxu0 0.0
    %404 = vmatpush1.msra.mxu0 0.0
    %405 = vmatprep.subr.mxu0 0.0
    %406 = vmatpush1.msra.mxu0 0.0
    %407 = vmatprep.subr.mxu0 0.0
    %408 = vmatpush1.msra.mxu0 0.0
    %409 = vmatprep.subr.mxu0 0.0
    %410 = vmatpush1.msra.mxu0 0.0
    %411 = vmatprep.subr.mxu0 0.0
    %412 = vmatpush1.msra.mxu0 0.0
    %413 = vmatprep.subr.mxu0 0.0
    %414 = vmatpush1.msra.mxu0 0.0
    %415 = vmatprep.subr.mxu0 0.0
    %416 = vmatpush1.msra.mxu0 0.0
    %417 = vmatprep.subr.mxu0 0.0
    %418 = vmatpush1.msra.mxu0 0.0
    %419 = vmatprep.subr.mxu0 0.0
    %420 = vmatpush1.msra.mxu0 0.0
    %421 = vmatprep.subr.mxu0 0.0
    %422 = vmatpush1.msra.mxu0 0.0
    %423 = vmatprep.subr.mxu0 0.0
    %424 = vmatpush1.msra.mxu0 0.0
    %425 = vmatprep.subr.mxu0 0.0
    %426 = vmatpush1.msra.mxu0 0.0
    %427 = vmatprep.subr.mxu0 0.0
    %428 = vmatpush1.msra.mxu0 0.0
    %429 = vmatprep.subr.mxu0 0.0
    %430 = vmatpush1.msra.mxu0 0.0
    %431 = vmatprep.subr.mxu0 0.0
    %432 = vmatpush1.msra.mxu0 0.0
    %433 = vmatprep.subr.mxu0 0.0
    %434 = vmatpush1.msra.mxu0 0.0
    %435 = vmatprep.subr.mxu0 0.0
    %436 = vmatpush1.msra.mxu0 0.0
    %437 = vmatprep.subr.mxu0 0.0
    %438 = vmatpush1.msra.mxu0 0.0
    %439 = vmatprep.subr.mxu0 0.0
    %440 = vmatpush1.msra.mxu0 0.0
    %441 = vmatprep.subr.mxu0 0.0
    %442 = vmatpush1.msra.mxu0 0.0
    %443 = vmatprep.subr.mxu0 0.0
    %444 = vmatpush1.msra.mxu0 0.0
    %445 = vmatprep.subr.mxu0 0.0
    %446 = vmatpush1.msra.mxu0 0.0
    %447 = vmatprep.subr.mxu0 0.0
    %448 = vmatpush1.msra.mxu0 0.0
    %449 = vmatprep.subr.mxu0 0.0
    %450 = vmatpush1.msra.mxu0 0.0
    %451 = vmatprep.subr.mxu0 0.0
    %452 = vmatpush1.msra.mxu0 0.0
    %453 = vmatprep.subr.mxu0 0.0
    %454 = vmatpush1.msra.mxu0 0.0
    %455 = vmatprep.subr.mxu0 0.0
    %456 = vmatpush1.msra.mxu0 0.0
    %457 = vmatprep.subr.mxu0 0.0
    %458 = vmatpush1.msra.mxu0 0.0
    %459 = vmatprep.subr.mxu0 0.0
    %460 = vmatpush1.msra.mxu0 0.0
    %461 = vmatprep.subr.mxu0 0.0
    %462 = vmatpush1.msra.mxu0 0.0
    %463 = vmatprep.mubr.f32.mxu0 0.0
    %464 = vmatmul.mubr.f32.gmra.mrb[0].mxu0 %v326
    %v465 = vpop.f32.mrb[0].mxu0
    %v466 = vadd.f32 %v109, %v465
    %v467 = vpop.f32.mrb[0].mxu0
    %v468 = vadd.f32 %v113, %v467
    %469 = vdwg.mxu0
    %s470 = scalar_lea.vmem [#allocation2], 32
    %471 = vst [vmem:[%s470] sm:$0xff] %v395
    %472 = vst [vmem:[%s470 + $0x8] sm:$0xff] %v397
    %473 = vst [vmem:[%s470 + $0x10] sm:$0xff] %v466
    %474 = vst [vmem:[%s470 + $0x18] sm:$0xff] %v468
    %v475 = vld [vmem:[#allocation4 + $0x2] sm:$0x1]
    %v476 = vld [vmem:[#allocation4 + $0xa] sm:$0x1]
    %v477 = vld [vmem:[#allocation4 + $0x12] sm:$0x1]
    %v478 = vld [vmem:[#allocation4 + $0x1a] sm:$0x1]
    %v479 = vld [vmem:[#allocation4 + $0x22] sm:$0x1]
    %v480 = vld [vmem:[#allocation4 + $0x2a] sm:$0x1]
    %v481 = vld [vmem:[#allocation4 + $0x32] sm:$0x1]
    %v482 = vld [vmem:[#allocation4 + $0x3a] sm:$0x1]
    %v491 = vrot.slane %v476, 7
    %v492 = vsel %vm127, %v491, %v475
    %v493 = vrot.slane %v477, 6
    %v494 = vsel %vm130, %v493, %v492
    %v495 = vrot.slane %v478, 5
    %v496 = vsel %vm133, %v495, %v494
    %v497 = vrot.slane %v479, 4
    %v498 = vsel %vm136, %v497, %v496
    %v499 = vrot.slane %v480, 3
    %v500 = vsel %vm139, %v499, %v498
    %v501 = vrot.slane %v481, 2
    %v502 = vsel %vm142, %v501, %v500
    %v503 = vrot.slane %v482, 1
    %v504 = vsel %vm145, %v503, %v502
    %v505 = vsel %vm147, %v504, 0
    %507 = vmatprep.subr.mxu0 %v85
    %508 = vmatpush1.msra.mxu0 %v84
    %509 = vmatprep.subr.mxu0 0.0
    %510 = vmatpush1.msra.mxu0 0.0
    %511 = vmatprep.subr.mxu0 0.0
    %512 = vmatpush1.msra.mxu0 0.0
    %513 = vmatprep.subr.mxu0 0.0
    %514 = vmatpush1.msra.mxu0 0.0
    %515 = vmatprep.subr.mxu0 0.0
    %516 = vmatpush1.msra.mxu0 0.0
    %517 = vmatprep.subr.mxu0 0.0
    %518 = vmatpush1.msra.mxu0 0.0
    %519 = vmatprep.subr.mxu0 0.0
    %520 = vmatpush1.msra.mxu0 0.0
    %521 = vmatprep.subr.mxu0 0.0
    %522 = vmatpush1.msra.mxu0 0.0
    %523 = vmatprep.subr.mxu0 0.0
    %524 = vmatpush1.msra.mxu0 0.0
    %525 = vmatprep.subr.mxu0 0.0
    %526 = vmatpush1.msra.mxu0 0.0
    %527 = vmatprep.subr.mxu0 0.0
    %528 = vmatpush1.msra.mxu0 0.0
    %529 = vmatprep.subr.mxu0 0.0
    %530 = vmatpush1.msra.mxu0 0.0
    %531 = vmatprep.subr.mxu0 0.0
    %532 = vmatpush1.msra.mxu0 0.0
    %533 = vmatprep.subr.mxu0 0.0
    %534 = vmatpush1.msra.mxu0 0.0
    %535 = vmatprep.subr.mxu0 0.0
    %536 = vmatpush1.msra.mxu0 0.0
    %537 = vmatprep.subr.mxu0 0.0
    %538 = vmatpush1.msra.mxu0 0.0
    %539 = vmatprep.subr.mxu0 0.0
    %540 = vmatpush1.msra.mxu0 0.0
    %541 = vmatprep.subr.mxu0 0.0
    %542 = vmatpush1.msra.mxu0 0.0
    %543 = vmatprep.subr.mxu0 0.0
    %544 = vmatpush1.msra.mxu0 0.0
    %545 = vmatprep.subr.mxu0 0.0
    %546 = vmatpush1.msra.mxu0 0.0
    %547 = vmatprep.subr.mxu0 0.0
    %548 = vmatpush1.msra.mxu0 0.0
    %549 = vmatprep.subr.mxu0 0.0
    %550 = vmatpush1.msra.mxu0 0.0
    %551 = vmatprep.subr.mxu0 0.0
    %552 = vmatpush1.msra.mxu0 0.0
    %553 = vmatprep.subr.mxu0 0.0
    %554 = vmatpush1.msra.mxu0 0.0
    %555 = vmatprep.subr.mxu0 0.0
    %556 = vmatpush1.msra.mxu0 0.0
    %557 = vmatprep.subr.mxu0 0.0
    %558 = vmatpush1.msra.mxu0 0.0
    %559 = vmatprep.subr.mxu0 0.0
    %560 = vmatpush1.msra.mxu0 0.0
    %561 = vmatprep.subr.mxu0 0.0
    %562 = vmatpush1.msra.mxu0 0.0
    %563 = vmatprep.subr.mxu0 0.0
    %564 = vmatpush1.msra.mxu0 0.0
    %565 = vmatprep.subr.mxu0 0.0
    %566 = vmatpush1.msra.mxu0 0.0
    %567 = vmatprep.subr.mxu0 0.0
    %568 = vmatpush1.msra.mxu0 0.0
    %569 = vmatprep.subr.mxu0 0.0
    %570 = vmatpush1.msra.mxu0 0.0
    %571 = vmatprep.mubr.f32.mxu0 0.0
    %572 = vmatmul.mubr.f32.gmra.mrb[0].mxu0 %v505
    %v573 = vpop.f32.mrb[0].mxu0
    %v574 = vadd.f32 %v101, %v573
    %v575 = vpop.f32.mrb[0].mxu0
    %v576 = vadd.f32 %v105, %v575
    %577 = vdwg.mxu0
    %578 = vmatprep.subr.mxu0 %v87
    %579 = vmatpush1.msra.mxu0 %v86
    %580 = vmatprep.subr.mxu0 0.0
    %581 = vmatpush1.msra.mxu0 0.0
    %582 = vmatprep.subr.mxu0 0.0
    %583 = vmatpush1.msra.mxu0 0.0
    %584 = vmatprep.subr.mxu0 0.0
    %585 = vmatpush1.msra.mxu0 0.0
    %586 = vmatprep.subr.mxu0 0.0
    %587 = vmatpush1.msra.mxu0 0.0
    %588 = vmatprep.subr.mxu0 0.0
    %589 = vmatpush1.msra.mxu0 0.0
    %590 = vmatprep.subr.mxu0 0.0
    %591 = vmatpush1.msra.mxu0 0.0
    %592 = vmatprep.subr.mxu0 0.0
    %593 = vmatpush1.msra.mxu0 0.0
    %594 = vmatprep.subr.mxu0 0.0
    %595 = vmatpush1.msra.mxu0 0.0
    %596 = vmatprep.subr.mxu0 0.0
    %597 = vmatpush1.msra.mxu0 0.0
    %598 = vmatprep.subr.mxu0 0.0
    %599 = vmatpush1.msra.mxu0 0.0
    %600 = vmatprep.subr.mxu0 0.0
    %601 = vmatpush1.msra.mxu0 0.0
    %602 = vmatprep.subr.mxu0 0.0
    %603 = vmatpush1.msra.mxu0 0.0
    %604 = vmatprep.subr.mxu0 0.0
    %605 = vmatpush1.msra.mxu0 0.0
    %606 = vmatprep.subr.mxu0 0.0
    %607 = vmatpush1.msra.mxu0 0.0
    %608 = vmatprep.subr.mxu0 0.0
    %609 = vmatpush1.msra.mxu0 0.0
    %610 = vmatprep.subr.mxu0 0.0
    %611 = vmatpush1.msra.mxu0 0.0
    %612 = vmatprep.subr.mxu0 0.0
    %613 = vmatpush1.msra.mxu0 0.0
    %614 = vmatprep.subr.mxu0 0.0
    %615 = vmatpush1.msra.mxu0 0.0
    %616 = vmatprep.subr.mxu0 0.0
    %617 = vmatpush1.msra.mxu0 0.0
    %618 = vmatprep.subr.mxu0 0.0
    %619 = vmatpush1.msra.mxu0 0.0
    %620 = vmatprep.subr.mxu0 0.0
    %621 = vmatpush1.msra.mxu0 0.0
    %622 = vmatprep.subr.mxu0 0.0
    %623 = vmatpush1.msra.mxu0 0.0
    %624 = vmatprep.subr.mxu0 0.0
    %625 = vmatpush1.msra.mxu0 0.0
    %626 = vmatprep.subr.mxu0 0.0
    %627 = vmatpush1.msra.mxu0 0.0
    %628 = vmatprep.subr.mxu0 0.0
    %629 = vmatpush1.msra.mxu0 0.0
    %630 = vmatprep.subr.mxu0 0.0
    %631 = vmatpush1.msra.mxu0 0.0
    %632 = vmatprep.subr.mxu0 0.0
    %633 = vmatpush1.msra.mxu0 0.0
    %634 = vmatprep.subr.mxu0 0.0
    %635 = vmatpush1.msra.mxu0 0.0
    %636 = vmatprep.subr.mxu0 0.0
    %637 = vmatpush1.msra.mxu0 0.0
    %638 = vmatprep.subr.mxu0 0.0
    %639 = vmatpush1.msra.mxu0 0.0
    %640 = vmatprep.subr.mxu0 0.0
    %641 = vmatpush1.msra.mxu0 0.0
    %642 = vmatprep.mubr.f32.mxu0 0.0
    %643 = vmatmul.mubr.f32.gmra.mrb[0].mxu0 %v505
    %v644 = vpop.f32.mrb[0].mxu0
    %v645 = vadd.f32 %v109, %v644
    %v646 = vpop.f32.mrb[0].mxu0
    %v647 = vadd.f32 %v113, %v646
    %648 = vdwg.mxu0
    %s649 = scalar_lea.vmem [#allocation2], 64
    %650 = vst [vmem:[%s649] sm:$0xff] %v574
    %651 = vst [vmem:[%s649 + $0x8] sm:$0xff] %v576
    %652 = vst [vmem:[%s649 + $0x10] sm:$0xff] %v645
    %653 = vst [vmem:[%s649 + $0x18] sm:$0xff] %v647
    %v654 = vld [vmem:[#allocation4 + $0x3] sm:$0x1]
    %v655 = vld [vmem:[#allocation4 + $0xb] sm:$0x1]
    %v656 = vld [vmem:[#allocation4 + $0x13] sm:$0x1]
    %v657 = vld [vmem:[#allocation4 + $0x1b] sm:$0x1]
    %v658 = vld [vmem:[#allocation4 + $0x23] sm:$0x1]
    %v659 = vld [vmem:[#allocation4 + $0x2b] sm:$0x1]
    %v660 = vld [vmem:[#allocation4 + $0x33] sm:$0x1]
    %v661 = vld [vmem:[#allocation4 + $0x3b] sm:$0x1]
    %v670 = vrot.slane %v655, 7
    %v671 = vsel %vm127, %v670, %v654
    %v672 = vrot.slane %v656, 6
    %v673 = vsel %vm130, %v672, %v671
    %v674 = vrot.slane %v657, 5
    %v675 = vsel %vm133, %v674, %v673
    %v676 = vrot.slane %v658, 4
    %v677 = vsel %vm136, %v676, %v675
    %v678 = vrot.slane %v659, 3
    %v679 = vsel %vm139, %v678, %v677
    %v680 = vrot.slane %v660, 2
    %v681 = vsel %vm142, %v680, %v679
    %v682 = vrot.slane %v661, 1
    %v683 = vsel %vm145, %v682, %v681
    %v684 = vsel %vm147, %v683, 0
    %686 = vmatprep.subr.mxu0 %v85
    %687 = vmatpush1.msra.mxu0 %v84
    %688 = vmatprep.subr.mxu0 0.0
    %689 = vmatpush1.msra.mxu0 0.0
    %690 = vmatprep.subr.mxu0 0.0
    %691 = vmatpush1.msra.mxu0 0.0
    %692 = vmatprep.subr.mxu0 0.0
    %693 = vmatpush1.msra.mxu0 0.0
    %694 = vmatprep.subr.mxu0 0.0
    %695 = vmatpush1.msra.mxu0 0.0
    %696 = vmatprep.subr.mxu0 0.0
    %697 = vmatpush1.msra.mxu0 0.0
    %698 = vmatprep.subr.mxu0 0.0
    %699 = vmatpush1.msra.mxu0 0.0
    %700 = vmatprep.subr.mxu0 0.0
    %701 = vmatpush1.msra.mxu0 0.0
    %702 = vmatprep.subr.mxu0 0.0
    %703 = vmatpush1.msra.mxu0 0.0
    %704 = vmatprep.subr.mxu0 0.0
    %705 = vmatpush1.msra.mxu0 0.0
    %706 = vmatprep.subr.mxu0 0.0
    %707 = vmatpush1.msra.mxu0 0.0
    %708 = vmatprep.subr.mxu0 0.0
    %709 = vmatpush1.msra.mxu0 0.0
    %710 = vmatprep.subr.mxu0 0.0
    %711 = vmatpush1.msra.mxu0 0.0
    %712 = vmatprep.subr.mxu0 0.0
    %713 = vmatpush1.msra.mxu0 0.0
    %714 = vmatprep.subr.mxu0 0.0
    %715 = vmatpush1.msra.mxu0 0.0
    %716 = vmatprep.subr.mxu0 0.0
    %717 = vmatpush1.msra.mxu0 0.0
    %718 = vmatprep.subr.mxu0 0.0
    %719 = vmatpush1.msra.mxu0 0.0
    %720 = vmatprep.subr.mxu0 0.0
    %721 = vmatpush1.msra.mxu0 0.0
    %722 = vmatprep.subr.mxu0 0.0
    %723 = vmatpush1.msra.mxu0 0.0
    %724 = vmatprep.subr.mxu0 0.0
    %725 = vmatpush1.msra.mxu0 0.0
    %726 = vmatprep.subr.mxu0 0.0
    %727 = vmatpush1.msra.mxu0 0.0
    %728 = vmatprep.subr.mxu0 0.0
    %729 = vmatpush1.msra.mxu0 0.0
    %730 = vmatprep.subr.mxu0 0.0
    %731 = vmatpush1.msra.mxu0 0.0
    %732 = vmatprep.subr.mxu0 0.0
    %733 = vmatpush1.msra.mxu0 0.0
    %734 = vmatprep.subr.mxu0 0.0
    %735 = vmatpush1.msra.mxu0 0.0
    %736 = vmatprep.subr.mxu0 0.0
    %737 = vmatpush1.msra.mxu0 0.0
    %738 = vmatprep.subr.mxu0 0.0
    %739 = vmatpush1.msra.mxu0 0.0
    %740 = vmatprep.subr.mxu0 0.0
    %741 = vmatpush1.msra.mxu0 0.0
    %742 = vmatprep.subr.mxu0 0.0
    %743 = vmatpush1.msra.mxu0 0.0
    %744 = vmatprep.subr.mxu0 0.0
    %745 = vmatpush1.msra.mxu0 0.0
    %746 = vmatprep.subr.mxu0 0.0
    %747 = vmatpush1.msra.mxu0 0.0
    %748 = vmatprep.subr.mxu0 0.0
    %749 = vmatpush1.msra.mxu0 0.0
    %750 = vmatprep.mubr.f32.mxu0 0.0
    %751 = vmatmul.mubr.f32.gmra.mrb[0].mxu0 %v684
    %v752 = vpop.f32.mrb[0].mxu0
    %v753 = vadd.f32 %v101, %v752
    %v754 = vpop.f32.mrb[0].mxu0
    %v755 = vadd.f32 %v105, %v754
    %756 = vdwg.mxu0
    %757 = vmatprep.subr.mxu0 %v87
    %758 = vmatpush1.msra.mxu0 %v86
    %759 = vmatprep.subr.mxu0 0.0
    %760 = vmatpush1.msra.mxu0 0.0
    %761 = vmatprep.subr.mxu0 0.0
    %762 = vmatpush1.msra.mxu0 0.0
    %763 = vmatprep.subr.mxu0 0.0
    %764 = vmatpush1.msra.mxu0 0.0
    %765 = vmatprep.subr.mxu0 0.0
    %766 = vmatpush1.msra.mxu0 0.0
    %767 = vmatprep.subr.mxu0 0.0
    %768 = vmatpush1.msra.mxu0 0.0
    %769 = vmatprep.subr.mxu0 0.0
    %770 = vmatpush1.msra.mxu0 0.0
    %771 = vmatprep.subr.mxu0 0.0
    %772 = vmatpush1.msra.mxu0 0.0
    %773 = vmatprep.subr.mxu0 0.0
    %774 = vmatpush1.msra.mxu0 0.0
    %775 = vmatprep.subr.mxu0 0.0
    %776 = vmatpush1.msra.mxu0 0.0
    %777 = vmatprep.subr.mxu0 0.0
    %778 = vmatpush1.msra.mxu0 0.0
    %779 = vmatprep.subr.mxu0 0.0
    %780 = vmatpush1.msra.mxu0 0.0
    %781 = vmatprep.subr.mxu0 0.0
    %782 = vmatpush1.msra.mxu0 0.0
    %783 = vmatprep.subr.mxu0 0.0
    %784 = vmatpush1.msra.mxu0 0.0
    %785 = vmatprep.subr.mxu0 0.0
    %786 = vmatpush1.msra.mxu0 0.0
    %787 = vmatprep.subr.mxu0 0.0
    %788 = vmatpush1.msra.mxu0 0.0
    %789 = vmatprep.subr.mxu0 0.0
    %790 = vmatpush1.msra.mxu0 0.0
    %791 = vmatprep.subr.mxu0 0.0
    %792 = vmatpush1.msra.mxu0 0.0
    %793 = vmatprep.subr.mxu0 0.0
    %794 = vmatpush1.msra.mxu0 0.0
    %795 = vmatprep.subr.mxu0 0.0
    %796 = vmatpush1.msra.mxu0 0.0
    %797 = vmatprep.subr.mxu0 0.0
    %798 = vmatpush1.msra.mxu0 0.0
    %799 = vmatprep.subr.mxu0 0.0
    %800 = vmatpush1.msra.mxu0 0.0
    %801 = vmatprep.subr.mxu0 0.0
    %802 = vmatpush1.msra.mxu0 0.0
    %803 = vmatprep.subr.mxu0 0.0
    %804 = vmatpush1.msra.mxu0 0.0
    %805 = vmatprep.subr.mxu0 0.0
    %806 = vmatpush1.msra.mxu0 0.0
    %807 = vmatprep.subr.mxu0 0.0
    %808 = vmatpush1.msra.mxu0 0.0
    %809 = vmatprep.subr.mxu0 0.0
    %810 = vmatpush1.msra.mxu0 0.0
    %811 = vmatprep.subr.mxu0 0.0
    %812 = vmatpush1.msra.mxu0 0.0
    %813 = vmatprep.subr.mxu0 0.0
    %814 = vmatpush1.msra.mxu0 0.0
    %815 = vmatprep.subr.mxu0 0.0
    %816 = vmatpush1.msra.mxu0 0.0
    %817 = vmatprep.subr.mxu0 0.0
    %818 = vmatpush1.msra.mxu0 0.0
    %819 = vmatprep.subr.mxu0 0.0
    %820 = vmatpush1.msra.mxu0 0.0
    %821 = vmatprep.mubr.f32.mxu0 0.0
    %822 = vmatmul.mubr.f32.gmra.mrb[0].mxu0 %v684
    %v823 = vpop.f32.mrb[0].mxu0
    %v824 = vadd.f32 %v109, %v823
    %v825 = vpop.f32.mrb[0].mxu0
    %v826 = vadd.f32 %v113, %v825
    %827 = vdwg.mxu0
    %s828 = scalar_lea.vmem [#allocation2], 96
    %829 = vst [vmem:[%s828] sm:$0xff] %v753
    %830 = vst [vmem:[%s828 + $0x8] sm:$0xff] %v755
    %831 = vst [vmem:[%s828 + $0x10] sm:$0xff] %v824
    %832 = vst [vmem:[%s828 + $0x18] sm:$0xff] %v826
    %v833 = vld [vmem:[#allocation4 + $0x4] sm:$0x1]
    %v834 = vld [vmem:[#allocation4 + $0xc] sm:$0x1]
    %v835 = vld [vmem:[#allocation4 + $0x14] sm:$0x1]
    %v836 = vld [vmem:[#allocation4 + $0x1c] sm:$0x1]
    %v837 = vld [vmem:[#allocation4 + $0x24] sm:$0x1]
    %v838 = vld [vmem:[#allocation4 + $0x2c] sm:$0x1]
    %v839 = vld [vmem:[#allocation4 + $0x34] sm:$0x1]
    %v840 = vld [vmem:[#allocation4 + $0x3c] sm:$0x1]
    %v849 = vrot.slane %v834, 7
    %v850 = vsel %vm127, %v849, %v833
    %v851 = vrot.slane %v835, 6
    %v852 = vsel %vm130, %v851, %v850
    %v853 = vrot.slane %v836, 5
    %v854 = vsel %vm133, %v853, %v852
    %v855 = vrot.slane %v837, 4
    %v856 = vsel %vm136, %v855, %v854
    %v857 = vrot.slane %v838, 3
    %v858 = vsel %vm139, %v857, %v856
    %v859 = vrot.slane %v839, 2
    %v860 = vsel %vm142, %v859, %v858
    %v861 = vrot.slane %v840, 1
    %v862 = vsel %vm145, %v861, %v860
    %v863 = vsel %vm147, %v862, 0
    %865 = vmatprep.subr.mxu0 %v85
    %866 = vmatpush1.msra.mxu0 %v84
    %867 = vmatprep.subr.mxu0 0.0
    %868 = vmatpush1.msra.mxu0 0.0
    %869 = vmatprep.subr.mxu0 0.0
    %870 = vmatpush1.msra.mxu0 0.0
    %871 = vmatprep.subr.mxu0 0.0
    %872 = vmatpush1.msra.mxu0 0.0
    %873 = vmatprep.subr.mxu0 0.0
    %874 = vmatpush1.msra.mxu0 0.0
    %875 = vmatprep.subr.mxu0 0.0
    %876 = vmatpush1.msra.mxu0 0.0
    %877 = vmatprep.subr.mxu0 0.0
    %878 = vmatpush1.msra.mxu0 0.0
    %879 = vmatprep.subr.mxu0 0.0
    %880 = vmatpush1.msra.mxu0 0.0
    %881 = vmatprep.subr.mxu0 0.0
    %882 = vmatpush1.msra.mxu0 0.0
    %883 = vmatprep.subr.mxu0 0.0
    %884 = vmatpush1.msra.mxu0 0.0
    %885 = vmatprep.subr.mxu0 0.0
    %886 = vmatpush1.msra.mxu0 0.0
    %887 = vmatprep.subr.mxu0 0.0
    %888 = vmatpush1.msra.mxu0 0.0
    %889 = vmatprep.subr.mxu0 0.0
    %890 = vmatpush1.msra.mxu0 0.0
    %891 = vmatprep.subr.mxu0 0.0
    %892 = vmatpush1.msra.mxu0 0.0
    %893 = vmatprep.subr.mxu0 0.0
    %894 = vmatpush1.msra.mxu0 0.0
    %895 = vmatprep.subr.mxu0 0.0
    %896 = vmatpush1.msra.mxu0 0.0
    %897 = vmatprep.subr.mxu0 0.0
    %898 = vmatpush1.msra.mxu0 0.0
    %899 = vmatprep.subr.mxu0 0.0
    %900 = vmatpush1.msra.mxu0 0.0
    %901 = vmatprep.subr.mxu0 0.0
    %902 = vmatpush1.msra.mxu0 0.0
    %903 = vmatprep.subr.mxu0 0.0
    %904 = vmatpush1.msra.mxu0 0.0
    %905 = vmatprep.subr.mxu0 0.0
    %906 = vmatpush1.msra.mxu0 0.0
    %907 = vmatprep.subr.mxu0 0.0
    %908 = vmatpush1.msra.mxu0 0.0
    %909 = vmatprep.subr.mxu0 0.0
    %910 = vmatpush1.msra.mxu0 0.0
    %911 = vmatprep.subr.mxu0 0.0
    %912 = vmatpush1.msra.mxu0 0.0
    %913 = vmatprep.subr.mxu0 0.0
    %914 = vmatpush1.msra.mxu0 0.0
    %915 = vmatprep.subr.mxu0 0.0
    %916 = vmatpush1.msra.mxu0 0.0
    %917 = vmatprep.subr.mxu0 0.0
    %918 = vmatpush1.msra.mxu0 0.0
    %919 = vmatprep.subr.mxu0 0.0
    %920 = vmatpush1.msra.mxu0 0.0
    %921 = vmatprep.subr.mxu0 0.0
    %922 = vmatpush1.msra.mxu0 0.0
    %923 = vmatprep.subr.mxu0 0.0
    %924 = vmatpush1.msra.mxu0 0.0
    %925 = vmatprep.subr.mxu0 0.0
    %926 = vmatpush1.msra.mxu0 0.0
    %927 = vmatprep.subr.mxu0 0.0
    %928 = vmatpush1.msra.mxu0 0.0
    %929 = vmatprep.mubr.f32.mxu0 0.0
    %930 = vmatmul.mubr.f32.gmra.mrb[0].mxu0 %v863
    %v931 = vpop.f32.mrb[0].mxu0
    %v932 = vadd.f32 %v101, %v931
    %v933 = vpop.f32.mrb[0].mxu0
    %v934 = vadd.f32 %v105, %v933
    %935 = vdwg.mxu0
    %936 = vmatprep.subr.mxu0 %v87
    %937 = vmatpush1.msra.mxu0 %v86
    %938 = vmatprep.subr.mxu0 0.0
    %939 = vmatpush1.msra.mxu0 0.0
    %940 = vmatprep.subr.mxu0 0.0
    %941 = vmatpush1.msra.mxu0 0.0
    %942 = vmatprep.subr.mxu0 0.0
    %943 = vmatpush1.msra.mxu0 0.0
    %944 = vmatprep.subr.mxu0 0.0
    %945 = vmatpush1.msra.mxu0 0.0
    %946 = vmatprep.subr.mxu0 0.0
    %947 = vmatpush1.msra.mxu0 0.0
    %948 = vmatprep.subr.mxu0 0.0
    %949 = vmatpush1.msra.mxu0 0.0
    %950 = vmatprep.subr.mxu0 0.0
    %951 = vmatpush1.msra.mxu0 0.0
    %952 = vmatprep.subr.mxu0 0.0
    %953 = vmatpush1.msra.mxu0 0.0
    %954 = vmatprep.subr.mxu0 0.0
    %955 = vmatpush1.msra.mxu0 0.0
    %956 = vmatprep.subr.mxu0 0.0
    %957 = vmatpush1.msra.mxu0 0.0
    %958 = vmatprep.subr.mxu0 0.0
    %959 = vmatpush1.msra.mxu0 0.0
    %960 = vmatprep.subr.mxu0 0.0
    %961 = vmatpush1.msra.mxu0 0.0
    %962 = vmatprep.subr.mxu0 0.0
    %963 = vmatpush1.msra.mxu0 0.0
    %964 = vmatprep.subr.mxu0 0.0
    %965 = vmatpush1.msra.mxu0 0.0
    %966 = vmatprep.subr.mxu0 0.0
    %967 = vmatpush1.msra.mxu0 0.0
    %968 = vmatprep.subr.mxu0 0.0
    %969 = vmatpush1.msra.mxu0 0.0
    %970 = vmatprep.subr.mxu0 0.0
    %971 = vmatpush1.msra.mxu0 0.0
    %972 = vmatprep.subr.mxu0 0.0
    %973 = vmatpush1.msra.mxu0 0.0
    %974 = vmatprep.subr.mxu0 0.0
    %975 = vmatpush1.msra.mxu0 0.0
    %976 = vmatprep.subr.mxu0 0.0
    %977 = vmatpush1.msra.mxu0 0.0
    %978 = vmatprep.subr.mxu0 0.0
    %979 = vmatpush1.msra.mxu0 0.0
    %980 = vmatprep.subr.mxu0 0.0
    %981 = vmatpush1.msra.mxu0 0.0
    %982 = vmatprep.subr.mxu0 0.0
    %983 = vmatpush1.msra.mxu0 0.0
    %984 = vmatprep.subr.mxu0 0.0
    %985 = vmatpush1.msra.mxu0 0.0
    %986 = vmatprep.subr.mxu0 0.0
    %987 = vmatpush1.msra.mxu0 0.0
    %988 = vmatprep.subr.mxu0 0.0
    %989 = vmatpush1.msra.mxu0 0.0
    %990 = vmatprep.subr.mxu0 0.0
    %991 = vmatpush1.msra.mxu0 0.0
    %992 = vmatprep.subr.mxu0 0.0
    %993 = vmatpush1.msra.mxu0 0.0
    %994 = vmatprep.subr.mxu0 0.0
    %995 = vmatpush1.msra.mxu0 0.0
    %996 = vmatprep.subr.mxu0 0.0
    %997 = vmatpush1.msra.mxu0 0.0
    %998 = vmatprep.subr.mxu0 0.0
    %999 = vmatpush1.msra.mxu0 0.0
    %1000 = vmatprep.mubr.f32.mxu0 0.0
    %1001 = vmatmul.mubr.f32.gmra.mrb[0].mxu0 %v863
    %v1002 = vpop.f32.mrb[0].mxu0
    %v1003 = vadd.f32 %v109, %v1002
    %v1004 = vpop.f32.mrb[0].mxu0
    %v1005 = vadd.f32 %v113, %v1004
    %1006 = vdwg.mxu0
    %s1007 = scalar_lea.vmem [#allocation2], 128
    %1008 = vst [vmem:[%s1007] sm:$0xff] %v932
    %1009 = vst [vmem:[%s1007 + $0x8] sm:$0xff] %v934
    %1010 = vst [vmem:[%s1007 + $0x10] sm:$0xff] %v1003
    %1011 = vst [vmem:[%s1007 + $0x18] sm:$0xff] %v1005
    %v1012 = vld [vmem:[#allocation4 + $0x5] sm:$0x1]
    %v1013 = vld [vmem:[#allocation4 + $0xd] sm:$0x1]
    %v1014 = vld [vmem:[#allocation4 + $0x15] sm:$0x1]
    %v1015 = vld [vmem:[#allocation4 + $0x1d] sm:$0x1]
    %v1016 = vld [vmem:[#allocation4 + $0x25] sm:$0x1]
    %v1017 = vld [vmem:[#allocation4 + $0x2d] sm:$0x1]
    %v1018 = vld [vmem:[#allocation4 + $0x35] sm:$0x1]
    %v1019 = vld [vmem:[#allocation4 + $0x3d] sm:$0x1]
    %v1028 = vrot.slane %v1013, 7
    %v1029 = vsel %vm127, %v1028, %v1012
    %v1030 = vrot.slane %v1014, 6
    %v1031 = vsel %vm130, %v1030, %v1029
    %v1032 = vrot.slane %v1015, 5
    %v1033 = vsel %vm133, %v1032, %v1031
    %v1034 = vrot.slane %v1016, 4
    %v1035 = vsel %vm136, %v1034, %v1033
    %v1036 = vrot.slane %v1017, 3
    %v1037 = vsel %vm139, %v1036, %v1035
    %v1038 = vrot.slane %v1018, 2
    %v1039 = vsel %vm142, %v1038, %v1037
    %v1040 = vrot.slane %v1019, 1
    %v1041 = vsel %vm145, %v1040, %v1039
    %v1042 = vsel %vm147, %v1041, 0
    %1044 = vmatprep.subr.mxu0 %v85
    %1045 = vmatpush1.msra.mxu0 %v84
    %1046 = vmatprep.subr.mxu0 0.0
    %1047 = vmatpush1.msra.mxu0 0.0
    %1048 = vmatprep.subr.mxu0 0.0
    %1049 = vmatpush1.msra.mxu0 0.0
    %1050 = vmatprep.subr.mxu0 0.0
    %1051 = vmatpush1.msra.mxu0 0.0
    %1052 = vmatprep.subr.mxu0 0.0
    %1053 = vmatpush1.msra.mxu0 0.0
    %1054 = vmatprep.subr.mxu0 0.0
    %1055 = vmatpush1.msra.mxu0 0.0
    %1056 = vmatprep.subr.mxu0 0.0
    %1057 = vmatpush1.msra.mxu0 0.0
    %1058 = vmatprep.subr.mxu0 0.0
    %1059 = vmatpush1.msra.mxu0 0.0
    %1060 = vmatprep.subr.mxu0 0.0
    %1061 = vmatpush1.msra.mxu0 0.0
    %1062 = vmatprep.subr.mxu0 0.0
    %1063 = vmatpush1.msra.mxu0 0.0
    %1064 = vmatprep.subr.mxu0 0.0
    %1065 = vmatpush1.msra.mxu0 0.0
    %1066 = vmatprep.subr.mxu0 0.0
    %1067 = vmatpush1.msra.mxu0 0.0
    %1068 = vmatprep.subr.mxu0 0.0
    %1069 = vmatpush1.msra.mxu0 0.0
    %1070 = vmatprep.subr.mxu0 0.0
    %1071 = vmatpush1.msra.mxu0 0.0
    %1072 = vmatprep.subr.mxu0 0.0
    %1073 = vmatpush1.msra.mxu0 0.0
    %1074 = vmatprep.subr.mxu0 0.0
    %1075 = vmatpush1.msra.mxu0 0.0
    %1076 = vmatprep.subr.mxu0 0.0
    %1077 = vmatpush1.msra.mxu0 0.0
    %1078 = vmatprep.subr.mxu0 0.0
    %1079 = vmatpush1.msra.mxu0 0.0
    %1080 = vmatprep.subr.mxu0 0.0
    %1081 = vmatpush1.msra.mxu0 0.0
    %1082 = vmatprep.subr.mxu0 0.0
    %1083 = vmatpush1.msra.mxu0 0.0
    %1084 = vmatprep.subr.mxu0 0.0
    %1085 = vmatpush1.msra.mxu0 0.0
    %1086 = vmatprep.subr.mxu0 0.0
    %1087 = vmatpush1.msra.mxu0 0.0
    %1088 = vmatprep.subr.mxu0 0.0
    %1089 = vmatpush1.msra.mxu0 0.0
    %1090 = vmatprep.subr.mxu0 0.0
    %1091 = vmatpush1.msra.mxu0 0.0
    %1092 = vmatprep.subr.mxu0 0.0
    %1093 = vmatpush1.msra.mxu0 0.0
    %1094 = vmatprep.subr.mxu0 0.0
    %1095 = vmatpush1.msra.mxu0 0.0
    %1096 = vmatprep.subr.mxu0 0.0
    %1097 = vmatpush1.msra.mxu0 0.0
    %1098 = vmatprep.subr.mxu0 0.0
    %1099 = vmatpush1.msra.mxu0 0.0
    %1100 = vmatprep.subr.mxu0 0.0
    %1101 = vmatpush1.msra.mxu0 0.0
    %1102 = vmatprep.subr.mxu0 0.0
    %1103 = vmatpush1.msra.mxu0 0.0
    %1104 = vmatprep.subr.mxu0 0.0
    %1105 = vmatpush1.msra.mxu0 0.0
    %1106 = vmatprep.subr.mxu0 0.0
    %1107 = vmatpush1.msra.mxu0 0.0
    %1108 = vmatprep.mubr.f32.mxu0 0.0
    %1109 = vmatmul.mubr.f32.gmra.mrb[0].mxu0 %v1042
    %v1110 = vpop.f32.mrb[0].mxu0
    %v1111 = vadd.f32 %v101, %v1110
    %v1112 = vpop.f32.mrb[0].mxu0
    %v1113 = vadd.f32 %v105, %v1112
    %1114 = vdwg.mxu0
    %1115 = vmatprep.subr.mxu0 %v87
    %1116 = vmatpush1.msra.mxu0 %v86
    %1117 = vmatprep.subr.mxu0 0.0
    %1118 = vmatpush1.msra.mxu0 0.0
    %1119 = vmatprep.subr.mxu0 0.0
    %1120 = vmatpush1.msra.mxu0 0.0
    %1121 = vmatprep.subr.mxu0 0.0
    %1122 = vmatpush1.msra.mxu0 0.0
    %1123 = vmatprep.subr.mxu0 0.0
    %1124 = vmatpush1.msra.mxu0 0.0
    %1125 = vmatprep.subr.mxu0 0.0
    %1126 = vmatpush1.msra.mxu0 0.0
    %1127 = vmatprep.subr.mxu0 0.0
    %1128 = vmatpush1.msra.mxu0 0.0
    %1129 = vmatprep.subr.mxu0 0.0
    %1130 = vmatpush1.msra.mxu0 0.0
    %1131 = vmatprep.subr.mxu0 0.0
    %1132 = vmatpush1.msra.mxu0 0.0
    %1133 = vmatprep.subr.mxu0 0.0
    %1134 = vmatpush1.msra.mxu0 0.0
    %1135 = vmatprep.subr.mxu0 0.0
    %1136 = vmatpush1.msra.mxu0 0.0
    %1137 = vmatprep.subr.mxu0 0.0
    %1138 = vmatpush1.msra.mxu0 0.0
    %1139 = vmatprep.subr.mxu0 0.0
    %1140 = vmatpush1.msra.mxu0 0.0
    %1141 = vmatprep.subr.mxu0 0.0
    %1142 = vmatpush1.msra.mxu0 0.0
    %1143 = vmatprep.subr.mxu0 0.0
    %1144 = vmatpush1.msra.mxu0 0.0
    %1145 = vmatprep.subr.mxu0 0.0
    %1146 = vmatpush1.msra.mxu0 0.0
    %1147 = vmatprep.subr.mxu0 0.0
    %1148 = vmatpush1.msra.mxu0 0.0
    %1149 = vmatprep.subr.mxu0 0.0
    %1150 = vmatpush1.msra.mxu0 0.0
    %1151 = vmatprep.subr.mxu0 0.0
    %1152 = vmatpush1.msra.mxu0 0.0
    %1153 = vmatprep.subr.mxu0 0.0
    %1154 = vmatpush1.msra.mxu0 0.0
    %1155 = vmatprep.subr.mxu0 0.0
    %1156 = vmatpush1.msra.mxu0 0.0
    %1157 = vmatprep.subr.mxu0 0.0
    %1158 = vmatpush1.msra.mxu0 0.0
    %1159 = vmatprep.subr.mxu0 0.0
    %1160 = vmatpush1.msra.mxu0 0.0
    %1161 = vmatprep.subr.mxu0 0.0
    %1162 = vmatpush1.msra.mxu0 0.0
    %1163 = vmatprep.subr.mxu0 0.0
    %1164 = vmatpush1.msra.mxu0 0.0
    %1165 = vmatprep.subr.mxu0 0.0
    %1166 = vmatpush1.msra.mxu0 0.0
    %1167 = vmatprep.subr.mxu0 0.0
    %1168 = vmatpush1.msra.mxu0 0.0
    %1169 = vmatprep.subr.mxu0 0.0
    %1170 = vmatpush1.msra.mxu0 0.0
    %1171 = vmatprep.subr.mxu0 0.0
    %1172 = vmatpush1.msra.mxu0 0.0
    %1173 = vmatprep.subr.mxu0 0.0
    %1174 = vmatpush1.msra.mxu0 0.0
    %1175 = vmatprep.subr.mxu0 0.0
    %1176 = vmatpush1.msra.mxu0 0.0
    %1177 = vmatprep.subr.mxu0 0.0
    %1178 = vmatpush1.msra.mxu0 0.0
    %1179 = vmatprep.mubr.f32.mxu0 0.0
    %1180 = vmatmul.mubr.f32.gmra.mrb[0].mxu0 %v1042
    %v1181 = vpop.f32.mrb[0].mxu0
    %v1182 = vadd.f32 %v109, %v1181
    %v1183 = vpop.f32.mrb[0].mxu0
    %v1184 = vadd.f32 %v113, %v1183
    %1185 = vdwg.mxu0
    %s1186 = scalar_lea.vmem [#allocation2], 160
    %1187 = vst [vmem:[%s1186] sm:$0xff] %v1111
    %1188 = vst [vmem:[%s1186 + $0x8] sm:$0xff] %v1113
    %1189 = vst [vmem:[%s1186 + $0x10] sm:$0xff] %v1182
    %1190 = vst [vmem:[%s1186 + $0x18] sm:$0xff] %v1184
    %v1191 = vld [vmem:[#allocation4 + $0x6] sm:$0x1]
    %v1192 = vld [vmem:[#allocation4 + $0xe] sm:$0x1]
    %v1193 = vld [vmem:[#allocation4 + $0x16] sm:$0x1]
    %v1194 = vld [vmem:[#allocation4 + $0x1e] sm:$0x1]
    %v1195 = vld [vmem:[#allocation4 + $0x26] sm:$0x1]
    %v1196 = vld [vmem:[#allocation4 + $0x2e] sm:$0x1]
    %v1197 = vld [vmem:[#allocation4 + $0x36] sm:$0x1]
    %v1198 = vld [vmem:[#allocation4 + $0x3e] sm:$0x1]
    %v1207 = vrot.slane %v1192, 7
    %v1208 = vsel %vm127, %v1207, %v1191
    %v1209 = vrot.slane %v1193, 6
    %v1210 = vsel %vm130, %v1209, %v1208
    %v1211 = vrot.slane %v1194, 5
    %v1212 = vsel %vm133, %v1211, %v1210
    %v1213 = vrot.slane %v1195, 4
    %v1214 = vsel %vm136, %v1213, %v1212
    %v1215 = vrot.slane %v1196, 3
    %v1216 = vsel %vm139, %v1215, %v1214
    %v1217 = vrot.slane %v1197, 2
    %v1218 = vsel %vm142, %v1217, %v1216
    %v1219 = vrot.slane %v1198, 1
    %v1220 = vsel %vm145, %v1219, %v1218
    %v1221 = vsel %vm147, %v1220, 0
    %1223 = vmatprep.subr.mxu0 %v85
    %1224 = vmatpush1.msra.mxu0 %v84
    %1225 = vmatprep.subr.mxu0 0.0
    %1226 = vmatpush1.msra.mxu0 0.0
    %1227 = vmatprep.subr.mxu0 0.0
    %1228 = vmatpush1.msra.mxu0 0.0
    %1229 = vmatprep.subr.mxu0 0.0
    %1230 = vmatpush1.msra.mxu0 0.0
    %1231 = vmatprep.subr.mxu0 0.0
    %1232 = vmatpush1.msra.mxu0 0.0
    %1233 = vmatprep.subr.mxu0 0.0
    %1234 = vmatpush1.msra.mxu0 0.0
    %1235 = vmatprep.subr.mxu0 0.0
    %1236 = vmatpush1.msra.mxu0 0.0
    %1237 = vmatprep.subr.mxu0 0.0
    %1238 = vmatpush1.msra.mxu0 0.0
    %1239 = vmatprep.subr.mxu0 0.0
    %1240 = vmatpush1.msra.mxu0 0.0
    %1241 = vmatprep.subr.mxu0 0.0
    %1242 = vmatpush1.msra.mxu0 0.0
    %1243 = vmatprep.subr.mxu0 0.0
    %1244 = vmatpush1.msra.mxu0 0.0
    %1245 = vmatprep.subr.mxu0 0.0
    %1246 = vmatpush1.msra.mxu0 0.0
    %1247 = vmatprep.subr.mxu0 0.0
    %1248 = vmatpush1.msra.mxu0 0.0
    %1249 = vmatprep.subr.mxu0 0.0
    %1250 = vmatpush1.msra.mxu0 0.0
    %1251 = vmatprep.subr.mxu0 0.0
    %1252 = vmatpush1.msra.mxu0 0.0
    %1253 = vmatprep.subr.mxu0 0.0
    %1254 = vmatpush1.msra.mxu0 0.0
    %1255 = vmatprep.subr.mxu0 0.0
    %1256 = vmatpush1.msra.mxu0 0.0
    %1257 = vmatprep.subr.mxu0 0.0
    %1258 = vmatpush1.msra.mxu0 0.0
    %1259 = vmatprep.subr.mxu0 0.0
    %1260 = vmatpush1.msra.mxu0 0.0
    %1261 = vmatprep.subr.mxu0 0.0
    %1262 = vmatpush1.msra.mxu0 0.0
    %1263 = vmatprep.subr.mxu0 0.0
    %1264 = vmatpush1.msra.mxu0 0.0
    %1265 = vmatprep.subr.mxu0 0.0
    %1266 = vmatpush1.msra.mxu0 0.0
    %1267 = vmatprep.subr.mxu0 0.0
    %1268 = vmatpush1.msra.mxu0 0.0
    %1269 = vmatprep.subr.mxu0 0.0
    %1270 = vmatpush1.msra.mxu0 0.0
    %1271 = vmatprep.subr.mxu0 0.0
    %1272 = vmatpush1.msra.mxu0 0.0
    %1273 = vmatprep.subr.mxu0 0.0
    %1274 = vmatpush1.msra.mxu0 0.0
    %1275 = vmatprep.subr.mxu0 0.0
    %1276 = vmatpush1.msra.mxu0 0.0
    %1277 = vmatprep.subr.mxu0 0.0
    %1278 = vmatpush1.msra.mxu0 0.0
    %1279 = vmatprep.subr.mxu0 0.0
    %1280 = vmatpush1.msra.mxu0 0.0
    %1281 = vmatprep.subr.mxu0 0.0
    %1282 = vmatpush1.msra.mxu0 0.0
    %1283 = vmatprep.subr.mxu0 0.0
    %1284 = vmatpush1.msra.mxu0 0.0
    %1285 = vmatprep.subr.mxu0 0.0
    %1286 = vmatpush1.msra.mxu0 0.0
    %1287 = vmatprep.mubr.f32.mxu0 0.0
    %1288 = vmatmul.mubr.f32.gmra.mrb[0].mxu0 %v1221
    %v1289 = vpop.f32.mrb[0].mxu0
    %v1290 = vadd.f32 %v101, %v1289
    %v1291 = vpop.f32.mrb[0].mxu0
    %v1292 = vadd.f32 %v105, %v1291
    %1293 = vdwg.mxu0
    %1294 = vmatprep.subr.mxu0 %v87
    %1295 = vmatpush1.msra.mxu0 %v86
    %1296 = vmatprep.subr.mxu0 0.0
    %1297 = vmatpush1.msra.mxu0 0.0
    %1298 = vmatprep.subr.mxu0 0.0
    %1299 = vmatpush1.msra.mxu0 0.0
    %1300 = vmatprep.subr.mxu0 0.0
    %1301 = vmatpush1.msra.mxu0 0.0
    %1302 = vmatprep.subr.mxu0 0.0
    %1303 = vmatpush1.msra.mxu0 0.0
    %1304 = vmatprep.subr.mxu0 0.0
    %1305 = vmatpush1.msra.mxu0 0.0
    %1306 = vmatprep.subr.mxu0 0.0
    %1307 = vmatpush1.msra.mxu0 0.0
    %1308 = vmatprep.subr.mxu0 0.0
    %1309 = vmatpush1.msra.mxu0 0.0
    %1310 = vmatprep.subr.mxu0 0.0
    %1311 = vmatpush1.msra.mxu0 0.0
    %1312 = vmatprep.subr.mxu0 0.0
    %1313 = vmatpush1.msra.mxu0 0.0
    %1314 = vmatprep.subr.mxu0 0.0
    %1315 = vmatpush1.msra.mxu0 0.0
    %1316 = vmatprep.subr.mxu0 0.0
    %1317 = vmatpush1.msra.mxu0 0.0
    %1318 = vmatprep.subr.mxu0 0.0
    %1319 = vmatpush1.msra.mxu0 0.0
    %1320 = vmatprep.subr.mxu0 0.0
    %1321 = vmatpush1.msra.mxu0 0.0
    %1322 = vmatprep.subr.mxu0 0.0
    %1323 = vmatpush1.msra.mxu0 0.0
    %1324 = vmatprep.subr.mxu0 0.0
    %1325 = vmatpush1.msra.mxu0 0.0
    %1326 = vmatprep.subr.mxu0 0.0
    %1327 = vmatpush1.msra.mxu0 0.0
    %1328 = vmatprep.subr.mxu0 0.0
    %1329 = vmatpush1.msra.mxu0 0.0
    %1330 = vmatprep.subr.mxu0 0.0
    %1331 = vmatpush1.msra.mxu0 0.0
    %1332 = vmatprep.subr.mxu0 0.0
    %1333 = vmatpush1.msra.mxu0 0.0
    %1334 = vmatprep.subr.mxu0 0.0
    %1335 = vmatpush1.msra.mxu0 0.0
    %1336 = vmatprep.subr.mxu0 0.0
    %1337 = vmatpush1.msra.mxu0 0.0
    %1338 = vmatprep.subr.mxu0 0.0
    %1339 = vmatpush1.msra.mxu0 0.0
    %1340 = vmatprep.subr.mxu0 0.0
    %1341 = vmatpush1.msra.mxu0 0.0
    %1342 = vmatprep.subr.mxu0 0.0
    %1343 = vmatpush1.msra.mxu0 0.0
    %1344 = vmatprep.subr.mxu0 0.0
    %1345 = vmatpush1.msra.mxu0 0.0
    %1346 = vmatprep.subr.mxu0 0.0
    %1347 = vmatpush1.msra.mxu0 0.0
    %1348 = vmatprep.subr.mxu0 0.0
    %1349 = vmatpush1.msra.mxu0 0.0
    %1350 = vmatprep.subr.mxu0 0.0
    %1351 = vmatpush1.msra.mxu0 0.0
    %1352 = vmatprep.subr.mxu0 0.0
    %1353 = vmatpush1.msra.mxu0 0.0
    %1354 = vmatprep.subr.mxu0 0.0
    %1355 = vmatpush1.msra.mxu0 0.0
    %1356 = vmatprep.subr.mxu0 0.0
    %1357 = vmatpush1.msra.mxu0 0.0
    %1358 = vmatprep.mubr.f32.mxu0 0.0
    %1359 = vmatmul.mubr.f32.gmra.mrb[0].mxu0 %v1221
    %v1360 = vpop.f32.mrb[0].mxu0
    %v1361 = vadd.f32 %v109, %v1360
    %v1362 = vpop.f32.mrb[0].mxu0
    %v1363 = vadd.f32 %v113, %v1362
    %1364 = vdwg.mxu0
    %s1365 = scalar_lea.vmem [#allocation2], 192
    %1366 = vst [vmem:[%s1365] sm:$0xff] %v1290
    %1367 = vst [vmem:[%s1365 + $0x8] sm:$0xff] %v1292
    %1368 = vst [vmem:[%s1365 + $0x10] sm:$0xff] %v1361
    %1369 = vst [vmem:[%s1365 + $0x18] sm:$0xff] %v1363
    %v1370 = vld [vmem:[#allocation4 + $0x7] sm:$0x1]
    %v1371 = vld [vmem:[#allocation4 + $0xf] sm:$0x1]
    %v1372 = vld [vmem:[#allocation4 + $0x17] sm:$0x1]
    %v1373 = vld [vmem:[#allocation4 + $0x1f] sm:$0x1]
    %v1374 = vld [vmem:[#allocation4 + $0x27] sm:$0x1]
    %v1375 = vld [vmem:[#allocation4 + $0x2f] sm:$0x1]
    %v1376 = vld [vmem:[#allocation4 + $0x37] sm:$0x1]
    %v1377 = vld [vmem:[#allocation4 + $0x3f] sm:$0x1]
    %v1386 = vrot.slane %v1371, 7
    %v1387 = vsel %vm127, %v1386, %v1370
    %v1388 = vrot.slane %v1372, 6
    %v1389 = vsel %vm130, %v1388, %v1387
    %v1390 = vrot.slane %v1373, 5
    %v1391 = vsel %vm133, %v1390, %v1389
    %v1392 = vrot.slane %v1374, 4
    %v1393 = vsel %vm136, %v1392, %v1391
    %v1394 = vrot.slane %v1375, 3
    %v1395 = vsel %vm139, %v1394, %v1393
    %v1396 = vrot.slane %v1376, 2
    %v1397 = vsel %vm142, %v1396, %v1395
    %v1398 = vrot.slane %v1377, 1
    %v1399 = vsel %vm145, %v1398, %v1397
    %v1400 = vsel %vm147, %v1399, 0
    %1402 = vmatprep.subr.mxu0 %v85
    %1403 = vmatpush1.msra.mxu0 %v84
    %1404 = vmatprep.subr.mxu0 0.0
    %1405 = vmatpush1.msra.mxu0 0.0
    %1406 = vmatprep.subr.mxu0 0.0
    %1407 = vmatpush1.msra.mxu0 0.0
    %1408 = vmatprep.subr.mxu0 0.0
    %1409 = vmatpush1.msra.mxu0 0.0
    %1410 = vmatprep.subr.mxu0 0.0
    %1411 = vmatpush1.msra.mxu0 0.0
    %1412 = vmatprep.subr.mxu0 0.0
    %1413 = vmatpush1.msra.mxu0 0.0
    %1414 = vmatprep.subr.mxu0 0.0
    %1415 = vmatpush1.msra.mxu0 0.0
    %1416 = vmatprep.subr.mxu0 0.0
    %1417 = vmatpush1.msra.mxu0 0.0
    %1418 = vmatprep.subr.mxu0 0.0
    %1419 = vmatpush1.msra.mxu0 0.0
    %1420 = vmatprep.subr.mxu0 0.0
    %1421 = vmatpush1.msra.mxu0 0.0
    %1422 = vmatprep.subr.mxu0 0.0
    %1423 = vmatpush1.msra.mxu0 0.0
    %1424 = vmatprep.subr.mxu0 0.0
    %1425 = vmatpush1.msra.mxu0 0.0
    %1426 = vmatprep.subr.mxu0 0.0
    %1427 = vmatpush1.msra.mxu0 0.0
    %1428 = vmatprep.subr.mxu0 0.0
    %1429 = vmatpush1.msra.mxu0 0.0
    %1430 = vmatprep.subr.mxu0 0.0
    %1431 = vmatpush1.msra.mxu0 0.0
    %1432 = vmatprep.subr.mxu0 0.0
    %1433 = vmatpush1.msra.mxu0 0.0
    %1434 = vmatprep.subr.mxu0 0.0
    %1435 = vmatpush1.msra.mxu0 0.0
    %1436 = vmatprep.subr.mxu0 0.0
    %1437 = vmatpush1.msra.mxu0 0.0
    %1438 = vmatprep.subr.mxu0 0.0
    %1439 = vmatpush1.msra.mxu0 0.0
    %1440 = vmatprep.subr.mxu0 0.0
    %1441 = vmatpush1.msra.mxu0 0.0
    %1442 = vmatprep.subr.mxu0 0.0
    %1443 = vmatpush1.msra.mxu0 0.0
    %1444 = vmatprep.subr.mxu0 0.0
    %1445 = vmatpush1.msra.mxu0 0.0
    %1446 = vmatprep.subr.mxu0 0.0
    %1447 = vmatpush1.msra.mxu0 0.0
    %1448 = vmatprep.subr.mxu0 0.0
    %1449 = vmatpush1.msra.mxu0 0.0
    %1450 = vmatprep.subr.mxu0 0.0
    %1451 = vmatpush1.msra.mxu0 0.0
    %1452 = vmatprep.subr.mxu0 0.0
    %1453 = vmatpush1.msra.mxu0 0.0
    %1454 = vmatprep.subr.mxu0 0.0
    %1455 = vmatpush1.msra.mxu0 0.0
    %1456 = vmatprep.subr.mxu0 0.0
    %1457 = vmatpush1.msra.mxu0 0.0
    %1458 = vmatprep.subr.mxu0 0.0
    %1459 = vmatpush1.msra.mxu0 0.0
    %1460 = vmatprep.subr.mxu0 0.0
    %1461 = vmatpush1.msra.mxu0 0.0
    %1462 = vmatprep.subr.mxu0 0.0
    %1463 = vmatpush1.msra.mxu0 0.0
    %1464 = vmatprep.subr.mxu0 0.0
    %1465 = vmatpush1.msra.mxu0 0.0
    %1466 = vmatprep.mubr.f32.mxu0 0.0
    %1467 = vmatmul.mubr.f32.gmra.mrb[0].mxu0 %v1400
    %v1468 = vpop.f32.mrb[0].mxu0
    %v1469 = vadd.f32 %v101, %v1468
    %v1470 = vpop.f32.mrb[0].mxu0
    %v1471 = vadd.f32 %v105, %v1470
    %1472 = vdwg.mxu0
    %1473 = vmatprep.subr.mxu0 %v87
    %1474 = vmatpush1.msra.mxu0 %v86
    %1475 = vmatprep.subr.mxu0 0.0
    %1476 = vmatpush1.msra.mxu0 0.0
    %1477 = vmatprep.subr.mxu0 0.0
    %1478 = vmatpush1.msra.mxu0 0.0
    %1479 = vmatprep.subr.mxu0 0.0
    %1480 = vmatpush1.msra.mxu0 0.0
    %1481 = vmatprep.subr.mxu0 0.0
    %1482 = vmatpush1.msra.mxu0 0.0
    %1483 = vmatprep.subr.mxu0 0.0
    %1484 = vmatpush1.msra.mxu0 0.0
    %1485 = vmatprep.subr.mxu0 0.0
    %1486 = vmatpush1.msra.mxu0 0.0
    %1487 = vmatprep.subr.mxu0 0.0
    %1488 = vmatpush1.msra.mxu0 0.0
    %1489 = vmatprep.subr.mxu0 0.0
    %1490 = vmatpush1.msra.mxu0 0.0
    %1491 = vmatprep.subr.mxu0 0.0
    %1492 = vmatpush1.msra.mxu0 0.0
    %1493 = vmatprep.subr.mxu0 0.0
    %1494 = vmatpush1.msra.mxu0 0.0
    %1495 = vmatprep.subr.mxu0 0.0
    %1496 = vmatpush1.msra.mxu0 0.0
    %1497 = vmatprep.subr.mxu0 0.0
    %1498 = vmatpush1.msra.mxu0 0.0
    %1499 = vmatprep.subr.mxu0 0.0
    %1500 = vmatpush1.msra.mxu0 0.0
    %1501 = vmatprep.subr.mxu0 0.0
    %1502 = vmatpush1.msra.mxu0 0.0
    %1503 = vmatprep.subr.mxu0 0.0
    %1504 = vmatpush1.msra.mxu0 0.0
    %1505 = vmatprep.subr.mxu0 0.0
    %1506 = vmatpush1.msra.mxu0 0.0
    %1507 = vmatprep.subr.mxu0 0.0
    %1508 = vmatpush1.msra.mxu0 0.0
    %1509 = vmatprep.subr.mxu0 0.0
    %1510 = vmatpush1.msra.mxu0 0.0
    %1511 = vmatprep.subr.mxu0 0.0
    %1512 = vmatpush1.msra.mxu0 0.0
    %1513 = vmatprep.subr.mxu0 0.0
    %1514 = vmatpush1.msra.mxu0 0.0
    %1515 = vmatprep.subr.mxu0 0.0
    %1516 = vmatpush1.msra.mxu0 0.0
    %1517 = vmatprep.subr.mxu0 0.0
    %1518 = vmatpush1.msra.mxu0 0.0
    %1519 = vmatprep.subr.mxu0 0.0
    %1520 = vmatpush1.msra.mxu0 0.0
    %1521 = vmatprep.subr.mxu0 0.0
    %1522 = vmatpush1.msra.mxu0 0.0
    %1523 = vmatprep.subr.mxu0 0.0
    %1524 = vmatpush1.msra.mxu0 0.0
    %1525 = vmatprep.subr.mxu0 0.0
    %1526 = vmatpush1.msra.mxu0 0.0
    %1527 = vmatprep.subr.mxu0 0.0
    %1528 = vmatpush1.msra.mxu0 0.0
    %1529 = vmatprep.subr.mxu0 0.0
    %1530 = vmatpush1.msra.mxu0 0.0
    %1531 = vmatprep.subr.mxu0 0.0
    %1532 = vmatpush1.msra.mxu0 0.0
    %1533 = vmatprep.subr.mxu0 0.0
    %1534 = vmatpush1.msra.mxu0 0.0
    %1535 = vmatprep.subr.mxu0 0.0
    %1536 = vmatpush1.msra.mxu0 0.0
    %1537 = vmatprep.mubr.f32.mxu0 0.0
    %1538 = vmatmul.mubr.f32.gmra.mrb[0].mxu0 %v1400
    %v1539 = vpop.f32.mrb[0].mxu0
    %v1540 = vadd.f32 %v109, %v1539
    %v1541 = vpop.f32.mrb[0].mxu0
    %v1542 = vadd.f32 %v113, %v1541
    %1543 = vdwg.mxu0
    %s1544 = scalar_lea.vmem [#allocation2], 224
    %1545 = vst [vmem:[%s1544] sm:$0xff] %v1469
    %1546 = vst [vmem:[%s1544 + $0x8] sm:$0xff] %v1471
    %1547 = vst [vmem:[%s1544 + $0x10] sm:$0xff] %v1540
    %1548 = vst [vmem:[%s1544 + $0x18] sm:$0xff] %v1542
    %v1549 = vld [vmem:[#allocation8] sm:$0xff]
    %v1550 = vld [vmem:[#allocation8 + $0x8] sm:$0xff]
    %v1551 = vld [vmem:[#allocation8 + $0x10] sm:$0xff]
    %v1552 = vld [vmem:[#allocation8 + $0x18] sm:$0xff]
    %v1553 = vld [vmem:[#allocation8 + $0x20] sm:$0xff]
    %v1554 = vld [vmem:[#allocation8 + $0x28] sm:$0xff]
    %v1555 = vld [vmem:[#allocation8 + $0x30] sm:$0xff]
    %v1556 = vld [vmem:[#allocation8 + $0x38] sm:$0xff]
    %v1557 = vld [vmem:[#allocation8 + $0x40] sm:$0xff]
    %v1558 = vld [vmem:[#allocation8 + $0x48] sm:$0xff]
    %v1559 = vld [vmem:[#allocation8 + $0x50] sm:$0xff]
    %v1560 = vld [vmem:[#allocation8 + $0x58] sm:$0xff]
    %v1561 = vld [vmem:[#allocation8 + $0x60] sm:$0xff]
    %v1562 = vld [vmem:[#allocation8 + $0x68] sm:$0xff]
    %v1563 = vld [vmem:[#allocation8 + $0x70] sm:$0xff]
    %v1564 = vld [vmem:[#allocation8 + $0x78] sm:$0xff]
    %v1565 = vld [vmem:[#allocation8 + $0x80] sm:$0xff]
    %v1566 = vld [vmem:[#allocation8 + $0x88] sm:$0xff]
    %v1567 = vld [vmem:[#allocation8 + $0x90] sm:$0xff]
    %v1568 = vld [vmem:[#allocation8 + $0x98] sm:$0xff]
    %v1569 = vld [vmem:[#allocation8 + $0xa0] sm:$0xff]
    %v1570 = vld [vmem:[#allocation8 + $0xa8] sm:$0xff]
    %v1571 = vld [vmem:[#allocation8 + $0xb0] sm:$0xff]
    %v1572 = vld [vmem:[#allocation8 + $0xb8] sm:$0xff]
    %v1573 = vld [vmem:[#allocation8 + $0xc0] sm:$0xff]
    %v1574 = vld [vmem:[#allocation8 + $0xc8] sm:$0xff]
    %v1575 = vld [vmem:[#allocation8 + $0xd0] sm:$0xff]
    %v1576 = vld [vmem:[#allocation8 + $0xd8] sm:$0xff]
    %v1577 = vld [vmem:[#allocation8 + $0xe0] sm:$0xff]
    %v1578 = vld [vmem:[#allocation8 + $0xe8] sm:$0xff]
    %v1579 = vld [vmem:[#allocation8 + $0xf0] sm:$0xff]
    %v1580 = vld [vmem:[#allocation8 + $0xf8] sm:$0xff]
    %v1581 = vld [vmem:[#allocation8 + $0x100] sm:$0xff]
    %v1582 = vld [vmem:[#allocation8 + $0x108] sm:$0xff]
    %v1583 = vld [vmem:[#allocation8 + $0x110] sm:$0xff]
    %v1584 = vld [vmem:[#allocation8 + $0x118] sm:$0xff]
    %v1585 = vld [vmem:[#allocation8 + $0x120] sm:$0xff]
    %v1586 = vld [vmem:[#allocation8 + $0x128] sm:$0xff]
    %v1587 = vld [vmem:[#allocation8 + $0x130] sm:$0xff]
    %v1588 = vld [vmem:[#allocation8 + $0x138] sm:$0xff]
    %v1589 = vld [vmem:[#allocation8 + $0x140] sm:$0xff]
    %v1590 = vld [vmem:[#allocation8 + $0x148] sm:$0xff]
    %v1591 = vld [vmem:[#allocation8 + $0x150] sm:$0xff]
    %v1592 = vld [vmem:[#allocation8 + $0x158] sm:$0xff]
    %v1593 = vld [vmem:[#allocation8 + $0x160] sm:$0xff]
    %v1594 = vld [vmem:[#allocation8 + $0x168] sm:$0xff]
    %v1595 = vld [vmem:[#allocation8 + $0x170] sm:$0xff]
    %v1596 = vld [vmem:[#allocation8 + $0x178] sm:$0xff]
    %v1597 = vld [vmem:[#allocation8 + $0x180] sm:$0xff]
    %v1598 = vld [vmem:[#allocation8 + $0x188] sm:$0xff]
    %v1599 = vld [vmem:[#allocation8 + $0x190] sm:$0xff]
    %v1600 = vld [vmem:[#allocation8 + $0x198] sm:$0xff]
    %v1601 = vld [vmem:[#allocation8 + $0x1a0] sm:$0xff]
    %v1602 = vld [vmem:[#allocation8 + $0x1a8] sm:$0xff]
    %v1603 = vld [vmem:[#allocation8 + $0x1b0] sm:$0xff]
    %v1604 = vld [vmem:[#allocation8 + $0x1b8] sm:$0xff]
    %v1605 = vld [vmem:[#allocation8 + $0x1c0] sm:$0xff]
    %v1606 = vld [vmem:[#allocation8 + $0x1c8] sm:$0xff]
    %v1607 = vld [vmem:[#allocation8 + $0x1d0] sm:$0xff]
    %v1608 = vld [vmem:[#allocation8 + $0x1d8] sm:$0xff]
    %v1609 = vld [vmem:[#allocation8 + $0x1e0] sm:$0xff]
    %v1610 = vld [vmem:[#allocation8 + $0x1e8] sm:$0xff]
    %v1611 = vld [vmem:[#allocation8 + $0x1f0] sm:$0xff]
    %v1612 = vld [vmem:[#allocation8 + $0x1f8] sm:$0xff]
    %v1613 = vld [vmem:[#allocation2] sm:$0xff]
    %v1614 = vld [vmem:[#allocation2 + $0x8] sm:$0xff]
    %v1615 = vld [vmem:[#allocation2 + $0x10] sm:$0xff]
    %v1616 = vld [vmem:[#allocation2 + $0x18] sm:$0xff]
    %1617 = vmatprep.subr.mxu0 %v1550
    %1618 = vmatpush1.msra.mxu0 %v1549
    %1619 = vmatprep.subr.mxu0 %v1554
    %1620 = vmatpush1.msra.mxu0 %v1553
    %1621 = vmatprep.subr.mxu0 %v1558
    %1622 = vmatpush1.msra.mxu0 %v1557
    %1623 = vmatprep.subr.mxu0 %v1562
    %1624 = vmatpush1.msra.mxu0 %v1561
    %1625 = vmatprep.subr.mxu0 %v1566
    %1626 = vmatpush1.msra.mxu0 %v1565
    %1627 = vmatprep.subr.mxu0 %v1570
    %1628 = vmatpush1.msra.mxu0 %v1569
    %1629 = vmatprep.subr.mxu0 %v1574
    %1630 = vmatpush1.msra.mxu0 %v1573
    %1631 = vmatprep.subr.mxu0 %v1578
    %1632 = vmatpush1.msra.mxu0 %v1577
    %1633 = vmatprep.subr.mxu0 %v1582
    %1634 = vmatpush1.msra.mxu0 %v1581
    %1635 = vmatprep.subr.mxu0 %v1586
    %1636 = vmatpush1.msra.mxu0 %v1585
    %1637 = vmatprep.subr.mxu0 %v1590
    %1638 = vmatpush1.msra.mxu0 %v1589
    %1639 = vmatprep.subr.mxu0 %v1594
    %1640 = vmatpush1.msra.mxu0 %v1593
    %1641 = vmatprep.subr.mxu0 %v1598
    %1642 = vmatpush1.msra.mxu0 %v1597
    %1643 = vmatprep.subr.mxu0 %v1602
    %1644 = vmatpush1.msra.mxu0 %v1601
    %1645 = vmatprep.subr.mxu0 %v1606
    %1646 = vmatpush1.msra.mxu0 %v1605
    %1647 = vmatprep.subr.mxu0 %v1610
    %1648 = vmatpush1.msra.mxu0 %v1609
    %1649 = vmatprep.subr.mxu0 0.0
    %1650 = vmatpush1.msra.mxu0 0.0
    %1651 = vmatprep.subr.mxu0 0.0
    %1652 = vmatpush1.msra.mxu0 0.0
    %1653 = vmatprep.subr.mxu0 0.0
    %1654 = vmatpush1.msra.mxu0 0.0
    %1655 = vmatprep.subr.mxu0 0.0
    %1656 = vmatpush1.msra.mxu0 0.0
    %1657 = vmatprep.subr.mxu0 0.0
    %1658 = vmatpush1.msra.mxu0 0.0
    %1659 = vmatprep.subr.mxu0 0.0
    %1660 = vmatpush1.msra.mxu0 0.0
    %1661 = vmatprep.subr.mxu0 0.0
    %1662 = vmatpush1.msra.mxu0 0.0
    %1663 = vmatprep.subr.mxu0 0.0
    %1664 = vmatpush1.msra.mxu0 0.0
    %1665 = vmatprep.subr.mxu0 0.0
    %1666 = vmatpush1.msra.mxu0 0.0
    %1667 = vmatprep.subr.mxu0 0.0
    %1668 = vmatpush1.msra.mxu0 0.0
    %1669 = vmatprep.subr.mxu0 0.0
    %1670 = vmatpush1.msra.mxu0 0.0
    %1671 = vmatprep.subr.mxu0 0.0
    %1672 = vmatpush1.msra.mxu0 0.0
    %1673 = vmatprep.subr.mxu0 0.0
    %1674 = vmatpush1.msra.mxu0 0.0
    %1675 = vmatprep.subr.mxu0 0.0
    %1676 = vmatpush1.msra.mxu0 0.0
    %1677 = vmatprep.subr.mxu0 0.0
    %1678 = vmatpush1.msra.mxu0 0.0
    %1679 = vmatprep.subr.mxu0 0.0
    %1680 = vmatpush1.msra.mxu0 0.0
    %1681 = vmatprep.mubr.f32.mxu0 0.0
    %1682 = vmatmul.mubr.f32.gmra.mrb[0].mxu0 0.0
    %v1683 = vpop.f32.mrb[0].mxu0
    %v1684 = vadd.f32 0.0, %v1683
    %v1685 = vpop.f32.mrb[0].mxu0
    %v1686 = vadd.f32 0.0, %v1685
    %1687 = vdwg.mxu0
    %1688 = vmatprep.subr.mxu0 %v1552
    %1689 = vmatpush1.msra.mxu0 %v1551
    %1690 = vmatprep.subr.mxu0 %v1556
    %1691 = vmatpush1.msra.mxu0 %v1555
    %1692 = vmatprep.subr.mxu0 %v1560
    %1693 = vmatpush1.msra.mxu0 %v1559
    %1694 = vmatprep.subr.mxu0 %v1564
    %1695 = vmatpush1.msra.mxu0 %v1563
    %1696 = vmatprep.subr.mxu0 %v1568
    %1697 = vmatpush1.msra.mxu0 %v1567
    %1698 = vmatprep.subr.mxu0 %v1572
    %1699 = vmatpush1.msra.mxu0 %v1571
    %1700 = vmatprep.subr.mxu0 %v1576
    %1701 = vmatpush1.msra.mxu0 %v1575
    %1702 = vmatprep.subr.mxu0 %v1580
    %1703 = vmatpush1.msra.mxu0 %v1579
    %1704 = vmatprep.subr.mxu0 %v1584
    %1705 = vmatpush1.msra.mxu0 %v1583
    %1706 = vmatprep.subr.mxu0 %v1588
    %1707 = vmatpush1.msra.mxu0 %v1587
    %1708 = vmatprep.subr.mxu0 %v1592
    %1709 = vmatpush1.msra.mxu0 %v1591
    %1710 = vmatprep.subr.mxu0 %v1596
    %1711 = vmatpush1.msra.mxu0 %v1595
    %1712 = vmatprep.subr.mxu0 %v1600
    %1713 = vmatpush1.msra.mxu0 %v1599
    %1714 = vmatprep.subr.mxu0 %v1604
    %1715 = vmatpush1.msra.mxu0 %v1603
    %1716 = vmatprep.subr.mxu0 %v1608
    %1717 = vmatpush1.msra.mxu0 %v1607
    %1718 = vmatprep.subr.mxu0 %v1612
    %1719 = vmatpush1.msra.mxu0 %v1611
    %1720 = vmatprep.subr.mxu0 0.0
    %1721 = vmatpush1.msra.mxu0 0.0
    %1722 = vmatprep.subr.mxu0 0.0
    %1723 = vmatpush1.msra.mxu0 0.0
    %1724 = vmatprep.subr.mxu0 0.0
    %1725 = vmatpush1.msra.mxu0 0.0
    %1726 = vmatprep.subr.mxu0 0.0
    %1727 = vmatpush1.msra.mxu0 0.0
    %1728 = vmatprep.subr.mxu0 0.0
    %1729 = vmatpush1.msra.mxu0 0.0
    %1730 = vmatprep.subr.mxu0 0.0
    %1731 = vmatpush1.msra.mxu0 0.0
    %1732 = vmatprep.subr.mxu0 0.0
    %1733 = vmatpush1.msra.mxu0 0.0
    %1734 = vmatprep.subr.mxu0 0.0
    %1735 = vmatpush1.msra.mxu0 0.0
    %1736 = vmatprep.subr.mxu0 0.0
    %1737 = vmatpush1.msra.mxu0 0.0
    %1738 = vmatprep.subr.mxu0 0.0
    %1739 = vmatpush1.msra.mxu0 0.0
    %1740 = vmatprep.subr.mxu0 0.0
    %1741 = vmatpush1.msra.mxu0 0.0
    %1742 = vmatprep.subr.mxu0 0.0
    %1743 = vmatpush1.msra.mxu0 0.0
    %1744 = vmatprep.subr.mxu0 0.0
    %1745 = vmatpush1.msra.mxu0 0.0
    %1746 = vmatprep.subr.mxu0 0.0
    %1747 = vmatpush1.msra.mxu0 0.0
    %1748 = vmatprep.subr.mxu0 0.0
    %1749 = vmatpush1.msra.mxu0 0.0
    %1750 = vmatprep.subr.mxu0 0.0
    %1751 = vmatpush1.msra.mxu0 0.0
    %1752 = vmatprep.mubr.f32.mxu0 0.0
    %1753 = vmatmul.mubr.f32.gmra.mrb[0].mxu0 0.0
    %v1754 = vpop.f32.mrb[0].mxu0
    %v1755 = vadd.f32 0.0, %v1754
    %v1756 = vpop.f32.mrb[0].mxu0
    %v1757 = vadd.f32 0.0, %v1756
    %1758 = vdwg.mxu0
    %v1759 = vadd.f32 %v1613, %v1684
    %v1760 = vadd.f32 %v1614, %v1686
    %v1761 = vadd.f32 %v1615, %v1755
    %v1762 = vadd.f32 %v1616, %v1757
    %v1763 = vxor.u32 %v1759, 2147483648
    %v1764 = vxor.u32 %v1760, 2147483648
    %v1765 = vxor.u32 %v1761, 2147483648
    %v1766 = vmul.f32 %v1763, 1.442695
    %v1767 = vpow.pop %v1766
    %v1768 = vmul.f32 %v1764, 1.442695
    %v1769 = vpow.pop %v1768
    %v1770 = vmul.f32 %v1765, 1.442695
    %v1771 = vpow.pop %v1770
    %v1772 = vadd.f32 %v1767, 1.0
    %v1773 = vadd.f32 %v1769, 1.0
    %v1774 = vadd.f32 %v1771, 1.0
    %v1775 = vrcp.pop %v1772
    %v1776 = vmul.f32 1.0, %v1775
    %v1777 = vrcp.pop %v1773
    %v1778 = vmul.f32 1.0, %v1777
    %v1779 = vrcp.pop %v1774
    %v1780 = vmul.f32 1.0, %v1779
    %v1781 = vtanh.pop %v1762
    %v1782 = vmul.f32 %v1778, 0.0
    %v1783 = vmul.f32 %v1776, %v1781
    %v1784 = vadd.f32 %v1782, %v1783
    %v1785 = vtanh.pop %v1784
    %v1786 = vmul.f32 %v1780, %v1785
    %v1787 = vld [vmem:[%s470] sm:$0xff]
    %v1788 = vld [vmem:[%s470 + $0x8] sm:$0xff]
    %v1789 = vld [vmem:[%s470 + $0x10] sm:$0xff]
    %v1790 = vld [vmem:[%s470 + $0x18] sm:$0xff]
    %1791 = vmatprep.subr.mxu0 %v1550
    %1792 = vmatpush1.msra.mxu0 %v1549
    %1793 = vmatprep.subr.mxu0 %v1554
    %1794 = vmatpush1.msra.mxu0 %v1553
    %1795 = vmatprep.subr.mxu0 %v1558
    %1796 = vmatpush1.msra.mxu0 %v1557
    %1797 = vmatprep.subr.mxu0 %v1562
    %1798 = vmatpush1.msra.mxu0 %v1561
    %1799 = vmatprep.subr.mxu0 %v1566
    %1800 = vmatpush1.msra.mxu0 %v1565
    %1801 = vmatprep.subr.mxu0 %v1570
    %1802 = vmatpush1.msra.mxu0 %v1569
    %1803 = vmatprep.subr.mxu0 %v1574
    %1804 = vmatpush1.msra.mxu0 %v1573
    %1805 = vmatprep.subr.mxu0 %v1578
    %1806 = vmatpush1.msra.mxu0 %v1577
    %1807 = vmatprep.subr.mxu0 %v1582
    %1808 = vmatpush1.msra.mxu0 %v1581
    %1809 = vmatprep.subr.mxu0 %v1586
    %1810 = vmatpush1.msra.mxu0 %v1585
    %1811 = vmatprep.subr.mxu0 %v1590
    %1812 = vmatpush1.msra.mxu0 %v1589
    %1813 = vmatprep.subr.mxu0 %v1594
    %1814 = vmatpush1.msra.mxu0 %v1593
    %1815 = vmatprep.subr.mxu0 %v1598
    %1816 = vmatpush1.msra.mxu0 %v1597
    %1817 = vmatprep.subr.mxu0 %v1602
    %1818 = vmatpush1.msra.mxu0 %v1601
    %1819 = vmatprep.subr.mxu0 %v1606
    %1820 = vmatpush1.msra.mxu0 %v1605
    %1821 = vmatprep.subr.mxu0 %v1610
    %1822 = vmatpush1.msra.mxu0 %v1609
    %1823 = vmatprep.subr.mxu0 0.0
    %1824 = vmatpush1.msra.mxu0 0.0
    %1825 = vmatprep.subr.mxu0 0.0
    %1826 = vmatpush1.msra.mxu0 0.0
    %1827 = vmatprep.subr.mxu0 0.0
    %1828 = vmatpush1.msra.mxu0 0.0
    %1829 = vmatprep.subr.mxu0 0.0
    %1830 = vmatpush1.msra.mxu0 0.0
    %1831 = vmatprep.subr.mxu0 0.0
    %1832 = vmatpush1.msra.mxu0 0.0
    %1833 = vmatprep.subr.mxu0 0.0
    %1834 = vmatpush1.msra.mxu0 0.0
    %1835 = vmatprep.subr.mxu0 0.0
    %1836 = vmatpush1.msra.mxu0 0.0
    %1837 = vmatprep.subr.mxu0 0.0
    %1838 = vmatpush1.msra.mxu0 0.0
    %1839 = vmatprep.subr.mxu0 0.0
    %1840 = vmatpush1.msra.mxu0 0.0
    %1841 = vmatprep.subr.mxu0 0.0
    %1842 = vmatpush1.msra.mxu0 0.0
    %1843 = vmatprep.subr.mxu0 0.0
    %1844 = vmatpush1.msra.mxu0 0.0
    %1845 = vmatprep.subr.mxu0 0.0
    %1846 = vmatpush1.msra.mxu0 0.0
    %1847 = vmatprep.subr.mxu0 0.0
    %1848 = vmatpush1.msra.mxu0 0.0
    %1849 = vmatprep.subr.mxu0 0.0
    %1850 = vmatpush1.msra.mxu0 0.0
    %1851 = vmatprep.subr.mxu0 0.0
    %1852 = vmatpush1.msra.mxu0 0.0
    %1853 = vmatprep.subr.mxu0 0.0
    %1854 = vmatpush1.msra.mxu0 0.0
    %1855 = vmatprep.mubr.f32.mxu0 0.0
    %1856 = vmatmul.mubr.f32.gmra.mrb[0].mxu0 %v1786
    %v1857 = vpop.f32.mrb[0].mxu0
    %v1858 = vadd.f32 0.0, %v1857
    %v1859 = vpop.f32.mrb[0].mxu0
    %v1860 = vadd.f32 0.0, %v1859
    %1861 = vdwg.mxu0
    %1862 = vmatprep.subr.mxu0 %v1552
    %1863 = vmatpush1.msra.mxu0 %v1551
    %1864 = vmatprep.subr.mxu0 %v1556
    %1865 = vmatpush1.msra.mxu0 %v1555
    %1866 = vmatprep.subr.mxu0 %v1560
    %1867 = vmatpush1.msra.mxu0 %v1559
    %1868 = vmatprep.subr.mxu0 %v1564
    %1869 = vmatpush1.msra.mxu0 %v1563
    %1870 = vmatprep.subr.mxu0 %v1568
    %1871 = vmatpush1.msra.mxu0 %v1567
    %1872 = vmatprep.subr.mxu0 %v1572
    %1873 = vmatpush1.msra.mxu0 %v1571
    %1874 = vmatprep.subr.mxu0 %v1576
    %1875 = vmatpush1.msra.mxu0 %v1575
    %1876 = vmatprep.subr.mxu0 %v1580
    %1877 = vmatpush1.msra.mxu0 %v1579
    %1878 = vmatprep.subr.mxu0 %v1584
    %1879 = vmatpush1.msra.mxu0 %v1583
    %1880 = vmatprep.subr.mxu0 %v1588
    %1881 = vmatpush1.msra.mxu0 %v1587
    %1882 = vmatprep.subr.mxu0 %v1592
    %1883 = vmatpush1.msra.mxu0 %v1591
    %1884 = vmatprep.subr.mxu0 %v1596
    %1885 = vmatpush1.msra.mxu0 %v1595
    %1886 = vmatprep.subr.mxu0 %v1600
    %1887 = vmatpush1.msra.mxu0 %v1599
    %1888 = vmatprep.subr.mxu0 %v1604
    %1889 = vmatpush1.msra.mxu0 %v1603
    %1890 = vmatprep.subr.mxu0 %v1608
    %1891 = vmatpush1.msra.mxu0 %v1607
    %1892 = vmatprep.subr.mxu0 %v1612
    %1893 = vmatpush1.msra.mxu0 %v1611
    %1894 = vmatprep.subr.mxu0 0.0
    %1895 = vmatpush1.msra.mxu0 0.0
    %1896 = vmatprep.subr.mxu0 0.0
    %1897 = vmatpush1.msra.mxu0 0.0
    %1898 = vmatprep.subr.mxu0 0.0
    %1899 = vmatpush1.msra.mxu0 0.0
    %1900 = vmatprep.subr.mxu0 0.0
    %1901 = vmatpush1.msra.mxu0 0.0
    %1902 = vmatprep.subr.mxu0 0.0
    %1903 = vmatpush1.msra.mxu0 0.0
    %1904 = vmatprep.subr.mxu0 0.0
    %1905 = vmatpush1.msra.mxu0 0.0
    %1906 = vmatprep.subr.mxu0 0.0
    %1907 = vmatpush1.msra.mxu0 0.0
    %1908 = vmatprep.subr.mxu0 0.0
    %1909 = vmatpush1.msra.mxu0 0.0
    %1910 = vmatprep.subr.mxu0 0.0
    %1911 = vmatpush1.msra.mxu0 0.0
    %1912 = vmatprep.subr.mxu0 0.0
    %1913 = vmatpush1.msra.mxu0 0.0
    %1914 = vmatprep.subr.mxu0 0.0
    %1915 = vmatpush1.msra.mxu0 0.0
    %1916 = vmatprep.subr.mxu0 0.0
    %1917 = vmatpush1.msra.mxu0 0.0
    %1918 = vmatprep.subr.mxu0 0.0
    %1919 = vmatpush1.msra.mxu0 0.0
    %1920 = vmatprep.subr.mxu0 0.0
    %1921 = vmatpush1.msra.mxu0 0.0
    %1922 = vmatprep.subr.mxu0 0.0
    %1923 = vmatpush1.msra.mxu0 0.0
    %1924 = vmatprep.subr.mxu0 0.0
    %1925 = vmatpush1.msra.mxu0 0.0
    %1926 = vmatprep.mubr.f32.mxu0 0.0
    %1927 = vmatmul.mubr.f32.gmra.mrb[0].mxu0 %v1786
    %v1928 = vpop.f32.mrb[0].mxu0
    %v1929 = vadd.f32 0.0, %v1928
    %v1930 = vpop.f32.mrb[0].mxu0
    %v1931 = vadd.f32 0.0, %v1930
    %1932 = vdwg.mxu0
    %v1933 = vadd.f32 %v1787, %v1858
    %v1934 = vadd.f32 %v1788, %v1860
    %v1935 = vadd.f32 %v1789, %v1929
    %v1936 = vadd.f32 %v1790, %v1931
    %v1937 = vxor.u32 %v1933, 2147483648
    %v1938 = vxor.u32 %v1934, 2147483648
    %v1939 = vxor.u32 %v1935, 2147483648
    %v1940 = vmul.f32 %v1937, 1.442695
    %v1941 = vpow.pop %v1940
    %v1942 = vmul.f32 %v1938, 1.442695
    %v1943 = vpow.pop %v1942
    %v1944 = vmul.f32 %v1939, 1.442695
    %v1945 = vpow.pop %v1944
    %v1946 = vadd.f32 %v1941, 1.0
    %v1947 = vadd.f32 %v1943, 1.0
    %v1948 = vadd.f32 %v1945, 1.0
    %v1949 = vrcp.pop %v1946
    %v1950 = vmul.f32 1.0, %v1949
    %v1951 = vrcp.pop %v1947
    %v1952 = vmul.f32 1.0, %v1951
    %v1953 = vrcp.pop %v1948
    %v1954 = vmul.f32 1.0, %v1953
    %v1955 = vtanh.pop %v1936
    %v1956 = vmul.f32 %v1952, %v1784
    %v1957 = vmul.f32 %v1950, %v1955
    %v1958 = vadd.f32 %v1956, %v1957
    %v1959 = vtanh.pop %v1958
    %v1960 = vmul.f32 %v1954, %v1959
    %v1961 = vld [vmem:[%s649] sm:$0xff]
    %v1962 = vld [vmem:[%s649 + $0x8] sm:$0xff]
    %v1963 = vld [vmem:[%s649 + $0x10] sm:$0xff]
    %v1964 = vld [vmem:[%s649 + $0x18] sm:$0xff]
    %1965 = vmatprep.subr.mxu0 %v1550
    %1966 = vmatpush1.msra.mxu0 %v1549
    %1967 = vmatprep.subr.mxu0 %v1554
    %1968 = vmatpush1.msra.mxu0 %v1553
    %1969 = vmatprep.subr.mxu0 %v1558
    %1970 = vmatpush1.msra.mxu0 %v1557
    %1971 = vmatprep.subr.mxu0 %v1562
    %1972 = vmatpush1.msra.mxu0 %v1561
    %1973 = vmatprep.subr.mxu0 %v1566
    %1974 = vmatpush1.msra.mxu0 %v1565
    %1975 = vmatprep.subr.mxu0 %v1570
    %1976 = vmatpush1.msra.mxu0 %v1569
    %1977 = vmatprep.subr.mxu0 %v1574
    %1978 = vmatpush1.msra.mxu0 %v1573
    %1979 = vmatprep.subr.mxu0 %v1578
    %1980 = vmatpush1.msra.mxu0 %v1577
    %1981 = vmatprep.subr.mxu0 %v1582
    %1982 = vmatpush1.msra.mxu0 %v1581
    %1983 = vmatprep.subr.mxu0 %v1586
    %1984 = vmatpush1.msra.mxu0 %v1585
    %1985 = vmatprep.subr.mxu0 %v1590
    %1986 = vmatpush1.msra.mxu0 %v1589
    %1987 = vmatprep.subr.mxu0 %v1594
    %1988 = vmatpush1.msra.mxu0 %v1593
    %1989 = vmatprep.subr.mxu0 %v1598
    %1990 = vmatpush1.msra.mxu0 %v1597
    %1991 = vmatprep.subr.mxu0 %v1602
    %1992 = vmatpush1.msra.mxu0 %v1601
    %1993 = vmatprep.subr.mxu0 %v1606
    %1994 = vmatpush1.msra.mxu0 %v1605
    %1995 = vmatprep.subr.mxu0 %v1610
    %1996 = vmatpush1.msra.mxu0 %v1609
    %1997 = vmatprep.subr.mxu0 0.0
    %1998 = vmatpush1.msra.mxu0 0.0
    %1999 = vmatprep.subr.mxu0 0.0
    %2000 = vmatpush1.msra.mxu0 0.0
    %2001 = vmatprep.subr.mxu0 0.0
    %2002 = vmatpush1.msra.mxu0 0.0
    %2003 = vmatprep.subr.mxu0 0.0
    %2004 = vmatpush1.msra.mxu0 0.0
    %2005 = vmatprep.subr.mxu0 0.0
    %2006 = vmatpush1.msra.mxu0 0.0
    %2007 = vmatprep.subr.mxu0 0.0
    %2008 = vmatpush1.msra.mxu0 0.0
    %2009 = vmatprep.subr.mxu0 0.0
    %2010 = vmatpush1.msra.mxu0 0.0
    %2011 = vmatprep.subr.mxu0 0.0
    %2012 = vmatpush1.msra.mxu0 0.0
    %2013 = vmatprep.subr.mxu0 0.0
    %2014 = vmatpush1.msra.mxu0 0.0
    %2015 = vmatprep.subr.mxu0 0.0
    %2016 = vmatpush1.msra.mxu0 0.0
    %2017 = vmatprep.subr.mxu0 0.0
    %2018 = vmatpush1.msra.mxu0 0.0
    %2019 = vmatprep.subr.mxu0 0.0
    %2020 = vmatpush1.msra.mxu0 0.0
    %2021 = vmatprep.subr.mxu0 0.0
    %2022 = vmatpush1.msra.mxu0 0.0
    %2023 = vmatprep.subr.mxu0 0.0
    %2024 = vmatpush1.msra.mxu0 0.0
    %2025 = vmatprep.subr.mxu0 0.0
    %2026 = vmatpush1.msra.mxu0 0.0
    %2027 = vmatprep.subr.mxu0 0.0
    %2028 = vmatpush1.msra.mxu0 0.0
    %2029 = vmatprep.mubr.f32.mxu0 0.0
    %2030 = vmatmul.mubr.f32.gmra.mrb[0].mxu0 %v1960
    %v2031 = vpop.f32.mrb[0].mxu0
    %v2032 = vadd.f32 0.0, %v2031
    %v2033 = vpop.f32.mrb[0].mxu0
    %v2034 = vadd.f32 0.0, %v2033
    %2035 = vdwg.mxu0
    %2036 = vmatprep.subr.mxu0 %v1552
    %2037 = vmatpush1.msra.mxu0 %v1551
    %2038 = vmatprep.subr.mxu0 %v1556
    %2039 = vmatpush1.msra.mxu0 %v1555
    %2040 = vmatprep.subr.mxu0 %v1560
    %2041 = vmatpush1.msra.mxu0 %v1559
    %2042 = vmatprep.subr.mxu0 %v1564
    %2043 = vmatpush1.msra.mxu0 %v1563
    %2044 = vmatprep.subr.mxu0 %v1568
    %2045 = vmatpush1.msra.mxu0 %v1567
    %2046 = vmatprep.subr.mxu0 %v1572
    %2047 = vmatpush1.msra.mxu0 %v1571
    %2048 = vmatprep.subr.mxu0 %v1576
    %2049 = vmatpush1.msra.mxu0 %v1575
    %2050 = vmatprep.subr.mxu0 %v1580
    %2051 = vmatpush1.msra.mxu0 %v1579
    %2052 = vmatprep.subr.mxu0 %v1584
    %2053 = vmatpush1.msra.mxu0 %v1583
    %2054 = vmatprep.subr.mxu0 %v1588
    %2055 = vmatpush1.msra.mxu0 %v1587
    %2056 = vmatprep.subr.mxu0 %v1592
    %2057 = vmatpush1.msra.mxu0 %v1591
    %2058 = vmatprep.subr.mxu0 %v1596
    %2059 = vmatpush1.msra.mxu0 %v1595
    %2060 = vmatprep.subr.mxu0 %v1600
    %2061 = vmatpush1.msra.mxu0 %v1599
    %2062 = vmatprep.subr.mxu0 %v1604
    %2063 = vmatpush1.msra.mxu0 %v1603
    %2064 = vmatprep.subr.mxu0 %v1608
    %2065 = vmatpush1.msra.mxu0 %v1607
    %2066 = vmatprep.subr.mxu0 %v1612
    %2067 = vmatpush1.msra.mxu0 %v1611
    %2068 = vmatprep.subr.mxu0 0.0
    %2069 = vmatpush1.msra.mxu0 0.0
    %2070 = vmatprep.subr.mxu0 0.0
    %2071 = vmatpush1.msra.mxu0 0.0
    %2072 = vmatprep.subr.mxu0 0.0
    %2073 = vmatpush1.msra.mxu0 0.0
    %2074 = vmatprep.subr.mxu0 0.0
    %2075 = vmatpush1.msra.mxu0 0.0
    %2076 = vmatprep.subr.mxu0 0.0
    %2077 = vmatpush1.msra.mxu0 0.0
    %2078 = vmatprep.subr.mxu0 0.0
    %2079 = vmatpush1.msra.mxu0 0.0
    %2080 = vmatprep.subr.mxu0 0.0
    %2081 = vmatpush1.msra.mxu0 0.0
    %2082 = vmatprep.subr.mxu0 0.0
    %2083 = vmatpush1.msra.mxu0 0.0
    %2084 = vmatprep.subr.mxu0 0.0
    %2085 = vmatpush1.msra.mxu0 0.0
    %2086 = vmatprep.subr.mxu0 0.0
    %2087 = vmatpush1.msra.mxu0 0.0
    %2088 = vmatprep.subr.mxu0 0.0
    %2089 = vmatpush1.msra.mxu0 0.0
    %2090 = vmatprep.subr.mxu0 0.0
    %2091 = vmatpush1.msra.mxu0 0.0
    %2092 = vmatprep.subr.mxu0 0.0
    %2093 = vmatpush1.msra.mxu0 0.0
    %2094 = vmatprep.subr.mxu0 0.0
    %2095 = vmatpush1.msra.mxu0 0.0
    %2096 = vmatprep.subr.mxu0 0.0
    %2097 = vmatpush1.msra.mxu0 0.0
    %2098 = vmatprep.subr.mxu0 0.0
    %2099 = vmatpush1.msra.mxu0 0.0
    %2100 = vmatprep.mubr.f32.mxu0 0.0
    %2101 = vmatmul.mubr.f32.gmra.mrb[0].mxu0 %v1960
    %v2102 = vpop.f32.mrb[0].mxu0
    %v2103 = vadd.f32 0.0, %v2102
    %v2104 = vpop.f32.mrb[0].mxu0
    %v2105 = vadd.f32 0.0, %v2104
    %2106 = vdwg.mxu0
    %v2107 = vadd.f32 %v1961, %v2032
    %v2108 = vadd.f32 %v1962, %v2034
    %v2109 = vadd.f32 %v1963, %v2103
    %v2110 = vadd.f32 %v1964, %v2105
    %v2111 = vxor.u32 %v2107, 2147483648
    %v2112 = vxor.u32 %v2108, 2147483648
    %v2113 = vxor.u32 %v2109, 2147483648
    %v2114 = vmul.f32 %v2111, 1.442695
    %v2115 = vpow.pop %v2114
    %v2116 = vmul.f32 %v2112, 1.442695
    %v2117 = vpow.pop %v2116
    %v2118 = vmul.f32 %v2113, 1.442695
    %v2119 = vpow.pop %v2118
    %v2120 = vadd.f32 %v2115, 1.0
    %v2121 = vadd.f32 %v2117, 1.0
    %v2122 = vadd.f32 %v2119, 1.0
    %v2123 = vrcp.pop %v2120
    %v2124 = vmul.f32 1.0, %v2123
    %v2125 = vrcp.pop %v2121
    %v2126 = vmul.f32 1.0, %v2125
    %v2127 = vrcp.pop %v2122
    %v2128 = vmul.f32 1.0, %v2127
    %v2129 = vtanh.pop %v2110
    %v2130 = vmul.f32 %v2126, %v1958
    %v2131 = vmul.f32 %v2124, %v2129
    %v2132 = vadd.f32 %v2130, %v2131
    %v2133 = vtanh.pop %v2132
    %v2134 = vmul.f32 %v2128, %v2133
    %v2135 = vld [vmem:[%s828] sm:$0xff]
    %v2136 = vld [vmem:[%s828 + $0x8] sm:$0xff]
    %v2137 = vld [vmem:[%s828 + $0x10] sm:$0xff]
    %v2138 = vld [vmem:[%s828 + $0x18] sm:$0xff]
    %2139 = vmatprep.subr.mxu0 %v1550
    %2140 = vmatpush1.msra.mxu0 %v1549
    %2141 = vmatprep.subr.mxu0 %v1554
    %2142 = vmatpush1.msra.mxu0 %v1553
    %2143 = vmatprep.subr.mxu0 %v1558
    %2144 = vmatpush1.msra.mxu0 %v1557
    %2145 = vmatprep.subr.mxu0 %v1562
    %2146 = vmatpush1.msra.mxu0 %v1561
    %2147 = vmatprep.subr.mxu0 %v1566
    %2148 = vmatpush1.msra.mxu0 %v1565
    %2149 = vmatprep.subr.mxu0 %v1570
    %2150 = vmatpush1.msra.mxu0 %v1569
    %2151 = vmatprep.subr.mxu0 %v1574
    %2152 = vmatpush1.msra.mxu0 %v1573
    %2153 = vmatprep.subr.mxu0 %v1578
    %2154 = vmatpush1.msra.mxu0 %v1577
    %2155 = vmatprep.subr.mxu0 %v1582
    %2156 = vmatpush1.msra.mxu0 %v1581
    %2157 = vmatprep.subr.mxu0 %v1586
    %2158 = vmatpush1.msra.mxu0 %v1585
    %2159 = vmatprep.subr.mxu0 %v1590
    %2160 = vmatpush1.msra.mxu0 %v1589
    %2161 = vmatprep.subr.mxu0 %v1594
    %2162 = vmatpush1.msra.mxu0 %v1593
    %2163 = vmatprep.subr.mxu0 %v1598
    %2164 = vmatpush1.msra.mxu0 %v1597
    %2165 = vmatprep.subr.mxu0 %v1602
    %2166 = vmatpush1.msra.mxu0 %v1601
    %2167 = vmatprep.subr.mxu0 %v1606
    %2168 = vmatpush1.msra.mxu0 %v1605
    %2169 = vmatprep.subr.mxu0 %v1610
    %2170 = vmatpush1.msra.mxu0 %v1609
    %2171 = vmatprep.subr.mxu0 0.0
    %2172 = vmatpush1.msra.mxu0 0.0
    %2173 = vmatprep.subr.mxu0 0.0
    %2174 = vmatpush1.msra.mxu0 0.0
    %2175 = vmatprep.subr.mxu0 0.0
    %2176 = vmatpush1.msra.mxu0 0.0
    %2177 = vmatprep.subr.mxu0 0.0
    %2178 = vmatpush1.msra.mxu0 0.0
    %2179 = vmatprep.subr.mxu0 0.0
    %2180 = vmatpush1.msra.mxu0 0.0
    %2181 = vmatprep.subr.mxu0 0.0
    %2182 = vmatpush1.msra.mxu0 0.0
    %2183 = vmatprep.subr.mxu0 0.0
    %2184 = vmatpush1.msra.mxu0 0.0
    %2185 = vmatprep.subr.mxu0 0.0
    %2186 = vmatpush1.msra.mxu0 0.0
    %2187 = vmatprep.subr.mxu0 0.0
    %2188 = vmatpush1.msra.mxu0 0.0
    %2189 = vmatprep.subr.mxu0 0.0
    %2190 = vmatpush1.msra.mxu0 0.0
    %2191 = vmatprep.subr.mxu0 0.0
    %2192 = vmatpush1.msra.mxu0 0.0
    %2193 = vmatprep.subr.mxu0 0.0
    %2194 = vmatpush1.msra.mxu0 0.0
    %2195 = vmatprep.subr.mxu0 0.0
    %2196 = vmatpush1.msra.mxu0 0.0
    %2197 = vmatprep.subr.mxu0 0.0
    %2198 = vmatpush1.msra.mxu0 0.0
    %2199 = vmatprep.subr.mxu0 0.0
    %2200 = vmatpush1.msra.mxu0 0.0
    %2201 = vmatprep.subr.mxu0 0.0
    %2202 = vmatpush1.msra.mxu0 0.0
    %2203 = vmatprep.mubr.f32.mxu0 0.0
    %2204 = vmatmul.mubr.f32.gmra.mrb[0].mxu0 %v2134
    %v2205 = vpop.f32.mrb[0].mxu0
    %v2206 = vadd.f32 0.0, %v2205
    %v2207 = vpop.f32.mrb[0].mxu0
    %v2208 = vadd.f32 0.0, %v2207
    %2209 = vdwg.mxu0
    %2210 = vmatprep.subr.mxu0 %v1552
    %2211 = vmatpush1.msra.mxu0 %v1551
    %2212 = vmatprep.subr.mxu0 %v1556
    %2213 = vmatpush1.msra.mxu0 %v1555
    %2214 = vmatprep.subr.mxu0 %v1560
    %2215 = vmatpush1.msra.mxu0 %v1559
    %2216 = vmatprep.subr.mxu0 %v1564
    %2217 = vmatpush1.msra.mxu0 %v1563
    %2218 = vmatprep.subr.mxu0 %v1568
    %2219 = vmatpush1.msra.mxu0 %v1567
    %2220 = vmatprep.subr.mxu0 %v1572
    %2221 = vmatpush1.msra.mxu0 %v1571
    %2222 = vmatprep.subr.mxu0 %v1576
    %2223 = vmatpush1.msra.mxu0 %v1575
    %2224 = vmatprep.subr.mxu0 %v1580
    %2225 = vmatpush1.msra.mxu0 %v1579
    %2226 = vmatprep.subr.mxu0 %v1584
    %2227 = vmatpush1.msra.mxu0 %v1583
    %2228 = vmatprep.subr.mxu0 %v1588
    %2229 = vmatpush1.msra.mxu0 %v1587
    %2230 = vmatprep.subr.mxu0 %v1592
    %2231 = vmatpush1.msra.mxu0 %v1591
    %2232 = vmatprep.subr.mxu0 %v1596
    %2233 = vmatpush1.msra.mxu0 %v1595
    %2234 = vmatprep.subr.mxu0 %v1600
    %2235 = vmatpush1.msra.mxu0 %v1599
    %2236 = vmatprep.subr.mxu0 %v1604
    %2237 = vmatpush1.msra.mxu0 %v1603
    %2238 = vmatprep.subr.mxu0 %v1608
    %2239 = vmatpush1.msra.mxu0 %v1607
    %2240 = vmatprep.subr.mxu0 %v1612
    %2241 = vmatpush1.msra.mxu0 %v1611
    %2242 = vmatprep.subr.mxu0 0.0
    %2243 = vmatpush1.msra.mxu0 0.0
    %2244 = vmatprep.subr.mxu0 0.0
    %2245 = vmatpush1.msra.mxu0 0.0
    %2246 = vmatprep.subr.mxu0 0.0
    %2247 = vmatpush1.msra.mxu0 0.0
    %2248 = vmatprep.subr.mxu0 0.0
    %2249 = vmatpush1.msra.mxu0 0.0
    %2250 = vmatprep.subr.mxu0 0.0
    %2251 = vmatpush1.msra.mxu0 0.0
    %2252 = vmatprep.subr.mxu0 0.0
    %2253 = vmatpush1.msra.mxu0 0.0
    %2254 = vmatprep.subr.mxu0 0.0
    %2255 = vmatpush1.msra.mxu0 0.0
    %2256 = vmatprep.subr.mxu0 0.0
    %2257 = vmatpush1.msra.mxu0 0.0
    %2258 = vmatprep.subr.mxu0 0.0
    %2259 = vmatpush1.msra.mxu0 0.0
    %2260 = vmatprep.subr.mxu0 0.0
    %2261 = vmatpush1.msra.mxu0 0.0
    %2262 = vmatprep.subr.mxu0 0.0
    %2263 = vmatpush1.msra.mxu0 0.0
    %2264 = vmatprep.subr.mxu0 0.0
    %2265 = vmatpush1.msra.mxu0 0.0
    %2266 = vmatprep.subr.mxu0 0.0
    %2267 = vmatpush1.msra.mxu0 0.0
    %2268 = vmatprep.subr.mxu0 0.0
    %2269 = vmatpush1.msra.mxu0 0.0
    %2270 = vmatprep.subr.mxu0 0.0
    %2271 = vmatpush1.msra.mxu0 0.0
    %2272 = vmatprep.subr.mxu0 0.0
    %2273 = vmatpush1.msra.mxu0 0.0
    %2274 = vmatprep.mubr.f32.mxu0 0.0
    %2275 = vmatmul.mubr.f32.gmra.mrb[0].mxu0 %v2134
    %v2276 = vpop.f32.mrb[0].mxu0
    %v2277 = vadd.f32 0.0, %v2276
    %v2278 = vpop.f32.mrb[0].mxu0
    %v2279 = vadd.f32 0.0, %v2278
    %2280 = vdwg.mxu0
    %v2281 = vadd.f32 %v2135, %v2206
    %v2282 = vadd.f32 %v2136, %v2208
    %v2283 = vadd.f32 %v2137, %v2277
    %v2284 = vadd.f32 %v2138, %v2279
    %v2285 = vxor.u32 %v2281, 2147483648
    %v2286 = vxor.u32 %v2282, 2147483648
    %v2287 = vxor.u32 %v2283, 2147483648
    %v2288 = vmul.f32 %v2285, 1.442695
    %v2289 = vpow.pop %v2288
    %v2290 = vmul.f32 %v2286, 1.442695
    %v2291 = vpow.pop %v2290
    %v2292 = vmul.f32 %v2287, 1.442695
    %v2293 = vpow.pop %v2292
    %v2294 = vadd.f32 %v2289, 1.0
    %v2295 = vadd.f32 %v2291, 1.0
    %v2296 = vadd.f32 %v2293, 1.0
    %v2297 = vrcp.pop %v2294
    %v2298 = vmul.f32 1.0, %v2297
    %v2299 = vrcp.pop %v2295
    %v2300 = vmul.f32 1.0, %v2299
    %v2301 = vrcp.pop %v2296
    %v2302 = vmul.f32 1.0, %v2301
    %v2303 = vtanh.pop %v2284
    %v2304 = vmul.f32 %v2300, %v2132
    %v2305 = vmul.f32 %v2298, %v2303
    %v2306 = vadd.f32 %v2304, %v2305
    %v2307 = vtanh.pop %v2306
    %v2308 = vmul.f32 %v2302, %v2307
    %v2309 = vld [vmem:[%s1007] sm:$0xff]
    %v2310 = vld [vmem:[%s1007 + $0x8] sm:$0xff]
    %v2311 = vld [vmem:[%s1007 + $0x10] sm:$0xff]
    %v2312 = vld [vmem:[%s1007 + $0x18] sm:$0xff]
    %2313 = vmatprep.subr.mxu0 %v1550
    %2314 = vmatpush1.msra.mxu0 %v1549
    %2315 = vmatprep.subr.mxu0 %v1554
    %2316 = vmatpush1.msra.mxu0 %v1553
    %2317 = vmatprep.subr.mxu0 %v1558
    %2318 = vmatpush1.msra.mxu0 %v1557
    %2319 = vmatprep.subr.mxu0 %v1562
    %2320 = vmatpush1.msra.mxu0 %v1561
    %2321 = vmatprep.subr.mxu0 %v1566
    %2322 = vmatpush1.msra.mxu0 %v1565
    %2323 = vmatprep.subr.mxu0 %v1570
    %2324 = vmatpush1.msra.mxu0 %v1569
    %2325 = vmatprep.subr.mxu0 %v1574
    %2326 = vmatpush1.msra.mxu0 %v1573
    %2327 = vmatprep.subr.mxu0 %v1578
    %2328 = vmatpush1.msra.mxu0 %v1577
    %2329 = vmatprep.subr.mxu0 %v1582
    %2330 = vmatpush1.msra.mxu0 %v1581
    %2331 = vmatprep.subr.mxu0 %v1586
    %2332 = vmatpush1.msra.mxu0 %v1585
    %2333 = vmatprep.subr.mxu0 %v1590
    %2334 = vmatpush1.msra.mxu0 %v1589
    %2335 = vmatprep.subr.mxu0 %v1594
    %2336 = vmatpush1.msra.mxu0 %v1593
    %2337 = vmatprep.subr.mxu0 %v1598
    %2338 = vmatpush1.msra.mxu0 %v1597
    %2339 = vmatprep.subr.mxu0 %v1602
    %2340 = vmatpush1.msra.mxu0 %v1601
    %2341 = vmatprep.subr.mxu0 %v1606
    %2342 = vmatpush1.msra.mxu0 %v1605
    %2343 = vmatprep.subr.mxu0 %v1610
    %2344 = vmatpush1.msra.mxu0 %v1609
    %2345 = vmatprep.subr.mxu0 0.0
    %2346 = vmatpush1.msra.mxu0 0.0
    %2347 = vmatprep.subr.mxu0 0.0
    %2348 = vmatpush1.msra.mxu0 0.0
    %2349 = vmatprep.subr.mxu0 0.0
    %2350 = vmatpush1.msra.mxu0 0.0
    %2351 = vmatprep.subr.mxu0 0.0
    %2352 = vmatpush1.msra.mxu0 0.0
    %2353 = vmatprep.subr.mxu0 0.0
    %2354 = vmatpush1.msra.mxu0 0.0
    %2355 = vmatprep.subr.mxu0 0.0
    %2356 = vmatpush1.msra.mxu0 0.0
    %2357 = vmatprep.subr.mxu0 0.0
    %2358 = vmatpush1.msra.mxu0 0.0
    %2359 = vmatprep.subr.mxu0 0.0
    %2360 = vmatpush1.msra.mxu0 0.0
    %2361 = vmatprep.subr.mxu0 0.0
    %2362 = vmatpush1.msra.mxu0 0.0
    %2363 = vmatprep.subr.mxu0 0.0
    %2364 = vmatpush1.msra.mxu0 0.0
    %2365 = vmatprep.subr.mxu0 0.0
    %2366 = vmatpush1.msra.mxu0 0.0
    %2367 = vmatprep.subr.mxu0 0.0
    %2368 = vmatpush1.msra.mxu0 0.0
    %2369 = vmatprep.subr.mxu0 0.0
    %2370 = vmatpush1.msra.mxu0 0.0
    %2371 = vmatprep.subr.mxu0 0.0
    %2372 = vmatpush1.msra.mxu0 0.0
    %2373 = vmatprep.subr.mxu0 0.0
    %2374 = vmatpush1.msra.mxu0 0.0
    %2375 = vmatprep.subr.mxu0 0.0
    %2376 = vmatpush1.msra.mxu0 0.0
    %2377 = vmatprep.mubr.f32.mxu0 0.0
    %2378 = vmatmul.mubr.f32.gmra.mrb[0].mxu0 %v2308
    %v2379 = vpop.f32.mrb[0].mxu0
    %v2380 = vadd.f32 0.0, %v2379
    %v2381 = vpop.f32.mrb[0].mxu0
    %v2382 = vadd.f32 0.0, %v2381
    %2383 = vdwg.mxu0
    %2384 = vmatprep.subr.mxu0 %v1552
    %2385 = vmatpush1.msra.mxu0 %v1551
    %2386 = vmatprep.subr.mxu0 %v1556
    %2387 = vmatpush1.msra.mxu0 %v1555
    %2388 = vmatprep.subr.mxu0 %v1560
    %2389 = vmatpush1.msra.mxu0 %v1559
    %2390 = vmatprep.subr.mxu0 %v1564
    %2391 = vmatpush1.msra.mxu0 %v1563
    %2392 = vmatprep.subr.mxu0 %v1568
    %2393 = vmatpush1.msra.mxu0 %v1567
    %2394 = vmatprep.subr.mxu0 %v1572
    %2395 = vmatpush1.msra.mxu0 %v1571
    %2396 = vmatprep.subr.mxu0 %v1576
    %2397 = vmatpush1.msra.mxu0 %v1575
    %2398 = vmatprep.subr.mxu0 %v1580
    %2399 = vmatpush1.msra.mxu0 %v1579
    %2400 = vmatprep.subr.mxu0 %v1584
    %2401 = vmatpush1.msra.mxu0 %v1583
    %2402 = vmatprep.subr.mxu0 %v1588
    %2403 = vmatpush1.msra.mxu0 %v1587
    %2404 = vmatprep.subr.mxu0 %v1592
    %2405 = vmatpush1.msra.mxu0 %v1591
    %2406 = vmatprep.subr.mxu0 %v1596
    %2407 = vmatpush1.msra.mxu0 %v1595
    %2408 = vmatprep.subr.mxu0 %v1600
    %2409 = vmatpush1.msra.mxu0 %v1599
    %2410 = vmatprep.subr.mxu0 %v1604
    %2411 = vmatpush1.msra.mxu0 %v1603
    %2412 = vmatprep.subr.mxu0 %v1608
    %2413 = vmatpush1.msra.mxu0 %v1607
    %2414 = vmatprep.subr.mxu0 %v1612
    %2415 = vmatpush1.msra.mxu0 %v1611
    %2416 = vmatprep.subr.mxu0 0.0
    %2417 = vmatpush1.msra.mxu0 0.0
    %2418 = vmatprep.subr.mxu0 0.0
    %2419 = vmatpush1.msra.mxu0 0.0
    %2420 = vmatprep.subr.mxu0 0.0
    %2421 = vmatpush1.msra.mxu0 0.0
    %2422 = vmatprep.subr.mxu0 0.0
    %2423 = vmatpush1.msra.mxu0 0.0
    %2424 = vmatprep.subr.mxu0 0.0
    %2425 = vmatpush1.msra.mxu0 0.0
    %2426 = vmatprep.subr.mxu0 0.0
    %2427 = vmatpush1.msra.mxu0 0.0
    %2428 = vmatprep.subr.mxu0 0.0
    %2429 = vmatpush1.msra.mxu0 0.0
    %2430 = vmatprep.subr.mxu0 0.0
    %2431 = vmatpush1.msra.mxu0 0.0
    %2432 = vmatprep.subr.mxu0 0.0
    %2433 = vmatpush1.msra.mxu0 0.0
    %2434 = vmatprep.subr.mxu0 0.0
    %2435 = vmatpush1.msra.mxu0 0.0
    %2436 = vmatprep.subr.mxu0 0.0
    %2437 = vmatpush1.msra.mxu0 0.0
    %2438 = vmatprep.subr.mxu0 0.0
    %2439 = vmatpush1.msra.mxu0 0.0
    %2440 = vmatprep.subr.mxu0 0.0
    %2441 = vmatpush1.msra.mxu0 0.0
    %2442 = vmatprep.subr.mxu0 0.0
    %2443 = vmatpush1.msra.mxu0 0.0
    %2444 = vmatprep.subr.mxu0 0.0
    %2445 = vmatpush1.msra.mxu0 0.0
    %2446 = vmatprep.subr.mxu0 0.0
    %2447 = vmatpush1.msra.mxu0 0.0
    %2448 = vmatprep.mubr.f32.mxu0 0.0
    %2449 = vmatmul.mubr.f32.gmra.mrb[0].mxu0 %v2308
    %v2450 = vpop.f32.mrb[0].mxu0
    %v2451 = vadd.f32 0.0, %v2450
    %v2452 = vpop.f32.mrb[0].mxu0
    %v2453 = vadd.f32 0.0, %v2452
    %2454 = vdwg.mxu0
    %v2455 = vadd.f32 %v2309, %v2380
    %v2456 = vadd.f32 %v2310, %v2382
    %v2457 = vadd.f32 %v2311, %v2451
    %v2458 = vadd.f32 %v2312, %v2453
    %v2459 = vxor.u32 %v2455, 2147483648
    %v2460 = vxor.u32 %v2456, 2147483648
    %v2461 = vxor.u32 %v2457, 2147483648
    %v2462 = vmul.f32 %v2459, 1.442695
    %v2463 = vpow.pop %v2462
    %v2464 = vmul.f32 %v2460, 1.442695
    %v2465 = vpow.pop %v2464
    %v2466 = vmul.f32 %v2461, 1.442695
    %v2467 = vpow.pop %v2466
    %v2468 = vadd.f32 %v2463, 1.0
    %v2469 = vadd.f32 %v2465, 1.0
    %v2470 = vadd.f32 %v2467, 1.0
    %v2471 = vrcp.pop %v2468
    %v2472 = vmul.f32 1.0, %v2471
    %v2473 = vrcp.pop %v2469
    %v2474 = vmul.f32 1.0, %v2473
    %v2475 = vrcp.pop %v2470
    %v2476 = vmul.f32 1.0, %v2475
    %v2477 = vtanh.pop %v2458
    %v2478 = vmul.f32 %v2474, %v2306
    %v2479 = vmul.f32 %v2472, %v2477
    %v2480 = vadd.f32 %v2478, %v2479
    %v2481 = vtanh.pop %v2480
    %v2482 = vmul.f32 %v2476, %v2481
    %v2483 = vld [vmem:[%s1186] sm:$0xff]
    %v2484 = vld [vmem:[%s1186 + $0x8] sm:$0xff]
    %v2485 = vld [vmem:[%s1186 + $0x10] sm:$0xff]
    %v2486 = vld [vmem:[%s1186 + $0x18] sm:$0xff]
    %2487 = vmatprep.subr.mxu0 %v1550
    %2488 = vmatpush1.msra.mxu0 %v1549
    %2489 = vmatprep.subr.mxu0 %v1554
    %2490 = vmatpush1.msra.mxu0 %v1553
    %2491 = vmatprep.subr.mxu0 %v1558
    %2492 = vmatpush1.msra.mxu0 %v1557
    %2493 = vmatprep.subr.mxu0 %v1562
    %2494 = vmatpush1.msra.mxu0 %v1561
    %2495 = vmatprep.subr.mxu0 %v1566
    %2496 = vmatpush1.msra.mxu0 %v1565
    %2497 = vmatprep.subr.mxu0 %v1570
    %2498 = vmatpush1.msra.mxu0 %v1569
    %2499 = vmatprep.subr.mxu0 %v1574
    %2500 = vmatpush1.msra.mxu0 %v1573
    %2501 = vmatprep.subr.mxu0 %v1578
    %2502 = vmatpush1.msra.mxu0 %v1577
    %2503 = vmatprep.subr.mxu0 %v1582
    %2504 = vmatpush1.msra.mxu0 %v1581
    %2505 = vmatprep.subr.mxu0 %v1586
    %2506 = vmatpush1.msra.mxu0 %v1585
    %2507 = vmatprep.subr.mxu0 %v1590
    %2508 = vmatpush1.msra.mxu0 %v1589
    %2509 = vmatprep.subr.mxu0 %v1594
    %2510 = vmatpush1.msra.mxu0 %v1593
    %2511 = vmatprep.subr.mxu0 %v1598
    %2512 = vmatpush1.msra.mxu0 %v1597
    %2513 = vmatprep.subr.mxu0 %v1602
    %2514 = vmatpush1.msra.mxu0 %v1601
    %2515 = vmatprep.subr.mxu0 %v1606
    %2516 = vmatpush1.msra.mxu0 %v1605
    %2517 = vmatprep.subr.mxu0 %v1610
    %2518 = vmatpush1.msra.mxu0 %v1609
    %2519 = vmatprep.subr.mxu0 0.0
    %2520 = vmatpush1.msra.mxu0 0.0
    %2521 = vmatprep.subr.mxu0 0.0
    %2522 = vmatpush1.msra.mxu0 0.0
    %2523 = vmatprep.subr.mxu0 0.0
    %2524 = vmatpush1.msra.mxu0 0.0
    %2525 = vmatprep.subr.mxu0 0.0
    %2526 = vmatpush1.msra.mxu0 0.0
    %2527 = vmatprep.subr.mxu0 0.0
    %2528 = vmatpush1.msra.mxu0 0.0
    %2529 = vmatprep.subr.mxu0 0.0
    %2530 = vmatpush1.msra.mxu0 0.0
    %2531 = vmatprep.subr.mxu0 0.0
    %2532 = vmatpush1.msra.mxu0 0.0
    %2533 = vmatprep.subr.mxu0 0.0
    %2534 = vmatpush1.msra.mxu0 0.0
    %2535 = vmatprep.subr.mxu0 0.0
    %2536 = vmatpush1.msra.mxu0 0.0
    %2537 = vmatprep.subr.mxu0 0.0
    %2538 = vmatpush1.msra.mxu0 0.0
    %2539 = vmatprep.subr.mxu0 0.0
    %2540 = vmatpush1.msra.mxu0 0.0
    %2541 = vmatprep.subr.mxu0 0.0
    %2542 = vmatpush1.msra.mxu0 0.0
    %2543 = vmatprep.subr.mxu0 0.0
    %2544 = vmatpush1.msra.mxu0 0.0
    %2545 = vmatprep.subr.mxu0 0.0
    %2546 = vmatpush1.msra.mxu0 0.0
    %2547 = vmatprep.subr.mxu0 0.0
    %2548 = vmatpush1.msra.mxu0 0.0
    %2549 = vmatprep.subr.mxu0 0.0
    %2550 = vmatpush1.msra.mxu0 0.0
    %2551 = vmatprep.mubr.f32.mxu0 0.0
    %2552 = vmatmul.mubr.f32.gmra.mrb[0].mxu0 %v2482
    %v2553 = vpop.f32.mrb[0].mxu0
    %v2554 = vadd.f32 0.0, %v2553
    %v2555 = vpop.f32.mrb[0].mxu0
    %v2556 = vadd.f32 0.0, %v2555
    %2557 = vdwg.mxu0
    %2558 = vmatprep.subr.mxu0 %v1552
    %2559 = vmatpush1.msra.mxu0 %v1551
    %2560 = vmatprep.subr.mxu0 %v1556
    %2561 = vmatpush1.msra.mxu0 %v1555
    %2562 = vmatprep.subr.mxu0 %v1560
    %2563 = vmatpush1.msra.mxu0 %v1559
    %2564 = vmatprep.subr.mxu0 %v1564
    %2565 = vmatpush1.msra.mxu0 %v1563
    %2566 = vmatprep.subr.mxu0 %v1568
    %2567 = vmatpush1.msra.mxu0 %v1567
    %2568 = vmatprep.subr.mxu0 %v1572
    %2569 = vmatpush1.msra.mxu0 %v1571
    %2570 = vmatprep.subr.mxu0 %v1576
    %2571 = vmatpush1.msra.mxu0 %v1575
    %2572 = vmatprep.subr.mxu0 %v1580
    %2573 = vmatpush1.msra.mxu0 %v1579
    %2574 = vmatprep.subr.mxu0 %v1584
    %2575 = vmatpush1.msra.mxu0 %v1583
    %2576 = vmatprep.subr.mxu0 %v1588
    %2577 = vmatpush1.msra.mxu0 %v1587
    %2578 = vmatprep.subr.mxu0 %v1592
    %2579 = vmatpush1.msra.mxu0 %v1591
    %2580 = vmatprep.subr.mxu0 %v1596
    %2581 = vmatpush1.msra.mxu0 %v1595
    %2582 = vmatprep.subr.mxu0 %v1600
    %2583 = vmatpush1.msra.mxu0 %v1599
    %2584 = vmatprep.subr.mxu0 %v1604
    %2585 = vmatpush1.msra.mxu0 %v1603
    %2586 = vmatprep.subr.mxu0 %v1608
    %2587 = vmatpush1.msra.mxu0 %v1607
    %2588 = vmatprep.subr.mxu0 %v1612
    %2589 = vmatpush1.msra.mxu0 %v1611
    %2590 = vmatprep.subr.mxu0 0.0
    %2591 = vmatpush1.msra.mxu0 0.0
    %2592 = vmatprep.subr.mxu0 0.0
    %2593 = vmatpush1.msra.mxu0 0.0
    %2594 = vmatprep.subr.mxu0 0.0
    %2595 = vmatpush1.msra.mxu0 0.0
    %2596 = vmatprep.subr.mxu0 0.0
    %2597 = vmatpush1.msra.mxu0 0.0
    %2598 = vmatprep.subr.mxu0 0.0
    %2599 = vmatpush1.msra.mxu0 0.0
    %2600 = vmatprep.subr.mxu0 0.0
    %2601 = vmatpush1.msra.mxu0 0.0
    %2602 = vmatprep.subr.mxu0 0.0
    %2603 = vmatpush1.msra.mxu0 0.0
    %2604 = vmatprep.subr.mxu0 0.0
    %2605 = vmatpush1.msra.mxu0 0.0
    %2606 = vmatprep.subr.mxu0 0.0
    %2607 = vmatpush1.msra.mxu0 0.0
    %2608 = vmatprep.subr.mxu0 0.0
    %2609 = vmatpush1.msra.mxu0 0.0
    %2610 = vmatprep.subr.mxu0 0.0
    %2611 = vmatpush1.msra.mxu0 0.0
    %2612 = vmatprep.subr.mxu0 0.0
    %2613 = vmatpush1.msra.mxu0 0.0
    %2614 = vmatprep.subr.mxu0 0.0
    %2615 = vmatpush1.msra.mxu0 0.0
    %2616 = vmatprep.subr.mxu0 0.0
    %2617 = vmatpush1.msra.mxu0 0.0
    %2618 = vmatprep.subr.mxu0 0.0
    %2619 = vmatpush1.msra.mxu0 0.0
    %2620 = vmatprep.subr.mxu0 0.0
    %2621 = vmatpush1.msra.mxu0 0.0
    %2622 = vmatprep.mubr.f32.mxu0 0.0
    %2623 = vmatmul.mubr.f32.gmra.mrb[0].mxu0 %v2482
    %v2624 = vpop.f32.mrb[0].mxu0
    %v2625 = vadd.f32 0.0, %v2624
    %v2626 = vpop.f32.mrb[0].mxu0
    %v2627 = vadd.f32 0.0, %v2626
    %2628 = vdwg.mxu0
    %v2629 = vadd.f32 %v2483, %v2554
    %v2630 = vadd.f32 %v2484, %v2556
    %v2631 = vadd.f32 %v2485, %v2625
    %v2632 = vadd.f32 %v2486, %v2627
    %v2633 = vxor.u32 %v2629, 2147483648
    %v2634 = vxor.u32 %v2630, 2147483648
    %v2635 = vxor.u32 %v2631, 2147483648
    %v2636 = vmul.f32 %v2633, 1.442695
    %v2637 = vpow.pop %v2636
    %v2638 = vmul.f32 %v2634, 1.442695
    %v2639 = vpow.pop %v2638
    %v2640 = vmul.f32 %v2635, 1.442695
    %v2641 = vpow.pop %v2640
    %v2642 = vadd.f32 %v2637, 1.0
    %v2643 = vadd.f32 %v2639, 1.0
    %v2644 = vadd.f32 %v2641, 1.0
    %v2645 = vrcp.pop %v2642
    %v2646 = vmul.f32 1.0, %v2645
    %v2647 = vrcp.pop %v2643
    %v2648 = vmul.f32 1.0, %v2647
    %v2649 = vrcp.pop %v2644
    %v2650 = vmul.f32 1.0, %v2649
    %v2651 = vtanh.pop %v2632
    %v2652 = vmul.f32 %v2648, %v2480
    %v2653 = vmul.f32 %v2646, %v2651
    %v2654 = vadd.f32 %v2652, %v2653
    %v2655 = vtanh.pop %v2654
    %v2656 = vmul.f32 %v2650, %v2655
    %v2657 = vld [vmem:[%s1365] sm:$0xff]
    %v2658 = vld [vmem:[%s1365 + $0x8] sm:$0xff]
    %v2659 = vld [vmem:[%s1365 + $0x10] sm:$0xff]
    %v2660 = vld [vmem:[%s1365 + $0x18] sm:$0xff]
    %2661 = vmatprep.subr.mxu0 %v1550
    %2662 = vmatpush1.msra.mxu0 %v1549
    %2663 = vmatprep.subr.mxu0 %v1554
    %2664 = vmatpush1.msra.mxu0 %v1553
    %2665 = vmatprep.subr.mxu0 %v1558
    %2666 = vmatpush1.msra.mxu0 %v1557
    %2667 = vmatprep.subr.mxu0 %v1562
    %2668 = vmatpush1.msra.mxu0 %v1561
    %2669 = vmatprep.subr.mxu0 %v1566
    %2670 = vmatpush1.msra.mxu0 %v1565
    %2671 = vmatprep.subr.mxu0 %v1570
    %2672 = vmatpush1.msra.mxu0 %v1569
    %2673 = vmatprep.subr.mxu0 %v1574
    %2674 = vmatpush1.msra.mxu0 %v1573
    %2675 = vmatprep.subr.mxu0 %v1578
    %2676 = vmatpush1.msra.mxu0 %v1577
    %2677 = vmatprep.subr.mxu0 %v1582
    %2678 = vmatpush1.msra.mxu0 %v1581
    %2679 = vmatprep.subr.mxu0 %v1586
    %2680 = vmatpush1.msra.mxu0 %v1585
    %2681 = vmatprep.subr.mxu0 %v1590
    %2682 = vmatpush1.msra.mxu0 %v1589
    %2683 = vmatprep.subr.mxu0 %v1594
    %2684 = vmatpush1.msra.mxu0 %v1593
    %2685 = vmatprep.subr.mxu0 %v1598
    %2686 = vmatpush1.msra.mxu0 %v1597
    %2687 = vmatprep.subr.mxu0 %v1602
    %2688 = vmatpush1.msra.mxu0 %v1601
    %2689 = vmatprep.subr.mxu0 %v1606
    %2690 = vmatpush1.msra.mxu0 %v1605
    %2691 = vmatprep.subr.mxu0 %v1610
    %2692 = vmatpush1.msra.mxu0 %v1609
    %2693 = vmatprep.subr.mxu0 0.0
    %2694 = vmatpush1.msra.mxu0 0.0
    %2695 = vmatprep.subr.mxu0 0.0
    %2696 = vmatpush1.msra.mxu0 0.0
    %2697 = vmatprep.subr.mxu0 0.0
    %2698 = vmatpush1.msra.mxu0 0.0
    %2699 = vmatprep.subr.mxu0 0.0
    %2700 = vmatpush1.msra.mxu0 0.0
    %2701 = vmatprep.subr.mxu0 0.0
    %2702 = vmatpush1.msra.mxu0 0.0
    %2703 = vmatprep.subr.mxu0 0.0
    %2704 = vmatpush1.msra.mxu0 0.0
    %2705 = vmatprep.subr.mxu0 0.0
    %2706 = vmatpush1.msra.mxu0 0.0
    %2707 = vmatprep.subr.mxu0 0.0
    %2708 = vmatpush1.msra.mxu0 0.0
    %2709 = vmatprep.subr.mxu0 0.0
    %2710 = vmatpush1.msra.mxu0 0.0
    %2711 = vmatprep.subr.mxu0 0.0
    %2712 = vmatpush1.msra.mxu0 0.0
    %2713 = vmatprep.subr.mxu0 0.0
    %2714 = vmatpush1.msra.mxu0 0.0
    %2715 = vmatprep.subr.mxu0 0.0
    %2716 = vmatpush1.msra.mxu0 0.0
    %2717 = vmatprep.subr.mxu0 0.0
    %2718 = vmatpush1.msra.mxu0 0.0
    %2719 = vmatprep.subr.mxu0 0.0
    %2720 = vmatpush1.msra.mxu0 0.0
    %2721 = vmatprep.subr.mxu0 0.0
    %2722 = vmatpush1.msra.mxu0 0.0
    %2723 = vmatprep.subr.mxu0 0.0
    %2724 = vmatpush1.msra.mxu0 0.0
    %2725 = vmatprep.mubr.f32.mxu0 0.0
    %2726 = vmatmul.mubr.f32.gmra.mrb[0].mxu0 %v2656
    %v2727 = vpop.f32.mrb[0].mxu0
    %v2728 = vadd.f32 0.0, %v2727
    %v2729 = vpop.f32.mrb[0].mxu0
    %v2730 = vadd.f32 0.0, %v2729
    %2731 = vdwg.mxu0
    %2732 = vmatprep.subr.mxu0 %v1552
    %2733 = vmatpush1.msra.mxu0 %v1551
    %2734 = vmatprep.subr.mxu0 %v1556
    %2735 = vmatpush1.msra.mxu0 %v1555
    %2736 = vmatprep.subr.mxu0 %v1560
    %2737 = vmatpush1.msra.mxu0 %v1559
    %2738 = vmatprep.subr.mxu0 %v1564
    %2739 = vmatpush1.msra.mxu0 %v1563
    %2740 = vmatprep.subr.mxu0 %v1568
    %2741 = vmatpush1.msra.mxu0 %v1567
    %2742 = vmatprep.subr.mxu0 %v1572
    %2743 = vmatpush1.msra.mxu0 %v1571
    %2744 = vmatprep.subr.mxu0 %v1576
    %2745 = vmatpush1.msra.mxu0 %v1575
    %2746 = vmatprep.subr.mxu0 %v1580
    %2747 = vmatpush1.msra.mxu0 %v1579
    %2748 = vmatprep.subr.mxu0 %v1584
    %2749 = vmatpush1.msra.mxu0 %v1583
    %2750 = vmatprep.subr.mxu0 %v1588
    %2751 = vmatpush1.msra.mxu0 %v1587
    %2752 = vmatprep.subr.mxu0 %v1592
    %2753 = vmatpush1.msra.mxu0 %v1591
    %2754 = vmatprep.subr.mxu0 %v1596
    %2755 = vmatpush1.msra.mxu0 %v1595
    %2756 = vmatprep.subr.mxu0 %v1600
    %2757 = vmatpush1.msra.mxu0 %v1599
    %2758 = vmatprep.subr.mxu0 %v1604
    %2759 = vmatpush1.msra.mxu0 %v1603
    %2760 = vmatprep.subr.mxu0 %v1608
    %2761 = vmatpush1.msra.mxu0 %v1607
    %2762 = vmatprep.subr.mxu0 %v1612
    %2763 = vmatpush1.msra.mxu0 %v1611
    %2764 = vmatprep.subr.mxu0 0.0
    %2765 = vmatpush1.msra.mxu0 0.0
    %2766 = vmatprep.subr.mxu0 0.0
    %2767 = vmatpush1.msra.mxu0 0.0
    %2768 = vmatprep.subr.mxu0 0.0
    %2769 = vmatpush1.msra.mxu0 0.0
    %2770 = vmatprep.subr.mxu0 0.0
    %2771 = vmatpush1.msra.mxu0 0.0
    %2772 = vmatprep.subr.mxu0 0.0
    %2773 = vmatpush1.msra.mxu0 0.0
    %2774 = vmatprep.subr.mxu0 0.0
    %2775 = vmatpush1.msra.mxu0 0.0
    %2776 = vmatprep.subr.mxu0 0.0
    %2777 = vmatpush1.msra.mxu0 0.0
    %2778 = vmatprep.subr.mxu0 0.0
    %2779 = vmatpush1.msra.mxu0 0.0
    %2780 = vmatprep.subr.mxu0 0.0
    %2781 = vmatpush1.msra.mxu0 0.0
    %2782 = vmatprep.subr.mxu0 0.0
    %2783 = vmatpush1.msra.mxu0 0.0
    %2784 = vmatprep.subr.mxu0 0.0
    %2785 = vmatpush1.msra.mxu0 0.0
    %2786 = vmatprep.subr.mxu0 0.0
    %2787 = vmatpush1.msra.mxu0 0.0
    %2788 = vmatprep.subr.mxu0 0.0
    %2789 = vmatpush1.msra.mxu0 0.0
    %2790 = vmatprep.subr.mxu0 0.0
    %2791 = vmatpush1.msra.mxu0 0.0
    %2792 = vmatprep.subr.mxu0 0.0
    %2793 = vmatpush1.msra.mxu0 0.0
    %2794 = vmatprep.subr.mxu0 0.0
    %2795 = vmatpush1.msra.mxu0 0.0
    %2796 = vmatprep.mubr.f32.mxu0 0.0
    %2797 = vmatmul.mubr.f32.gmra.mrb[0].mxu0 %v2656
    %v2798 = vpop.f32.mrb[0].mxu0
    %v2799 = vadd.f32 0.0, %v2798
    %v2800 = vpop.f32.mrb[0].mxu0
    %v2801 = vadd.f32 0.0, %v2800
    %2802 = vdwg.mxu0
    %v2803 = vadd.f32 %v2657, %v2728
    %v2804 = vadd.f32 %v2658, %v2730
    %v2805 = vadd.f32 %v2659, %v2799
    %v2806 = vadd.f32 %v2660, %v2801
    %v2807 = vxor.u32 %v2803, 2147483648
    %v2808 = vxor.u32 %v2804, 2147483648
    %v2809 = vxor.u32 %v2805, 2147483648
    %v2810 = vmul.f32 %v2807, 1.442695
    %v2811 = vpow.pop %v2810
    %v2812 = vmul.f32 %v2808, 1.442695
    %v2813 = vpow.pop %v2812
    %v2814 = vmul.f32 %v2809, 1.442695
    %v2815 = vpow.pop %v2814
    %v2816 = vadd.f32 %v2811, 1.0
    %v2817 = vadd.f32 %v2813, 1.0
    %v2818 = vadd.f32 %v2815, 1.0
    %v2819 = vrcp.pop %v2816
    %v2820 = vmul.f32 1.0, %v2819
    %v2821 = vrcp.pop %v2817
    %v2822 = vmul.f32 1.0, %v2821
    %v2823 = vrcp.pop %v2818
    %v2824 = vmul.f32 1.0, %v2823
    %v2825 = vtanh.pop %v2806
    %v2826 = vmul.f32 %v2822, %v2654
    %v2827 = vmul.f32 %v2820, %v2825
    %v2828 = vadd.f32 %v2826, %v2827
    %v2829 = vtanh.pop %v2828
    %v2830 = vmul.f32 %v2824, %v2829
    %v2831 = vld [vmem:[%s1544] sm:$0xff]
    %v2832 = vld [vmem:[%s1544 + $0x8] sm:$0xff]
    %v2833 = vld [vmem:[%s1544 + $0x10] sm:$0xff]
    %v2834 = vld [vmem:[%s1544 + $0x18] sm:$0xff]
    %2835 = vmatprep.subr.mxu0 %v1550
    %2836 = vmatpush1.msra.mxu0 %v1549
    %2837 = vmatprep.subr.mxu0 %v1554
    %2838 = vmatpush1.msra.mxu0 %v1553
    %2839 = vmatprep.subr.mxu0 %v1558
    %2840 = vmatpush1.msra.mxu0 %v1557
    %2841 = vmatprep.subr.mxu0 %v1562
    %2842 = vmatpush1.msra.mxu0 %v1561
    %2843 = vmatprep.subr.mxu0 %v1566
    %2844 = vmatpush1.msra.mxu0 %v1565
    %2845 = vmatprep.subr.mxu0 %v1570
    %2846 = vmatpush1.msra.mxu0 %v1569
    %2847 = vmatprep.subr.mxu0 %v1574
    %2848 = vmatpush1.msra.mxu0 %v1573
    %2849 = vmatprep.subr.mxu0 %v1578
    %2850 = vmatpush1.msra.mxu0 %v1577
    %2851 = vmatprep.subr.mxu0 %v1582
    %2852 = vmatpush1.msra.mxu0 %v1581
    %2853 = vmatprep.subr.mxu0 %v1586
    %2854 = vmatpush1.msra.mxu0 %v1585
    %2855 = vmatprep.subr.mxu0 %v1590
    %2856 = vmatpush1.msra.mxu0 %v1589
    %2857 = vmatprep.subr.mxu0 %v1594
    %2858 = vmatpush1.msra.mxu0 %v1593
    %2859 = vmatprep.subr.mxu0 %v1598
    %2860 = vmatpush1.msra.mxu0 %v1597
    %2861 = vmatprep.subr.mxu0 %v1602
    %2862 = vmatpush1.msra.mxu0 %v1601
    %2863 = vmatprep.subr.mxu0 %v1606
    %2864 = vmatpush1.msra.mxu0 %v1605
    %2865 = vmatprep.subr.mxu0 %v1610
    %2866 = vmatpush1.msra.mxu0 %v1609
    %2867 = vmatprep.subr.mxu0 0.0
    %2868 = vmatpush1.msra.mxu0 0.0
    %2869 = vmatprep.subr.mxu0 0.0
    %2870 = vmatpush1.msra.mxu0 0.0
    %2871 = vmatprep.subr.mxu0 0.0
    %2872 = vmatpush1.msra.mxu0 0.0
    %2873 = vmatprep.subr.mxu0 0.0
    %2874 = vmatpush1.msra.mxu0 0.0
    %2875 = vmatprep.subr.mxu0 0.0
    %2876 = vmatpush1.msra.mxu0 0.0
    %2877 = vmatprep.subr.mxu0 0.0
    %2878 = vmatpush1.msra.mxu0 0.0
    %2879 = vmatprep.subr.mxu0 0.0
    %2880 = vmatpush1.msra.mxu0 0.0
    %2881 = vmatprep.subr.mxu0 0.0
    %2882 = vmatpush1.msra.mxu0 0.0
    %2883 = vmatprep.subr.mxu0 0.0
    %2884 = vmatpush1.msra.mxu0 0.0
    %2885 = vmatprep.subr.mxu0 0.0
    %2886 = vmatpush1.msra.mxu0 0.0
    %2887 = vmatprep.subr.mxu0 0.0
    %2888 = vmatpush1.msra.mxu0 0.0
    %2889 = vmatprep.subr.mxu0 0.0
    %2890 = vmatpush1.msra.mxu0 0.0
    %2891 = vmatprep.subr.mxu0 0.0
    %2892 = vmatpush1.msra.mxu0 0.0
    %2893 = vmatprep.subr.mxu0 0.0
    %2894 = vmatpush1.msra.mxu0 0.0
    %2895 = vmatprep.subr.mxu0 0.0
    %2896 = vmatpush1.msra.mxu0 0.0
    %2897 = vmatprep.subr.mxu0 0.0
    %2898 = vmatpush1.msra.mxu0 0.0
    %2899 = vmatprep.mubr.f32.mxu0 0.0
    %2900 = vmatmul.mubr.f32.gmra.mrb[0].mxu0 %v2830
    %v2901 = vpop.f32.mrb[0].mxu0
    %v2902 = vadd.f32 0.0, %v2901
    %v2903 = vpop.f32.mrb[0].mxu0
    %v2904 = vadd.f32 0.0, %v2903
    %2905 = vdwg.mxu0
    %2906 = vmatprep.subr.mxu0 %v1552
    %2907 = vmatpush1.msra.mxu0 %v1551
    %2908 = vmatprep.subr.mxu0 %v1556
    %2909 = vmatpush1.msra.mxu0 %v1555
    %2910 = vmatprep.subr.mxu0 %v1560
    %2911 = vmatpush1.msra.mxu0 %v1559
    %2912 = vmatprep.subr.mxu0 %v1564
    %2913 = vmatpush1.msra.mxu0 %v1563
    %2914 = vmatprep.subr.mxu0 %v1568
    %2915 = vmatpush1.msra.mxu0 %v1567
    %2916 = vmatprep.subr.mxu0 %v1572
    %2917 = vmatpush1.msra.mxu0 %v1571
    %2918 = vmatprep.subr.mxu0 %v1576
    %2919 = vmatpush1.msra.mxu0 %v1575
    %2920 = vmatprep.subr.mxu0 %v1580
    %2921 = vmatpush1.msra.mxu0 %v1579
    %2922 = vmatprep.subr.mxu0 %v1584
    %2923 = vmatpush1.msra.mxu0 %v1583
    %2924 = vmatprep.subr.mxu0 %v1588
    %2925 = vmatpush1.msra.mxu0 %v1587
    %2926 = vmatprep.subr.mxu0 %v1592
    %2927 = vmatpush1.msra.mxu0 %v1591
    %2928 = vmatprep.subr.mxu0 %v1596
    %2929 = vmatpush1.msra.mxu0 %v1595
    %2930 = vmatprep.subr.mxu0 %v1600
    %2931 = vmatpush1.msra.mxu0 %v1599
    %2932 = vmatprep.subr.mxu0 %v1604
    %2933 = vmatpush1.msra.mxu0 %v1603
    %2934 = vmatprep.subr.mxu0 %v1608
    %2935 = vmatpush1.msra.mxu0 %v1607
    %2936 = vmatprep.subr.mxu0 %v1612
    %2937 = vmatpush1.msra.mxu0 %v1611
    %2938 = vmatprep.subr.mxu0 0.0
    %2939 = vmatpush1.msra.mxu0 0.0
    %2940 = vmatprep.subr.mxu0 0.0
    %2941 = vmatpush1.msra.mxu0 0.0
    %2942 = vmatprep.subr.mxu0 0.0
    %2943 = vmatpush1.msra.mxu0 0.0
    %2944 = vmatprep.subr.mxu0 0.0
    %2945 = vmatpush1.msra.mxu0 0.0
    %2946 = vmatprep.subr.mxu0 0.0
    %2947 = vmatpush1.msra.mxu0 0.0
    %2948 = vmatprep.subr.mxu0 0.0
    %2949 = vmatpush1.msra.mxu0 0.0
    %2950 = vmatprep.subr.mxu0 0.0
    %2951 = vmatpush1.msra.mxu0 0.0
    %2952 = vmatprep.subr.mxu0 0.0
    %2953 = vmatpush1.msra.mxu0 0.0
    %2954 = vmatprep.subr.mxu0 0.0
    %2955 = vmatpush1.msra.mxu0 0.0
    %2956 = vmatprep.subr.mxu0 0.0
    %2957 = vmatpush1.msra.mxu0 0.0
    %2958 = vmatprep.subr.mxu0 0.0
    %2959 = vmatpush1.msra.mxu0 0.0
    %2960 = vmatprep.subr.mxu0 0.0
    %2961 = vmatpush1.msra.mxu0 0.0
    %2962 = vmatprep.subr.mxu0 0.0
    %2963 = vmatpush1.msra.mxu0 0.0
    %2964 = vmatprep.subr.mxu0 0.0
    %2965 = vmatpush1.msra.mxu0 0.0
    %2966 = vmatprep.subr.mxu0 0.0
    %2967 = vmatpush1.msra.mxu0 0.0
    %2968 = vmatprep.subr.mxu0 0.0
    %2969 = vmatpush1.msra.mxu0 0.0
    %2970 = vmatprep.mubr.f32.mxu0 0.0
    %2971 = vmatmul.mubr.f32.gmra.mrb[0].mxu0 %v2830
    %v2972 = vpop.f32.mrb[0].mxu0
    %v2973 = vadd.f32 0.0, %v2972
    %v2974 = vpop.f32.mrb[0].mxu0
    %v2975 = vadd.f32 0.0, %v2974
    %2976 = vdwg.mxu0
    %v2977 = vadd.f32 %v2831, %v2902
    %v2978 = vadd.f32 %v2832, %v2904
    %v2979 = vadd.f32 %v2833, %v2973
    %v2980 = vadd.f32 %v2834, %v2975
    %v2981 = vxor.u32 %v2977, 2147483648
    %v2982 = vxor.u32 %v2978, 2147483648
    %v2983 = vxor.u32 %v2979, 2147483648
    %v2984 = vmul.f32 %v2981, 1.442695
    %v2985 = vpow.pop %v2984
    %v2986 = vmul.f32 %v2982, 1.442695
    %v2987 = vpow.pop %v2986
    %v2988 = vmul.f32 %v2983, 1.442695
    %v2989 = vpow.pop %v2988
    %v2990 = vadd.f32 %v2985, 1.0
    %v2991 = vadd.f32 %v2987, 1.0
    %v2992 = vadd.f32 %v2989, 1.0
    %v2993 = vrcp.pop %v2990
    %v2994 = vmul.f32 1.0, %v2993
    %v2995 = vrcp.pop %v2991
    %v2996 = vmul.f32 1.0, %v2995
    %v2997 = vrcp.pop %v2992
    %v2998 = vmul.f32 1.0, %v2997
    %v2999 = vtanh.pop %v2980
    %v3000 = vmul.f32 %v2996, %v2828
    %v3001 = vmul.f32 %v2994, %v2999
    %v3002 = vadd.f32 %v3000, %v3001
    %v3003 = vtanh.pop %v3002
    %v3004 = vmul.f32 %v2998, %v3003
    %v3005 = vld [vmem:[#allocation9] sm:$0xff]
    %v3006 = vld [vmem:[#allocation9 + $0x8] sm:$0xff]
    %v3007 = vld [vmem:[#allocation9 + $0x10] sm:$0xff]
    %v3008 = vld [vmem:[#allocation9 + $0x18] sm:$0xff]
    %v3009 = vld [vmem:[#allocation9 + $0x20] sm:$0xff]
    %v3010 = vld [vmem:[#allocation9 + $0x28] sm:$0xff]
    %v3011 = vld [vmem:[#allocation9 + $0x30] sm:$0xff]
    %v3012 = vld [vmem:[#allocation9 + $0x38] sm:$0xff]
    %v3013 = vld [vmem:[#allocation9 + $0x40] sm:$0xff]
    %v3014 = vld [vmem:[#allocation9 + $0x48] sm:$0xff]
    %v3015 = vld [vmem:[#allocation9 + $0x50] sm:$0xff]
    %v3016 = vld [vmem:[#allocation9 + $0x58] sm:$0xff]
    %v3017 = vld [vmem:[#allocation9 + $0x60] sm:$0xff]
    %v3018 = vld [vmem:[#allocation9 + $0x68] sm:$0xff]
    %v3019 = vld [vmem:[#allocation9 + $0x70] sm:$0xff]
    %v3020 = vld [vmem:[#allocation9 + $0x78] sm:$0xff]
    %v3021 = vld [vmem:[%s5] sm:$0x1]
    %v3023 = vlaneseq
    %v3024 = vshrl.u32 %v3023, 7
    %v3025 = vsub.s32 0, %v3024
    %v3026 = vrot.slane %v3021, %v3025
    %3028 = vmatprep.subr.mxu0 0.0
    %3029 = vmatpush1.msra.mxu0 %v3005
    %3030 = vmatprep.subr.mxu0 0.0
    %3031 = vmatpush1.msra.mxu0 %v3006
    %3032 = vmatprep.subr.mxu0 0.0
    %3033 = vmatpush1.msra.mxu0 %v3007
    %3034 = vmatprep.subr.mxu0 0.0
    %3035 = vmatpush1.msra.mxu0 %v3008
    %3036 = vmatprep.subr.mxu0 0.0
    %3037 = vmatpush1.msra.mxu0 %v3009
    %3038 = vmatprep.subr.mxu0 0.0
    %3039 = vmatpush1.msra.mxu0 %v3010
    %3040 = vmatprep.subr.mxu0 0.0
    %3041 = vmatpush1.msra.mxu0 %v3011
    %3042 = vmatprep.subr.mxu0 0.0
    %3043 = vmatpush1.msra.mxu0 %v3012
    %3044 = vmatprep.subr.mxu0 0.0
    %3045 = vmatpush1.msra.mxu0 %v3013
    %3046 = vmatprep.subr.mxu0 0.0
    %3047 = vmatpush1.msra.mxu0 %v3014
    %3048 = vmatprep.subr.mxu0 0.0
    %3049 = vmatpush1.msra.mxu0 %v3015
    %3050 = vmatprep.subr.mxu0 0.0
    %3051 = vmatpush1.msra.mxu0 %v3016
    %3052 = vmatprep.subr.mxu0 0.0
    %3053 = vmatpush1.msra.mxu0 %v3017
    %3054 = vmatprep.subr.mxu0 0.0
    %3055 = vmatpush1.msra.mxu0 %v3018
    %3056 = vmatprep.subr.mxu0 0.0
    %3057 = vmatpush1.msra.mxu0 %v3019
    %3058 = vmatprep.subr.mxu0 0.0
    %3059 = vmatpush1.msra.mxu0 %v3020
    %3060 = vmatprep.subr.mxu0 0.0
    %3061 = vmatpush1.msra.mxu0 0.0
    %3062 = vmatprep.subr.mxu0 0.0
    %3063 = vmatpush1.msra.mxu0 0.0
    %3064 = vmatprep.subr.mxu0 0.0
    %3065 = vmatpush1.msra.mxu0 0.0
    %3066 = vmatprep.subr.mxu0 0.0
    %3067 = vmatpush1.msra.mxu0 0.0
    %3068 = vmatprep.subr.mxu0 0.0
    %3069 = vmatpush1.msra.mxu0 0.0
    %3070 = vmatprep.subr.mxu0 0.0
    %3071 = vmatpush1.msra.mxu0 0.0
    %3072 = vmatprep.subr.mxu0 0.0
    %3073 = vmatpush1.msra.mxu0 0.0
    %3074 = vmatprep.subr.mxu0 0.0
    %3075 = vmatpush1.msra.mxu0 0.0
    %3076 = vmatprep.subr.mxu0 0.0
    %3077 = vmatpush1.msra.mxu0 0.0
    %3078 = vmatprep.subr.mxu0 0.0
    %3079 = vmatpush1.msra.mxu0 0.0
    %3080 = vmatprep.subr.mxu0 0.0
    %3081 = vmatpush1.msra.mxu0 0.0
    %3082 = vmatprep.subr.mxu0 0.0
    %3083 = vmatpush1.msra.mxu0 0.0
    %3084 = vmatprep.subr.mxu0 0.0
    %3085 = vmatpush1.msra.mxu0 0.0
    %3086 = vmatprep.subr.mxu0 0.0
    %3087 = vmatpush1.msra.mxu0 0.0
    %3088 = vmatprep.subr.mxu0 0.0
    %3089 = vmatpush1.msra.mxu0 0.0
    %3090 = vmatprep.subr.mxu0 0.0
    %3091 = vmatpush1.msra.mxu0 0.0
    %3092 = vmatprep.mubr.f32.mxu0 0.0
    %3093 = vmatmul.mubr.f32.gmra.mrb[0].mxu0 %v3004
    %v3094 = vpop.f32.mrb[0].mxu0
    %v3095 = vadd.f32 %v3026, %v3094
    %v3096 = vpop.f32.mrb[0].mxu0
    %3097 = vdwg.mxu0
    %vm3098 = vcmp.gt.f32.partialorder %v3095, 0.0
    %v3099 = vmul.f32 %v3095, 0.01
    %v3100 = vsel %vm3098, %v3095, %v3099
    %v3101 = vld [vmem:[%s6] sm:$0x1]
    %v3103 = vlaneseq
    %v3104 = vshrl.u32 %v3103, 7
    %v3105 = vsub.s32 0, %v3104
    %v3106 = vrot.slane %v3101, %v3105
    %v3108 = vmul.f32 %v3100, %v3106
    %3109 = vadd.xlane.f32.xlu0 %v3108
    %v3110 = vpop.xlane.xlu0 %3109
    %v3111 = vld [vmem:[#allocation3] sm:$0x1]
    %v3113 = vlaneseq
    %v3114 = vshrl.u32 %v3113, 7
    %v3115 = vsub.s32 0, %v3114
    %v3116 = vrot.slane %v3111, %v3115
    %v3118 = vadd.f32 %v3110, %v3116
    %vm3119 = vcmask 7168
    %3120 = vst.msk [vmem:[%s8] sm:$0xff] %vm3119, %v3118
    // Predicated region
    $region50: #{tpu_custom_call.1} parent=1 // pred_check
      _
    $region51: #{tpu_custom_call.1} parent=1 // pred_check_branch
      %3122 = sbr.rel (0) target = $region53
    $region52: #{tpu_custom_call.1} parent=1 // pred_region
      _
    $region53: #{tpu_custom_call.1} parent=1 // pred_fallthru
      _
    // Predicated region
    $region54: #{tpu_custom_call.1} parent=1 // pred_check
      _
    $region55: #{tpu_custom_call.1} parent=1 // pred_check_branch
      %3124 = sbr.rel (0) target = $region57
    $region56: #{tpu_custom_call.1} parent=1 // pred_region
      _
    $region57: #{tpu_custom_call.1} parent=1 // pred_fallthru
      _
    %3125 = vsyncpa [#allocation5], 1
    %3126 = vsyncpa [#allocation7], 1
    %3127 = vsyncpa [#allocation10], 1

</llo_original>
